<compile_context>
chip_gen: v7x
topology: tpu7x:2x2x1
jax: 0.10.0
libtpu: 0.0.40
codegen_flags: <defaults>
</compile_context>

<pallas_src>
import functools

import jax
import jax.numpy as jnp
from jax import lax
from jax.experimental import pallas as pl
from jax.experimental.pallas import tpu as pltpu

# ---------------- model hyper-parameters (small, synthetic) -----------------
B = 2          # batch
L = 8          # context length (seq)
D = 32         # transformer width
H = 4          # attention heads
DFF = 128      # MLP hidden (4 * D)
V = 64         # vocab size
E = 32         # text_projection output dim
N_LAYERS = 2
EPS = 1e-5

# packed "vector slab" row layout (one (8, VEC_W) block per layer)
VEC_W = max(3 * D, DFF)          # 128
ROW_LN1_G, ROW_LN1_B = 0, 1
ROW_B_QKV, ROW_B_OUT = 2, 3
ROW_LN2_G, ROW_LN2_B = 4, 5
ROW_B_FC, ROW_B_PR = 6, 7


def _layernorm(x, g, b):
    mu = jnp.mean(x, axis=-1, keepdims=True)
    var = jnp.mean(jnp.square(x - mu), axis=-1, keepdims=True)
    return (x - mu) * lax.rsqrt(var + EPS) * g + b


# ------------------------- fused CLIP text kernel ---------------------------
def _clip_text_kernel(eot_ref, x_ref, wqkv_ref, wout_ref, wfc_ref, wpr_ref,
                      vec_ref, lnf_ref, proj_ref, o_ref,
                      *, b_sz, l_sz, d_sz, n_heads, n_layers):
    dh = d_sz // n_heads
    bl = b_sz * l_sz
    scale = 1.0 / (dh ** 0.5)

    # causal mask (CLIP build_attention_mask), shared across layers/heads
    rows = lax.broadcasted_iota(jnp.int32, (l_sz, l_sz), 0)
    cols = lax.broadcasted_iota(jnp.int32, (l_sz, l_sz), 1)
    causal = cols <= rows                                   # (L, L)

    xf = x_ref[...].reshape(bl, d_sz)                       # (BL, D), VMEM-resident

    for layer in range(n_layers):                           # static unroll
        vec = vec_ref[layer]                                # (8, VEC_W) one slab
        ln1_g = vec[ROW_LN1_G:ROW_LN1_G + 1, :d_sz]
        ln1_b = vec[ROW_LN1_B:ROW_LN1_B + 1, :d_sz]
        b_qkv = vec[ROW_B_QKV:ROW_B_QKV + 1, :3 * d_sz]
        b_out = vec[ROW_B_OUT:ROW_B_OUT + 1, :d_sz]
        ln2_g = vec[ROW_LN2_G:ROW_LN2_G + 1, :d_sz]
        ln2_b = vec[ROW_LN2_B:ROW_LN2_B + 1, :d_sz]
        b_fc = vec[ROW_B_FC:ROW_B_FC + 1, :]
        b_pr = vec[ROW_B_PR:ROW_B_PR + 1, :d_sz]

        # ---- attention branch: LN1 -> causal MHA -> residual ----
        h1 = _layernorm(xf, ln1_g, ln1_b)                   # (BL, D)
        qkv = jnp.dot(h1, wqkv_ref[layer],
                      preferred_element_type=jnp.float32) + b_qkv      # (BL, 3D)
        qkv3 = qkv.reshape(b_sz, l_sz, 3 * d_sz)
        q = qkv3[:, :, 0:d_sz]                              # (B, L, D)
        k = qkv3[:, :, d_sz:2 * d_sz]
        v = qkv3[:, :, 2 * d_sz:3 * d_sz]

        head_outs = []
        for h in range(n_heads):                            # tiny static loop
            sl = slice(h * dh, (h + 1) * dh)
            qh, kh, vh = q[:, :, sl], k[:, :, sl], v[:, :, sl]   # (B, L, Dh)
            s = jnp.einsum('bqd,bkd->bqk', qh, kh,
                           preferred_element_type=jnp.float32) * scale
            s = jnp.where(causal, s, jnp.float32(-1e9))
            m = jnp.max(s, axis=-1, keepdims=True)
            e = jnp.exp(s - m)
            p = e * pl.reciprocal(jnp.sum(e, axis=-1, keepdims=True),
                                  approx=True)
            head_outs.append(jnp.einsum('bqk,bkd->bqd', p, vh,
                                        preferred_element_type=jnp.float32))
        attn = jnp.concatenate(head_outs, axis=-1).reshape(bl, d_sz)
        attn = jnp.dot(attn, wout_ref[layer],
                       preferred_element_type=jnp.float32) + b_out
        xf = xf + attn

        # ---- MLP branch: LN2 -> fc -> QuickGELU -> proj -> residual ----
        h2 = _layernorm(xf, ln2_g, ln2_b)
        fc = jnp.dot(h2, wfc_ref[layer],
                     preferred_element_type=jnp.float32) + b_fc         # (BL, DFF)
        fc = fc * jax.nn.sigmoid(1.702 * fc)
        pr = jnp.dot(fc, wpr_ref[layer],
                     preferred_element_type=jnp.float32) + b_pr          # (BL, D)
        xf = xf + pr

    # ---- EOT gather + ln_final + text_projection (still in the same kernel) ----
    x3 = xf.reshape(b_sz, l_sz, d_sz)
    l_iota = lax.broadcasted_iota(jnp.int32, (l_sz, 1), 0)
    eot_rows = []
    for b in range(b_sz):                                   # B=2, static
        sel = l_iota == eot_ref[b]                          # (L, 1) one-hot mask
        eot_rows.append(jnp.sum(jnp.where(sel, x3[b], 0.0),
                                axis=0, keepdims=True))     # (1, D)
    x_eot = jnp.concatenate(eot_rows, axis=0)               # (B, D)

    xn = _layernorm(x_eot, lnf_ref[0:1, :], lnf_ref[1:2, :])
    o_ref[...] = jnp.dot(xn, proj_ref[...],
                         preferred_element_type=jnp.float32)             # (B, E)


def clip_text_pallas(eot, x_embed, params):
    kernel = functools.partial(_clip_text_kernel, b_sz=B, l_sz=L, d_sz=D,
                               n_heads=H, n_layers=N_LAYERS)
    vmem = pl.BlockSpec(memory_space=pltpu.MemorySpace.VMEM)
    smem = pl.BlockSpec(memory_space=pltpu.MemorySpace.SMEM)
    return pl.pallas_call(
        kernel,
        out_shape=jax.ShapeDtypeStruct((B, E), jnp.float32),
        in_specs=[smem, vmem, vmem, vmem, vmem, vmem, vmem, vmem, vmem],
        out_specs=vmem,
    )(eot, x_embed, params["w_qkv"], params["w_out"], params["w_fc"],
      params["w_pr"], params["vec"], params["ln_f"], params["text_proj"])


# -------------------------------- forward -----------------------------------
@jax.jit
def encoder_text_clip_forward(text, params):
    # token_embedding(text) + positional_embedding   (gather + add = glue)
    x = params["token_emb"][text] + params["pos_emb"][None]      # (B, L, D)
    eot = jnp.argmax(text, axis=-1).astype(jnp.int32)            # (B,)
    # everything else (transformer + ln_final + EOT gather + projection)
    # runs inside a single fused Pallas kernel.
    return clip_text_pallas(eot, x, params)                      # (B, E)


# ------------------------- pure-JAX reference --------------------------------
def reference_forward(text, params):
    x = params["token_emb"][text] + params["pos_emb"][None]
    dh = D // H
    causal = jnp.arange(L)[None, :] <= jnp.arange(L)[:, None]
    xf = x
    for layer in range(N_LAYERS):
        vec = params["vec"][layer]
        ln1_g, ln1_b = vec[ROW_LN1_G, :D], vec[ROW_LN1_B, :D]
        b_qkv, b_out = vec[ROW_B_QKV, :3 * D], vec[ROW_B_OUT, :D]
        ln2_g, ln2_b = vec[ROW_LN2_G, :D], vec[ROW_LN2_B, :D]
        b_fc, b_pr = vec[ROW_B_FC, :], vec[ROW_B_PR, :D]

        h1 = _layernorm(xf, ln1_g, ln1_b)
        qkv = h1 @ params["w_qkv"][layer] + b_qkv
        q = qkv[..., :D].reshape(B, L, H, dh)
        k = qkv[..., D:2 * D].reshape(B, L, H, dh)
        v = qkv[..., 2 * D:].reshape(B, L, H, dh)
        s = jnp.einsum('bqhd,bkhd->bhqk', q, k) / (dh ** 0.5)
        s = jnp.where(causal[None, None], s, -1e9)
        p = jax.nn.softmax(s, axis=-1)
        o = jnp.einsum('bhqk,bkhd->bqhd', p, v).reshape(B, L, D)
        xf = xf + o @ params["w_out"][layer] + b_out

        h2 = _layernorm(xf, ln2_g, ln2_b)
        fc = h2 @ params["w_fc"][layer] + b_fc
        fc = fc * jax.nn.sigmoid(1.702 * fc)
        xf = xf + fc @ params["w_pr"][layer] + b_pr

    eot = jnp.argmax(text, axis=-1)
    x_eot = xf[jnp.arange(B), eot]
    xn = _layernorm(x_eot, params["ln_f"][0], params["ln_f"][1])
    return xn @ params["text_proj"]


# ----------------------- deterministic parameter init -----------------------
def init_params(key):
    s = 0.02

    def nrm(k, shape):
        return s * jax.random.normal(k, shape, jnp.float32)

    keys = iter(jax.random.split(key, 8))
    params = {
        "token_emb": nrm(next(keys), (V, D)),
        "pos_emb": nrm(next(keys), (L, D)),
        "w_qkv": nrm(next(keys), (N_LAYERS, D, 3 * D)),
        "w_out": nrm(next(keys), (N_LAYERS, D, D)),
        "w_fc": nrm(next(keys), (N_LAYERS, D, DFF)),
        "w_pr": nrm(next(keys), (N_LAYERS, DFF, D)),
        "text_proj": nrm(next(keys), (D, E)),
    }
    # packed per-layer vector slab: LN gains = 1, all biases / LN betas = 0
    vec = jnp.zeros((N_LAYERS, 8, VEC_W), jnp.float32)
    vec = vec.at[:, ROW_LN1_G, :D].set(1.0)
    vec = vec.at[:, ROW_LN2_G, :D].set(1.0)
    params["vec"] = vec
    params["ln_f"] = jnp.concatenate(
        [jnp.ones((1, D), jnp.float32), jnp.zeros((1, D), jnp.float32)], axis=0)
    return params


if __name__ == "__main__":
    key = jax.random.PRNGKey(0)
    pkey, tkey = jax.random.split(key)
    params = init_params(pkey)

    # token ids; put an EOT (max-id) token in each sequence so argmax picks it,
    # matching CLIP tokenization semantics.
    text = jax.random.randint(tkey, (B, L), 1, V - 2, dtype=jnp.int32)
    text = text.at[0, 5].set(V - 1).at[1, L - 1].set(V - 1)

    out = encoder_text_clip_forward(text, params)
    out = jax.block_until_ready(out)
    assert out.shape == (B, E)
    assert bool(jnp.all(jnp.isfinite(out)))

    # correctness vs pure-JAX reference (loose tol: approx reciprocal in softmax)
    ref = reference_forward(text, params)
    assert bool(jnp.allclose(out, ref, atol=1e-2, rtol=1e-2)), (
        float(jnp.max(jnp.abs(out - ref))))

    print("KERNEL_OK")
</pallas_src>

<mosaic_0001>
module attributes {stable_mosaic.version = 11 : i64} {
  func.func @_clip_text_kernel(%arg0: memref<2xi32, #tpu.memory_space<smem>>, %arg1: memref<2x8x32xf32, #tpu.memory_space<vmem>>, %arg2: memref<2x32x96xf32, #tpu.memory_space<vmem>>, %arg3: memref<2x32x32xf32, #tpu.memory_space<vmem>>, %arg4: memref<2x32x128xf32, #tpu.memory_space<vmem>>, %arg5: memref<2x128x32xf32, #tpu.memory_space<vmem>>, %arg6: memref<2x8x128xf32, #tpu.memory_space<vmem>>, %arg7: memref<2x32xf32, #tpu.memory_space<vmem>>, %arg8: memref<32x32xf32, #tpu.memory_space<vmem>>, %arg9: memref<2x32xf32, #tpu.memory_space<vmem>>) attributes {dimension_semantics = [], scalar_prefetch = 0 : i64, scratch_operands = 0 : i64, tpu.core_type = #tpu.core_type<tc>} {
    %0 = tpu.iota {dimensions = array<i32: 0>} : vector<8x8xi32>
    %1 = tpu.iota {dimensions = array<i32: 1>} : vector<8x8xi32>
    %2 = arith.cmpi sle, %1, %0 : vector<8x8xi32>
    %c0 = arith.constant 0 : index
    %c0_0 = arith.constant 0 : index
    %c0_1 = arith.constant 0 : index
    %3 = vector.load %arg1[%c0, %c0_0, %c0_1] : memref<2x8x32xf32, #tpu.memory_space<vmem>>, vector<2x8x32xf32>
    %4 = vector.shape_cast %3 : vector<2x8x32xf32> to vector<16x32xf32>
    %c0_2 = arith.constant 0 : index
    %c0_3 = arith.constant 0 : index
    %c0_4 = arith.constant 0 : index
    %5 = vector.load %arg6[%c0_2, %c0_3, %c0_4] : memref<2x8x128xf32, #tpu.memory_space<vmem>>, vector<1x8x128xf32>
    %6 = vector.shape_cast %5 : vector<1x8x128xf32> to vector<8x128xf32>
    %7 = vector.extract_strided_slice %6 {offsets = [0, 0], sizes = [1, 32], strides = [1, 1]} : vector<8x128xf32> to vector<1x32xf32>
    %8 = vector.extract_strided_slice %6 {offsets = [1, 0], sizes = [1, 32], strides = [1, 1]} : vector<8x128xf32> to vector<1x32xf32>
    %9 = vector.extract_strided_slice %6 {offsets = [2, 0], sizes = [1, 96], strides = [1, 1]} : vector<8x128xf32> to vector<1x96xf32>
    %10 = vector.extract_strided_slice %6 {offsets = [3, 0], sizes = [1, 32], strides = [1, 1]} : vector<8x128xf32> to vector<1x32xf32>
    %11 = vector.extract_strided_slice %6 {offsets = [4, 0], sizes = [1, 32], strides = [1, 1]} : vector<8x128xf32> to vector<1x32xf32>
    %12 = vector.extract_strided_slice %6 {offsets = [5, 0], sizes = [1, 32], strides = [1, 1]} : vector<8x128xf32> to vector<1x32xf32>
    %13 = vector.extract_strided_slice %6 {offsets = [6, 0], sizes = [1, 128], strides = [1, 1]} : vector<8x128xf32> to vector<1x128xf32>
    %14 = vector.extract_strided_slice %6 {offsets = [7, 0], sizes = [1, 32], strides = [1, 1]} : vector<8x128xf32> to vector<1x32xf32>
    %cst = arith.constant dense<0.000000e+00> : vector<16xf32>
    %15 = vector.multi_reduction <add>, %4, %cst [1] : vector<16x32xf32> to vector<16xf32>
    %16 = vector.shape_cast %15 : vector<16xf32> to vector<16x1xf32>
    %cst_5 = arith.constant 3.200000e+01 : f32
    %17 = vector.broadcast %cst_5 : f32 to vector<16x1xf32>
    %18 = arith.divf %16, %17 : vector<16x1xf32>
    %19 = vector.broadcast %18 : vector<16x1xf32> to vector<16x32xf32>
    %20 = arith.subf %4, %19 : vector<16x32xf32>
    %21 = arith.mulf %20, %20 : vector<16x32xf32>
    %cst_6 = arith.constant dense<0.000000e+00> : vector<16xf32>
    %22 = vector.multi_reduction <add>, %21, %cst_6 [1] : vector<16x32xf32> to vector<16xf32>
    %23 = vector.shape_cast %22 : vector<16xf32> to vector<16x1xf32>
    %cst_7 = arith.constant 3.200000e+01 : f32
    %24 = vector.broadcast %cst_7 : f32 to vector<16x1xf32>
    %25 = arith.divf %23, %24 : vector<16x1xf32>
    %26 = vector.broadcast %18 : vector<16x1xf32> to vector<16x32xf32>
    %27 = arith.subf %4, %26 : vector<16x32xf32>
    %cst_8 = arith.constant 9.99999974E-6 : f32
    %28 = vector.broadcast %cst_8 : f32 to vector<16x1xf32>
    %29 = arith.addf %25, %28 : vector<16x1xf32>
    %30 = math.rsqrt %29 : vector<16x1xf32>
    %31 = vector.broadcast %30 : vector<16x1xf32> to vector<16x32xf32>
    %32 = arith.mulf %27, %31 : vector<16x32xf32>
    %33 = vector.broadcast %7 : vector<1x32xf32> to vector<16x32xf32>
    %34 = arith.mulf %32, %33 : vector<16x32xf32>
    %35 = vector.broadcast %8 : vector<1x32xf32> to vector<16x32xf32>
    %36 = arith.addf %34, %35 : vector<16x32xf32>
    %c0_9 = arith.constant 0 : index
    %c0_10 = arith.constant 0 : index
    %c0_11 = arith.constant 0 : index
    %37 = vector.load %arg2[%c0_9, %c0_10, %c0_11] : memref<2x32x96xf32, #tpu.memory_space<vmem>>, vector<1x32x96xf32>
    %38 = vector.shape_cast %37 : vector<1x32x96xf32> to vector<32x96xf32>
    %cst_12 = arith.constant dense<0.000000e+00> : vector<16x96xf32>
    %39 = tpu.matmul %36, %38, %cst_12 {dimension_numbers = #tpu.dot_dimension_numbers<[1], [0], [0], [1], [0, 0, 1, 1], [], []>} : vector<16x32xf32>, vector<32x96xf32>, vector<16x96xf32> -> vector<16x96xf32>
    %40 = vector.broadcast %9 : vector<1x96xf32> to vector<16x96xf32>
    %41 = arith.addf %39, %40 : vector<16x96xf32>
    %42 = vector.shape_cast %41 : vector<16x96xf32> to vector<2x8x96xf32>
    %43 = vector.extract_strided_slice %42 {offsets = [0, 0, 0], sizes = [2, 8, 32], strides = [1, 1, 1]} : vector<2x8x96xf32> to vector<2x8x32xf32>
    %44 = vector.extract_strided_slice %42 {offsets = [0, 0, 32], sizes = [2, 8, 32], strides = [1, 1, 1]} : vector<2x8x96xf32> to vector<2x8x32xf32>
    %45 = vector.extract_strided_slice %42 {offsets = [0, 0, 64], sizes = [2, 8, 32], strides = [1, 1, 1]} : vector<2x8x96xf32> to vector<2x8x32xf32>
    %46 = vector.extract_strided_slice %43 {offsets = [0, 0, 0], sizes = [2, 8, 8], strides = [1, 1, 1]} : vector<2x8x32xf32> to vector<2x8x8xf32>
    %47 = vector.extract_strided_slice %44 {offsets = [0, 0, 0], sizes = [2, 8, 8], strides = [1, 1, 1]} : vector<2x8x32xf32> to vector<2x8x8xf32>
    %48 = vector.extract_strided_slice %45 {offsets = [0, 0, 0], sizes = [2, 8, 8], strides = [1, 1, 1]} : vector<2x8x32xf32> to vector<2x8x8xf32>
    "tpu.trace_start"() <{level = 10 : i32, message = "bqd,bkd->bqk"}> : () -> ()
    %cst_13 = arith.constant dense<0.000000e+00> : vector<2x8x8xf32>
    %49 = tpu.matmul %46, %47, %cst_13 {dimension_numbers = #tpu.dot_dimension_numbers<[2], [2], [1], [1], [0, 0, 0, 1, 1, 1], [0], [0]>} : vector<2x8x8xf32>, vector<2x8x8xf32>, vector<2x8x8xf32> -> vector<2x8x8xf32>
    "tpu.trace_stop"() : () -> ()
    %cst_14 = arith.constant 0.353553385 : f32
    %50 = vector.broadcast %cst_14 : f32 to vector<2x8x8xf32>
    %51 = arith.mulf %49, %50 : vector<2x8x8xf32>
    %cst_15 = arith.constant -1.000000e+09 : f32
    %52 = vector.shape_cast %2 : vector<8x8xi1> to vector<1x8x8xi1>
    %53 = vector.broadcast %52 : vector<1x8x8xi1> to vector<2x8x8xi1>
    %54 = vector.broadcast %cst_15 : f32 to vector<2x8x8xf32>
    %55 = arith.select %53, %51, %54 : vector<2x8x8xi1>, vector<2x8x8xf32>
    %cst_16 = arith.constant dense<0xFF800000> : vector<2x8xf32>
    %56 = vector.multi_reduction <maximumf>, %55, %cst_16 [2] : vector<2x8x8xf32> to vector<2x8xf32>
    %57 = vector.shape_cast %56 : vector<2x8xf32> to vector<2x8x1xf32>
    %58 = vector.broadcast %57 : vector<2x8x1xf32> to vector<2x8x8xf32>
    %59 = arith.subf %55, %58 : vector<2x8x8xf32>
    %60 = math.exp %59 : vector<2x8x8xf32>
    %cst_17 = arith.constant dense<0.000000e+00> : vector<2x8xf32>
    %61 = vector.multi_reduction <add>, %60, %cst_17 [2] : vector<2x8x8xf32> to vector<2x8xf32>
    %62 = vector.shape_cast %61 : vector<2x8xf32> to vector<2x8x1xf32>
    %63 = tpu.reciprocal %62 {approx = true} : vector<2x8x1xf32> -> vector<2x8x1xf32>
    %64 = vector.broadcast %63 : vector<2x8x1xf32> to vector<2x8x8xf32>
    %65 = arith.mulf %60, %64 : vector<2x8x8xf32>
    "tpu.trace_start"() <{level = 10 : i32, message = "bqk,bkd->bqd"}> : () -> ()
    %cst_18 = arith.constant dense<0.000000e+00> : vector<2x8x8xf32>
    %66 = tpu.matmul %65, %48, %cst_18 {dimension_numbers = #tpu.dot_dimension_numbers<[2], [1], [1], [2], [0, 0, 0, 1, 1, 2], [0], [0]>} : vector<2x8x8xf32>, vector<2x8x8xf32>, vector<2x8x8xf32> -> vector<2x8x8xf32>
    "tpu.trace_stop"() : () -> ()
    %67 = vector.extract_strided_slice %43 {offsets = [0, 0, 8], sizes = [2, 8, 8], strides = [1, 1, 1]} : vector<2x8x32xf32> to vector<2x8x8xf32>
    %68 = vector.extract_strided_slice %44 {offsets = [0, 0, 8], sizes = [2, 8, 8], strides = [1, 1, 1]} : vector<2x8x32xf32> to vector<2x8x8xf32>
    %69 = vector.extract_strided_slice %45 {offsets = [0, 0, 8], sizes = [2, 8, 8], strides = [1, 1, 1]} : vector<2x8x32xf32> to vector<2x8x8xf32>
    "tpu.trace_start"() <{level = 10 : i32, message = "bqd,bkd->bqk"}> : () -> ()
    %cst_19 = arith.constant dense<0.000000e+00> : vector<2x8x8xf32>
    %70 = tpu.matmul %67, %68, %cst_19 {dimension_numbers = #tpu.dot_dimension_numbers<[2], [2], [1], [1], [0, 0, 0, 1, 1, 1], [0], [0]>} : vector<2x8x8xf32>, vector<2x8x8xf32>, vector<2x8x8xf32> -> vector<2x8x8xf32>
    "tpu.trace_stop"() : () -> ()
    %cst_20 = arith.constant 0.353553385 : f32
    %71 = vector.broadcast %cst_20 : f32 to vector<2x8x8xf32>
    %72 = arith.mulf %70, %71 : vector<2x8x8xf32>
    %cst_21 = arith.constant -1.000000e+09 : f32
    %73 = vector.shape_cast %2 : vector<8x8xi1> to vector<1x8x8xi1>
    %74 = vector.broadcast %73 : vector<1x8x8xi1> to vector<2x8x8xi1>
    %75 = vector.broadcast %cst_21 : f32 to vector<2x8x8xf32>
    %76 = arith.select %74, %72, %75 : vector<2x8x8xi1>, vector<2x8x8xf32>
    %cst_22 = arith.constant dense<0xFF800000> : vector<2x8xf32>
    %77 = vector.multi_reduction <maximumf>, %76, %cst_22 [2] : vector<2x8x8xf32> to vector<2x8xf32>
    %78 = vector.shape_cast %77 : vector<2x8xf32> to vector<2x8x1xf32>
    %79 = vector.broadcast %78 : vector<2x8x1xf32> to vector<2x8x8xf32>
    %80 = arith.subf %76, %79 : vector<2x8x8xf32>
    %81 = math.exp %80 : vector<2x8x8xf32>
    %cst_23 = arith.constant dense<0.000000e+00> : vector<2x8xf32>
    %82 = vector.multi_reduction <add>, %81, %cst_23 [2] : vector<2x8x8xf32> to vector<2x8xf32>
    %83 = vector.shape_cast %82 : vector<2x8xf32> to vector<2x8x1xf32>
    %84 = tpu.reciprocal %83 {approx = true} : vector<2x8x1xf32> -> vector<2x8x1xf32>
    %85 = vector.broadcast %84 : vector<2x8x1xf32> to vector<2x8x8xf32>
    %86 = arith.mulf %81, %85 : vector<2x8x8xf32>
    "tpu.trace_start"() <{level = 10 : i32, message = "bqk,bkd->bqd"}> : () -> ()
    %cst_24 = arith.constant dense<0.000000e+00> : vector<2x8x8xf32>
    %87 = tpu.matmul %86, %69, %cst_24 {dimension_numbers = #tpu.dot_dimension_numbers<[2], [1], [1], [2], [0, 0, 0, 1, 1, 2], [0], [0]>} : vector<2x8x8xf32>, vector<2x8x8xf32>, vector<2x8x8xf32> -> vector<2x8x8xf32>
    "tpu.trace_stop"() : () -> ()
    %88 = vector.extract_strided_slice %43 {offsets = [0, 0, 16], sizes = [2, 8, 8], strides = [1, 1, 1]} : vector<2x8x32xf32> to vector<2x8x8xf32>
    %89 = vector.extract_strided_slice %44 {offsets = [0, 0, 16], sizes = [2, 8, 8], strides = [1, 1, 1]} : vector<2x8x32xf32> to vector<2x8x8xf32>
    %90 = vector.extract_strided_slice %45 {offsets = [0, 0, 16], sizes = [2, 8, 8], strides = [1, 1, 1]} : vector<2x8x32xf32> to vector<2x8x8xf32>
    "tpu.trace_start"() <{level = 10 : i32, message = "bqd,bkd->bqk"}> : () -> ()
    %cst_25 = arith.constant dense<0.000000e+00> : vector<2x8x8xf32>
    %91 = tpu.matmul %88, %89, %cst_25 {dimension_numbers = #tpu.dot_dimension_numbers<[2], [2], [1], [1], [0, 0, 0, 1, 1, 1], [0], [0]>} : vector<2x8x8xf32>, vector<2x8x8xf32>, vector<2x8x8xf32> -> vector<2x8x8xf32>
    "tpu.trace_stop"() : () -> ()
    %cst_26 = arith.constant 0.353553385 : f32
    %92 = vector.broadcast %cst_26 : f32 to vector<2x8x8xf32>
    %93 = arith.mulf %91, %92 : vector<2x8x8xf32>
    %cst_27 = arith.constant -1.000000e+09 : f32
    %94 = vector.shape_cast %2 : vector<8x8xi1> to vector<1x8x8xi1>
    %95 = vector.broadcast %94 : vector<1x8x8xi1> to vector<2x8x8xi1>
    %96 = vector.broadcast %cst_27 : f32 to vector<2x8x8xf32>
    %97 = arith.select %95, %93, %96 : vector<2x8x8xi1>, vector<2x8x8xf32>
    %cst_28 = arith.constant dense<0xFF800000> : vector<2x8xf32>
    %98 = vector.multi_reduction <maximumf>, %97, %cst_28 [2] : vector<2x8x8xf32> to vector<2x8xf32>
    %99 = vector.shape_cast %98 : vector<2x8xf32> to vector<2x8x1xf32>
    %100 = vector.broadcast %99 : vector<2x8x1xf32> to vector<2x8x8xf32>
    %101 = arith.subf %97, %100 : vector<2x8x8xf32>
    %102 = math.exp %101 : vector<2x8x8xf32>
    %cst_29 = arith.constant dense<0.000000e+00> : vector<2x8xf32>
    %103 = vector.multi_reduction <add>, %102, %cst_29 [2] : vector<2x8x8xf32> to vector<2x8xf32>
    %104 = vector.shape_cast %103 : vector<2x8xf32> to vector<2x8x1xf32>
    %105 = tpu.reciprocal %104 {approx = true} : vector<2x8x1xf32> -> vector<2x8x1xf32>
    %106 = vector.broadcast %105 : vector<2x8x1xf32> to vector<2x8x8xf32>
    %107 = arith.mulf %102, %106 : vector<2x8x8xf32>
    "tpu.trace_start"() <{level = 10 : i32, message = "bqk,bkd->bqd"}> : () -> ()
    %cst_30 = arith.constant dense<0.000000e+00> : vector<2x8x8xf32>
    %108 = tpu.matmul %107, %90, %cst_30 {dimension_numbers = #tpu.dot_dimension_numbers<[2], [1], [1], [2], [0, 0, 0, 1, 1, 2], [0], [0]>} : vector<2x8x8xf32>, vector<2x8x8xf32>, vector<2x8x8xf32> -> vector<2x8x8xf32>
    "tpu.trace_stop"() : () -> ()
    %109 = vector.extract_strided_slice %43 {offsets = [0, 0, 24], sizes = [2, 8, 8], strides = [1, 1, 1]} : vector<2x8x32xf32> to vector<2x8x8xf32>
    %110 = vector.extract_strided_slice %44 {offsets = [0, 0, 24], sizes = [2, 8, 8], strides = [1, 1, 1]} : vector<2x8x32xf32> to vector<2x8x8xf32>
    %111 = vector.extract_strided_slice %45 {offsets = [0, 0, 24], sizes = [2, 8, 8], strides = [1, 1, 1]} : vector<2x8x32xf32> to vector<2x8x8xf32>
    "tpu.trace_start"() <{level = 10 : i32, message = "bqd,bkd->bqk"}> : () -> ()
    %cst_31 = arith.constant dense<0.000000e+00> : vector<2x8x8xf32>
    %112 = tpu.matmul %109, %110, %cst_31 {dimension_numbers = #tpu.dot_dimension_numbers<[2], [2], [1], [1], [0, 0, 0, 1, 1, 1], [0], [0]>} : vector<2x8x8xf32>, vector<2x8x8xf32>, vector<2x8x8xf32> -> vector<2x8x8xf32>
    "tpu.trace_stop"() : () -> ()
    %cst_32 = arith.constant 0.353553385 : f32
    %113 = vector.broadcast %cst_32 : f32 to vector<2x8x8xf32>
    %114 = arith.mulf %112, %113 : vector<2x8x8xf32>
    %cst_33 = arith.constant -1.000000e+09 : f32
    %115 = vector.shape_cast %2 : vector<8x8xi1> to vector<1x8x8xi1>
    %116 = vector.broadcast %115 : vector<1x8x8xi1> to vector<2x8x8xi1>
    %117 = vector.broadcast %cst_33 : f32 to vector<2x8x8xf32>
    %118 = arith.select %116, %114, %117 : vector<2x8x8xi1>, vector<2x8x8xf32>
    %cst_34 = arith.constant dense<0xFF800000> : vector<2x8xf32>
    %119 = vector.multi_reduction <maximumf>, %118, %cst_34 [2] : vector<2x8x8xf32> to vector<2x8xf32>
    %120 = vector.shape_cast %119 : vector<2x8xf32> to vector<2x8x1xf32>
    %121 = vector.broadcast %120 : vector<2x8x1xf32> to vector<2x8x8xf32>
    %122 = arith.subf %118, %121 : vector<2x8x8xf32>
    %123 = math.exp %122 : vector<2x8x8xf32>
    %cst_35 = arith.constant dense<0.000000e+00> : vector<2x8xf32>
    %124 = vector.multi_reduction <add>, %123, %cst_35 [2] : vector<2x8x8xf32> to vector<2x8xf32>
    %125 = vector.shape_cast %124 : vector<2x8xf32> to vector<2x8x1xf32>
    %126 = tpu.reciprocal %125 {approx = true} : vector<2x8x1xf32> -> vector<2x8x1xf32>
    %127 = vector.broadcast %126 : vector<2x8x1xf32> to vector<2x8x8xf32>
    %128 = arith.mulf %123, %127 : vector<2x8x8xf32>
    "tpu.trace_start"() <{level = 10 : i32, message = "bqk,bkd->bqd"}> : () -> ()
    %cst_36 = arith.constant dense<0.000000e+00> : vector<2x8x8xf32>
    %129 = tpu.matmul %128, %111, %cst_36 {dimension_numbers = #tpu.dot_dimension_numbers<[2], [1], [1], [2], [0, 0, 0, 1, 1, 2], [0], [0]>} : vector<2x8x8xf32>, vector<2x8x8xf32>, vector<2x8x8xf32> -> vector<2x8x8xf32>
    "tpu.trace_stop"() : () -> ()
    %130 = tpu.concatenate %66, %87, %108, %129 in 2 : vector<2x8x8xf32>, vector<2x8x8xf32>, vector<2x8x8xf32>, vector<2x8x8xf32> -> vector<2x8x32xf32>
    %131 = vector.shape_cast %130 : vector<2x8x32xf32> to vector<16x32xf32>
    %c0_37 = arith.constant 0 : index
    %c0_38 = arith.constant 0 : index
    %c0_39 = arith.constant 0 : index
    %132 = vector.load %arg3[%c0_37, %c0_38, %c0_39] : memref<2x32x32xf32, #tpu.memory_space<vmem>>, vector<1x32x32xf32>
    %133 = vector.shape_cast %132 : vector<1x32x32xf32> to vector<32x32xf32>
    %cst_40 = arith.constant dense<0.000000e+00> : vector<16x32xf32>
    %134 = tpu.matmul %131, %133, %cst_40 {dimension_numbers = #tpu.dot_dimension_numbers<[1], [0], [0], [1], [0, 0, 1, 1], [], []>} : vector<16x32xf32>, vector<32x32xf32>, vector<16x32xf32> -> vector<16x32xf32>
    %135 = vector.broadcast %10 : vector<1x32xf32> to vector<16x32xf32>
    %136 = arith.addf %134, %135 : vector<16x32xf32>
    %137 = arith.addf %4, %136 : vector<16x32xf32>
    %cst_41 = arith.constant dense<0.000000e+00> : vector<16xf32>
    %138 = vector.multi_reduction <add>, %137, %cst_41 [1] : vector<16x32xf32> to vector<16xf32>
    %139 = vector.shape_cast %138 : vector<16xf32> to vector<16x1xf32>
    %cst_42 = arith.constant 3.200000e+01 : f32
    %140 = vector.broadcast %cst_42 : f32 to vector<16x1xf32>
    %141 = arith.divf %139, %140 : vector<16x1xf32>
    %142 = vector.broadcast %141 : vector<16x1xf32> to vector<16x32xf32>
    %143 = arith.subf %137, %142 : vector<16x32xf32>
    %144 = arith.mulf %143, %143 : vector<16x32xf32>
    %cst_43 = arith.constant dense<0.000000e+00> : vector<16xf32>
    %145 = vector.multi_reduction <add>, %144, %cst_43 [1] : vector<16x32xf32> to vector<16xf32>
    %146 = vector.shape_cast %145 : vector<16xf32> to vector<16x1xf32>
    %cst_44 = arith.constant 3.200000e+01 : f32
    %147 = vector.broadcast %cst_44 : f32 to vector<16x1xf32>
    %148 = arith.divf %146, %147 : vector<16x1xf32>
    %149 = vector.broadcast %141 : vector<16x1xf32> to vector<16x32xf32>
    %150 = arith.subf %137, %149 : vector<16x32xf32>
    %cst_45 = arith.constant 9.99999974E-6 : f32
    %151 = vector.broadcast %cst_45 : f32 to vector<16x1xf32>
    %152 = arith.addf %148, %151 : vector<16x1xf32>
    %153 = math.rsqrt %152 : vector<16x1xf32>
    %154 = vector.broadcast %153 : vector<16x1xf32> to vector<16x32xf32>
    %155 = arith.mulf %150, %154 : vector<16x32xf32>
    %156 = vector.broadcast %11 : vector<1x32xf32> to vector<16x32xf32>
    %157 = arith.mulf %155, %156 : vector<16x32xf32>
    %158 = vector.broadcast %12 : vector<1x32xf32> to vector<16x32xf32>
    %159 = arith.addf %157, %158 : vector<16x32xf32>
    %c0_46 = arith.constant 0 : index
    %c0_47 = arith.constant 0 : index
    %c0_48 = arith.constant 0 : index
    %160 = vector.load %arg4[%c0_46, %c0_47, %c0_48] : memref<2x32x128xf32, #tpu.memory_space<vmem>>, vector<1x32x128xf32>
    %161 = vector.shape_cast %160 : vector<1x32x128xf32> to vector<32x128xf32>
    %cst_49 = arith.constant dense<0.000000e+00> : vector<16x128xf32>
    %162 = tpu.matmul %159, %161, %cst_49 {dimension_numbers = #tpu.dot_dimension_numbers<[1], [0], [0], [1], [0, 0, 1, 1], [], []>} : vector<16x32xf32>, vector<32x128xf32>, vector<16x128xf32> -> vector<16x128xf32>
    %163 = vector.broadcast %13 : vector<1x128xf32> to vector<16x128xf32>
    %164 = arith.addf %162, %163 : vector<16x128xf32>
    %cst_50 = arith.constant 1.702000e+00 : f32
    %165 = vector.broadcast %cst_50 : f32 to vector<16x128xf32>
    %166 = arith.mulf %165, %164 : vector<16x128xf32>
    %167 = arith.negf %166 : vector<16x128xf32>
    %168 = math.exp %167 : vector<16x128xf32>
    %cst_51 = arith.constant 1.000000e+00 : f32
    %169 = vector.broadcast %cst_51 : f32 to vector<16x128xf32>
    %170 = arith.addf %169, %168 : vector<16x128xf32>
    %171 = arith.divf %169, %170 : vector<16x128xf32>
    %172 = arith.mulf %164, %171 : vector<16x128xf32>
    %c0_52 = arith.constant 0 : index
    %c0_53 = arith.constant 0 : index
    %c0_54 = arith.constant 0 : index
    %173 = vector.load %arg5[%c0_52, %c0_53, %c0_54] : memref<2x128x32xf32, #tpu.memory_space<vmem>>, vector<1x128x32xf32>
    %174 = vector.shape_cast %173 : vector<1x128x32xf32> to vector<128x32xf32>
    %cst_55 = arith.constant dense<0.000000e+00> : vector<16x32xf32>
    %175 = tpu.matmul %172, %174, %cst_55 {dimension_numbers = #tpu.dot_dimension_numbers<[1], [0], [0], [1], [0, 0, 1, 1], [], []>} : vector<16x128xf32>, vector<128x32xf32>, vector<16x32xf32> -> vector<16x32xf32>
    %176 = vector.broadcast %14 : vector<1x32xf32> to vector<16x32xf32>
    %177 = arith.addf %175, %176 : vector<16x32xf32>
    %178 = arith.addf %137, %177 : vector<16x32xf32>
    %c1 = arith.constant 1 : index
    %c0_56 = arith.constant 0 : index
    %c0_57 = arith.constant 0 : index
    %179 = vector.load %arg6[%c1, %c0_56, %c0_57] : memref<2x8x128xf32, #tpu.memory_space<vmem>>, vector<1x8x128xf32>
    %180 = vector.shape_cast %179 : vector<1x8x128xf32> to vector<8x128xf32>
    %181 = vector.extract_strided_slice %180 {offsets = [0, 0], sizes = [1, 32], strides = [1, 1]} : vector<8x128xf32> to vector<1x32xf32>
    %182 = vector.extract_strided_slice %180 {offsets = [1, 0], sizes = [1, 32], strides = [1, 1]} : vector<8x128xf32> to vector<1x32xf32>
    %183 = vector.extract_strided_slice %180 {offsets = [2, 0], sizes = [1, 96], strides = [1, 1]} : vector<8x128xf32> to vector<1x96xf32>
    %184 = vector.extract_strided_slice %180 {offsets = [3, 0], sizes = [1, 32], strides = [1, 1]} : vector<8x128xf32> to vector<1x32xf32>
    %185 = vector.extract_strided_slice %180 {offsets = [4, 0], sizes = [1, 32], strides = [1, 1]} : vector<8x128xf32> to vector<1x32xf32>
    %186 = vector.extract_strided_slice %180 {offsets = [5, 0], sizes = [1, 32], strides = [1, 1]} : vector<8x128xf32> to vector<1x32xf32>
    %187 = vector.extract_strided_slice %180 {offsets = [6, 0], sizes = [1, 128], strides = [1, 1]} : vector<8x128xf32> to vector<1x128xf32>
    %188 = vector.extract_strided_slice %180 {offsets = [7, 0], sizes = [1, 32], strides = [1, 1]} : vector<8x128xf32> to vector<1x32xf32>
    %cst_58 = arith.constant dense<0.000000e+00> : vector<16xf32>
    %189 = vector.multi_reduction <add>, %178, %cst_58 [1] : vector<16x32xf32> to vector<16xf32>
    %190 = vector.shape_cast %189 : vector<16xf32> to vector<16x1xf32>
    %cst_59 = arith.constant 3.200000e+01 : f32
    %191 = vector.broadcast %cst_59 : f32 to vector<16x1xf32>
    %192 = arith.divf %190, %191 : vector<16x1xf32>
    %193 = vector.broadcast %192 : vector<16x1xf32> to vector<16x32xf32>
    %194 = arith.subf %178, %193 : vector<16x32xf32>
    %195 = arith.mulf %194, %194 : vector<16x32xf32>
    %cst_60 = arith.constant dense<0.000000e+00> : vector<16xf32>
    %196 = vector.multi_reduction <add>, %195, %cst_60 [1] : vector<16x32xf32> to vector<16xf32>
    %197 = vector.shape_cast %196 : vector<16xf32> to vector<16x1xf32>
    %cst_61 = arith.constant 3.200000e+01 : f32
    %198 = vector.broadcast %cst_61 : f32 to vector<16x1xf32>
    %199 = arith.divf %197, %198 : vector<16x1xf32>
    %200 = vector.broadcast %192 : vector<16x1xf32> to vector<16x32xf32>
    %201 = arith.subf %178, %200 : vector<16x32xf32>
    %cst_62 = arith.constant 9.99999974E-6 : f32
    %202 = vector.broadcast %cst_62 : f32 to vector<16x1xf32>
    %203 = arith.addf %199, %202 : vector<16x1xf32>
    %204 = math.rsqrt %203 : vector<16x1xf32>
    %205 = vector.broadcast %204 : vector<16x1xf32> to vector<16x32xf32>
    %206 = arith.mulf %201, %205 : vector<16x32xf32>
    %207 = vector.broadcast %181 : vector<1x32xf32> to vector<16x32xf32>
    %208 = arith.mulf %206, %207 : vector<16x32xf32>
    %209 = vector.broadcast %182 : vector<1x32xf32> to vector<16x32xf32>
    %210 = arith.addf %208, %209 : vector<16x32xf32>
    %c1_63 = arith.constant 1 : index
    %c0_64 = arith.constant 0 : index
    %c0_65 = arith.constant 0 : index
    %211 = vector.load %arg2[%c1_63, %c0_64, %c0_65] : memref<2x32x96xf32, #tpu.memory_space<vmem>>, vector<1x32x96xf32>
    %212 = vector.shape_cast %211 : vector<1x32x96xf32> to vector<32x96xf32>
    %cst_66 = arith.constant dense<0.000000e+00> : vector<16x96xf32>
    %213 = tpu.matmul %210, %212, %cst_66 {dimension_numbers = #tpu.dot_dimension_numbers<[1], [0], [0], [1], [0, 0, 1, 1], [], []>} : vector<16x32xf32>, vector<32x96xf32>, vector<16x96xf32> -> vector<16x96xf32>
    %214 = vector.broadcast %183 : vector<1x96xf32> to vector<16x96xf32>
    %215 = arith.addf %213, %214 : vector<16x96xf32>
    %216 = vector.shape_cast %215 : vector<16x96xf32> to vector<2x8x96xf32>
    %217 = vector.extract_strided_slice %216 {offsets = [0, 0, 0], sizes = [2, 8, 32], strides = [1, 1, 1]} : vector<2x8x96xf32> to vector<2x8x32xf32>
    %218 = vector.extract_strided_slice %216 {offsets = [0, 0, 32], sizes = [2, 8, 32], strides = [1, 1, 1]} : vector<2x8x96xf32> to vector<2x8x32xf32>
    %219 = vector.extract_strided_slice %216 {offsets = [0, 0, 64], sizes = [2, 8, 32], strides = [1, 1, 1]} : vector<2x8x96xf32> to vector<2x8x32xf32>
    %220 = vector.extract_strided_slice %217 {offsets = [0, 0, 0], sizes = [2, 8, 8], strides = [1, 1, 1]} : vector<2x8x32xf32> to vector<2x8x8xf32>
    %221 = vector.extract_strided_slice %218 {offsets = [0, 0, 0], sizes = [2, 8, 8], strides = [1, 1, 1]} : vector<2x8x32xf32> to vector<2x8x8xf32>
    %222 = vector.extract_strided_slice %219 {offsets = [0, 0, 0], sizes = [2, 8, 8], strides = [1, 1, 1]} : vector<2x8x32xf32> to vector<2x8x8xf32>
    "tpu.trace_start"() <{level = 10 : i32, message = "bqd,bkd->bqk"}> : () -> ()
    %cst_67 = arith.constant dense<0.000000e+00> : vector<2x8x8xf32>
    %223 = tpu.matmul %220, %221, %cst_67 {dimension_numbers = #tpu.dot_dimension_numbers<[2], [2], [1], [1], [0, 0, 0, 1, 1, 1], [0], [0]>} : vector<2x8x8xf32>, vector<2x8x8xf32>, vector<2x8x8xf32> -> vector<2x8x8xf32>
    "tpu.trace_stop"() : () -> ()
    %cst_68 = arith.constant 0.353553385 : f32
    %224 = vector.broadcast %cst_68 : f32 to vector<2x8x8xf32>
    %225 = arith.mulf %223, %224 : vector<2x8x8xf32>
    %cst_69 = arith.constant -1.000000e+09 : f32
    %226 = vector.shape_cast %2 : vector<8x8xi1> to vector<1x8x8xi1>
    %227 = vector.broadcast %226 : vector<1x8x8xi1> to vector<2x8x8xi1>
    %228 = vector.broadcast %cst_69 : f32 to vector<2x8x8xf32>
    %229 = arith.select %227, %225, %228 : vector<2x8x8xi1>, vector<2x8x8xf32>
    %cst_70 = arith.constant dense<0xFF800000> : vector<2x8xf32>
    %230 = vector.multi_reduction <maximumf>, %229, %cst_70 [2] : vector<2x8x8xf32> to vector<2x8xf32>
    %231 = vector.shape_cast %230 : vector<2x8xf32> to vector<2x8x1xf32>
    %232 = vector.broadcast %231 : vector<2x8x1xf32> to vector<2x8x8xf32>
    %233 = arith.subf %229, %232 : vector<2x8x8xf32>
    %234 = math.exp %233 : vector<2x8x8xf32>
    %cst_71 = arith.constant dense<0.000000e+00> : vector<2x8xf32>
    %235 = vector.multi_reduction <add>, %234, %cst_71 [2] : vector<2x8x8xf32> to vector<2x8xf32>
    %236 = vector.shape_cast %235 : vector<2x8xf32> to vector<2x8x1xf32>
    %237 = tpu.reciprocal %236 {approx = true} : vector<2x8x1xf32> -> vector<2x8x1xf32>
    %238 = vector.broadcast %237 : vector<2x8x1xf32> to vector<2x8x8xf32>
    %239 = arith.mulf %234, %238 : vector<2x8x8xf32>
    "tpu.trace_start"() <{level = 10 : i32, message = "bqk,bkd->bqd"}> : () -> ()
    %cst_72 = arith.constant dense<0.000000e+00> : vector<2x8x8xf32>
    %240 = tpu.matmul %239, %222, %cst_72 {dimension_numbers = #tpu.dot_dimension_numbers<[2], [1], [1], [2], [0, 0, 0, 1, 1, 2], [0], [0]>} : vector<2x8x8xf32>, vector<2x8x8xf32>, vector<2x8x8xf32> -> vector<2x8x8xf32>
    "tpu.trace_stop"() : () -> ()
    %241 = vector.extract_strided_slice %217 {offsets = [0, 0, 8], sizes = [2, 8, 8], strides = [1, 1, 1]} : vector<2x8x32xf32> to vector<2x8x8xf32>
    %242 = vector.extract_strided_slice %218 {offsets = [0, 0, 8], sizes = [2, 8, 8], strides = [1, 1, 1]} : vector<2x8x32xf32> to vector<2x8x8xf32>
    %243 = vector.extract_strided_slice %219 {offsets = [0, 0, 8], sizes = [2, 8, 8], strides = [1, 1, 1]} : vector<2x8x32xf32> to vector<2x8x8xf32>
    "tpu.trace_start"() <{level = 10 : i32, message = "bqd,bkd->bqk"}> : () -> ()
    %cst_73 = arith.constant dense<0.000000e+00> : vector<2x8x8xf32>
    %244 = tpu.matmul %241, %242, %cst_73 {dimension_numbers = #tpu.dot_dimension_numbers<[2], [2], [1], [1], [0, 0, 0, 1, 1, 1], [0], [0]>} : vector<2x8x8xf32>, vector<2x8x8xf32>, vector<2x8x8xf32> -> vector<2x8x8xf32>
    "tpu.trace_stop"() : () -> ()
    %cst_74 = arith.constant 0.353553385 : f32
    %245 = vector.broadcast %cst_74 : f32 to vector<2x8x8xf32>
    %246 = arith.mulf %244, %245 : vector<2x8x8xf32>
    %cst_75 = arith.constant -1.000000e+09 : f32
    %247 = vector.shape_cast %2 : vector<8x8xi1> to vector<1x8x8xi1>
    %248 = vector.broadcast %247 : vector<1x8x8xi1> to vector<2x8x8xi1>
    %249 = vector.broadcast %cst_75 : f32 to vector<2x8x8xf32>
    %250 = arith.select %248, %246, %249 : vector<2x8x8xi1>, vector<2x8x8xf32>
    %cst_76 = arith.constant dense<0xFF800000> : vector<2x8xf32>
    %251 = vector.multi_reduction <maximumf>, %250, %cst_76 [2] : vector<2x8x8xf32> to vector<2x8xf32>
    %252 = vector.shape_cast %251 : vector<2x8xf32> to vector<2x8x1xf32>
    %253 = vector.broadcast %252 : vector<2x8x1xf32> to vector<2x8x8xf32>
    %254 = arith.subf %250, %253 : vector<2x8x8xf32>
    %255 = math.exp %254 : vector<2x8x8xf32>
    %cst_77 = arith.constant dense<0.000000e+00> : vector<2x8xf32>
    %256 = vector.multi_reduction <add>, %255, %cst_77 [2] : vector<2x8x8xf32> to vector<2x8xf32>
    %257 = vector.shape_cast %256 : vector<2x8xf32> to vector<2x8x1xf32>
    %258 = tpu.reciprocal %257 {approx = true} : vector<2x8x1xf32> -> vector<2x8x1xf32>
    %259 = vector.broadcast %258 : vector<2x8x1xf32> to vector<2x8x8xf32>
    %260 = arith.mulf %255, %259 : vector<2x8x8xf32>
    "tpu.trace_start"() <{level = 10 : i32, message = "bqk,bkd->bqd"}> : () -> ()
    %cst_78 = arith.constant dense<0.000000e+00> : vector<2x8x8xf32>
    %261 = tpu.matmul %260, %243, %cst_78 {dimension_numbers = #tpu.dot_dimension_numbers<[2], [1], [1], [2], [0, 0, 0, 1, 1, 2], [0], [0]>} : vector<2x8x8xf32>, vector<2x8x8xf32>, vector<2x8x8xf32> -> vector<2x8x8xf32>
    "tpu.trace_stop"() : () -> ()
    %262 = vector.extract_strided_slice %217 {offsets = [0, 0, 16], sizes = [2, 8, 8], strides = [1, 1, 1]} : vector<2x8x32xf32> to vector<2x8x8xf32>
    %263 = vector.extract_strided_slice %218 {offsets = [0, 0, 16], sizes = [2, 8, 8], strides = [1, 1, 1]} : vector<2x8x32xf32> to vector<2x8x8xf32>
    %264 = vector.extract_strided_slice %219 {offsets = [0, 0, 16], sizes = [2, 8, 8], strides = [1, 1, 1]} : vector<2x8x32xf32> to vector<2x8x8xf32>
    "tpu.trace_start"() <{level = 10 : i32, message = "bqd,bkd->bqk"}> : () -> ()
    %cst_79 = arith.constant dense<0.000000e+00> : vector<2x8x8xf32>
    %265 = tpu.matmul %262, %263, %cst_79 {dimension_numbers = #tpu.dot_dimension_numbers<[2], [2], [1], [1], [0, 0, 0, 1, 1, 1], [0], [0]>} : vector<2x8x8xf32>, vector<2x8x8xf32>, vector<2x8x8xf32> -> vector<2x8x8xf32>
    "tpu.trace_stop"() : () -> ()
    %cst_80 = arith.constant 0.353553385 : f32
    %266 = vector.broadcast %cst_80 : f32 to vector<2x8x8xf32>
    %267 = arith.mulf %265, %266 : vector<2x8x8xf32>
    %cst_81 = arith.constant -1.000000e+09 : f32
    %268 = vector.shape_cast %2 : vector<8x8xi1> to vector<1x8x8xi1>
    %269 = vector.broadcast %268 : vector<1x8x8xi1> to vector<2x8x8xi1>
    %270 = vector.broadcast %cst_81 : f32 to vector<2x8x8xf32>
    %271 = arith.select %269, %267, %270 : vector<2x8x8xi1>, vector<2x8x8xf32>
    %cst_82 = arith.constant dense<0xFF800000> : vector<2x8xf32>
    %272 = vector.multi_reduction <maximumf>, %271, %cst_82 [2] : vector<2x8x8xf32> to vector<2x8xf32>
    %273 = vector.shape_cast %272 : vector<2x8xf32> to vector<2x8x1xf32>
    %274 = vector.broadcast %273 : vector<2x8x1xf32> to vector<2x8x8xf32>
    %275 = arith.subf %271, %274 : vector<2x8x8xf32>
    %276 = math.exp %275 : vector<2x8x8xf32>
    %cst_83 = arith.constant dense<0.000000e+00> : vector<2x8xf32>
    %277 = vector.multi_reduction <add>, %276, %cst_83 [2] : vector<2x8x8xf32> to vector<2x8xf32>
    %278 = vector.shape_cast %277 : vector<2x8xf32> to vector<2x8x1xf32>
    %279 = tpu.reciprocal %278 {approx = true} : vector<2x8x1xf32> -> vector<2x8x1xf32>
    %280 = vector.broadcast %279 : vector<2x8x1xf32> to vector<2x8x8xf32>
    %281 = arith.mulf %276, %280 : vector<2x8x8xf32>
    "tpu.trace_start"() <{level = 10 : i32, message = "bqk,bkd->bqd"}> : () -> ()
    %cst_84 = arith.constant dense<0.000000e+00> : vector<2x8x8xf32>
    %282 = tpu.matmul %281, %264, %cst_84 {dimension_numbers = #tpu.dot_dimension_numbers<[2], [1], [1], [2], [0, 0, 0, 1, 1, 2], [0], [0]>} : vector<2x8x8xf32>, vector<2x8x8xf32>, vector<2x8x8xf32> -> vector<2x8x8xf32>
    "tpu.trace_stop"() : () -> ()
    %283 = vector.extract_strided_slice %217 {offsets = [0, 0, 24], sizes = [2, 8, 8], strides = [1, 1, 1]} : vector<2x8x32xf32> to vector<2x8x8xf32>
    %284 = vector.extract_strided_slice %218 {offsets = [0, 0, 24], sizes = [2, 8, 8], strides = [1, 1, 1]} : vector<2x8x32xf32> to vector<2x8x8xf32>
    %285 = vector.extract_strided_slice %219 {offsets = [0, 0, 24], sizes = [2, 8, 8], strides = [1, 1, 1]} : vector<2x8x32xf32> to vector<2x8x8xf32>
    "tpu.trace_start"() <{level = 10 : i32, message = "bqd,bkd->bqk"}> : () -> ()
    %cst_85 = arith.constant dense<0.000000e+00> : vector<2x8x8xf32>
    %286 = tpu.matmul %283, %284, %cst_85 {dimension_numbers = #tpu.dot_dimension_numbers<[2], [2], [1], [1], [0, 0, 0, 1, 1, 1], [0], [0]>} : vector<2x8x8xf32>, vector<2x8x8xf32>, vector<2x8x8xf32> -> vector<2x8x8xf32>
    "tpu.trace_stop"() : () -> ()
    %cst_86 = arith.constant 0.353553385 : f32
    %287 = vector.broadcast %cst_86 : f32 to vector<2x8x8xf32>
    %288 = arith.mulf %286, %287 : vector<2x8x8xf32>
    %cst_87 = arith.constant -1.000000e+09 : f32
    %289 = vector.shape_cast %2 : vector<8x8xi1> to vector<1x8x8xi1>
    %290 = vector.broadcast %289 : vector<1x8x8xi1> to vector<2x8x8xi1>
    %291 = vector.broadcast %cst_87 : f32 to vector<2x8x8xf32>
    %292 = arith.select %290, %288, %291 : vector<2x8x8xi1>, vector<2x8x8xf32>
    %cst_88 = arith.constant dense<0xFF800000> : vector<2x8xf32>
    %293 = vector.multi_reduction <maximumf>, %292, %cst_88 [2] : vector<2x8x8xf32> to vector<2x8xf32>
    %294 = vector.shape_cast %293 : vector<2x8xf32> to vector<2x8x1xf32>
    %295 = vector.broadcast %294 : vector<2x8x1xf32> to vector<2x8x8xf32>
    %296 = arith.subf %292, %295 : vector<2x8x8xf32>
    %297 = math.exp %296 : vector<2x8x8xf32>
    %cst_89 = arith.constant dense<0.000000e+00> : vector<2x8xf32>
    %298 = vector.multi_reduction <add>, %297, %cst_89 [2] : vector<2x8x8xf32> to vector<2x8xf32>
    %299 = vector.shape_cast %298 : vector<2x8xf32> to vector<2x8x1xf32>
    %300 = tpu.reciprocal %299 {approx = true} : vector<2x8x1xf32> -> vector<2x8x1xf32>
    %301 = vector.broadcast %300 : vector<2x8x1xf32> to vector<2x8x8xf32>
    %302 = arith.mulf %297, %301 : vector<2x8x8xf32>
    "tpu.trace_start"() <{level = 10 : i32, message = "bqk,bkd->bqd"}> : () -> ()
    %cst_90 = arith.constant dense<0.000000e+00> : vector<2x8x8xf32>
    %303 = tpu.matmul %302, %285, %cst_90 {dimension_numbers = #tpu.dot_dimension_numbers<[2], [1], [1], [2], [0, 0, 0, 1, 1, 2], [0], [0]>} : vector<2x8x8xf32>, vector<2x8x8xf32>, vector<2x8x8xf32> -> vector<2x8x8xf32>
    "tpu.trace_stop"() : () -> ()
    %304 = tpu.concatenate %240, %261, %282, %303 in 2 : vector<2x8x8xf32>, vector<2x8x8xf32>, vector<2x8x8xf32>, vector<2x8x8xf32> -> vector<2x8x32xf32>
    %305 = vector.shape_cast %304 : vector<2x8x32xf32> to vector<16x32xf32>
    %c1_91 = arith.constant 1 : index
    %c0_92 = arith.constant 0 : index
    %c0_93 = arith.constant 0 : index
    %306 = vector.load %arg3[%c1_91, %c0_92, %c0_93] : memref<2x32x32xf32, #tpu.memory_space<vmem>>, vector<1x32x32xf32>
    %307 = vector.shape_cast %306 : vector<1x32x32xf32> to vector<32x32xf32>
    %cst_94 = arith.constant dense<0.000000e+00> : vector<16x32xf32>
    %308 = tpu.matmul %305, %307, %cst_94 {dimension_numbers = #tpu.dot_dimension_numbers<[1], [0], [0], [1], [0, 0, 1, 1], [], []>} : vector<16x32xf32>, vector<32x32xf32>, vector<16x32xf32> -> vector<16x32xf32>
    %309 = vector.broadcast %184 : vector<1x32xf32> to vector<16x32xf32>
    %310 = arith.addf %308, %309 : vector<16x32xf32>
    %311 = arith.addf %178, %310 : vector<16x32xf32>
    %cst_95 = arith.constant dense<0.000000e+00> : vector<16xf32>
    %312 = vector.multi_reduction <add>, %311, %cst_95 [1] : vector<16x32xf32> to vector<16xf32>
    %313 = vector.shape_cast %312 : vector<16xf32> to vector<16x1xf32>
    %cst_96 = arith.constant 3.200000e+01 : f32
    %314 = vector.broadcast %cst_96 : f32 to vector<16x1xf32>
    %315 = arith.divf %313, %314 : vector<16x1xf32>
    %316 = vector.broadcast %315 : vector<16x1xf32> to vector<16x32xf32>
    %317 = arith.subf %311, %316 : vector<16x32xf32>
    %318 = arith.mulf %317, %317 : vector<16x32xf32>
    %cst_97 = arith.constant dense<0.000000e+00> : vector<16xf32>
    %319 = vector.multi_reduction <add>, %318, %cst_97 [1] : vector<16x32xf32> to vector<16xf32>
    %320 = vector.shape_cast %319 : vector<16xf32> to vector<16x1xf32>
    %cst_98 = arith.constant 3.200000e+01 : f32
    %321 = vector.broadcast %cst_98 : f32 to vector<16x1xf32>
    %322 = arith.divf %320, %321 : vector<16x1xf32>
    %323 = vector.broadcast %315 : vector<16x1xf32> to vector<16x32xf32>
    %324 = arith.subf %311, %323 : vector<16x32xf32>
    %cst_99 = arith.constant 9.99999974E-6 : f32
    %325 = vector.broadcast %cst_99 : f32 to vector<16x1xf32>
    %326 = arith.addf %322, %325 : vector<16x1xf32>
    %327 = math.rsqrt %326 : vector<16x1xf32>
    %328 = vector.broadcast %327 : vector<16x1xf32> to vector<16x32xf32>
    %329 = arith.mulf %324, %328 : vector<16x32xf32>
    %330 = vector.broadcast %185 : vector<1x32xf32> to vector<16x32xf32>
    %331 = arith.mulf %329, %330 : vector<16x32xf32>
    %332 = vector.broadcast %186 : vector<1x32xf32> to vector<16x32xf32>
    %333 = arith.addf %331, %332 : vector<16x32xf32>
    %c1_100 = arith.constant 1 : index
    %c0_101 = arith.constant 0 : index
    %c0_102 = arith.constant 0 : index
    %334 = vector.load %arg4[%c1_100, %c0_101, %c0_102] : memref<2x32x128xf32, #tpu.memory_space<vmem>>, vector<1x32x128xf32>
    %335 = vector.shape_cast %334 : vector<1x32x128xf32> to vector<32x128xf32>
    %cst_103 = arith.constant dense<0.000000e+00> : vector<16x128xf32>
    %336 = tpu.matmul %333, %335, %cst_103 {dimension_numbers = #tpu.dot_dimension_numbers<[1], [0], [0], [1], [0, 0, 1, 1], [], []>} : vector<16x32xf32>, vector<32x128xf32>, vector<16x128xf32> -> vector<16x128xf32>
    %337 = vector.broadcast %187 : vector<1x128xf32> to vector<16x128xf32>
    %338 = arith.addf %336, %337 : vector<16x128xf32>
    %cst_104 = arith.constant 1.702000e+00 : f32
    %339 = vector.broadcast %cst_104 : f32 to vector<16x128xf32>
    %340 = arith.mulf %339, %338 : vector<16x128xf32>
    %341 = arith.negf %340 : vector<16x128xf32>
    %342 = math.exp %341 : vector<16x128xf32>
    %cst_105 = arith.constant 1.000000e+00 : f32
    %343 = vector.broadcast %cst_105 : f32 to vector<16x128xf32>
    %344 = arith.addf %343, %342 : vector<16x128xf32>
    %345 = arith.divf %343, %344 : vector<16x128xf32>
    %346 = arith.mulf %338, %345 : vector<16x128xf32>
    %c1_106 = arith.constant 1 : index
    %c0_107 = arith.constant 0 : index
    %c0_108 = arith.constant 0 : index
    %347 = vector.load %arg5[%c1_106, %c0_107, %c0_108] : memref<2x128x32xf32, #tpu.memory_space<vmem>>, vector<1x128x32xf32>
    %348 = vector.shape_cast %347 : vector<1x128x32xf32> to vector<128x32xf32>
    %cst_109 = arith.constant dense<0.000000e+00> : vector<16x32xf32>
    %349 = tpu.matmul %346, %348, %cst_109 {dimension_numbers = #tpu.dot_dimension_numbers<[1], [0], [0], [1], [0, 0, 1, 1], [], []>} : vector<16x128xf32>, vector<128x32xf32>, vector<16x32xf32> -> vector<16x32xf32>
    %350 = vector.broadcast %188 : vector<1x32xf32> to vector<16x32xf32>
    %351 = arith.addf %349, %350 : vector<16x32xf32>
    %352 = arith.addf %311, %351 : vector<16x32xf32>
    %353 = vector.shape_cast %352 : vector<16x32xf32> to vector<2x8x32xf32>
    %354 = tpu.iota {dimensions = array<i32: 0>} : vector<8x1xi32>
    %c0_110 = arith.constant 0 : index
    %355 = memref.load %arg0[%c0_110] : memref<2xi32, #tpu.memory_space<smem>>
    %356 = vector.broadcast %355 : i32 to vector<8x1xi32>
    %357 = arith.cmpi eq, %354, %356 : vector<8x1xi32>
    %358 = vector.extract_strided_slice %353 {offsets = [0, 0, 0], sizes = [1, 8, 32], strides = [1, 1, 1]} : vector<2x8x32xf32> to vector<1x8x32xf32>
    %359 = vector.shape_cast %358 : vector<1x8x32xf32> to vector<8x32xf32>
    %cst_111 = arith.constant 0.000000e+00 : f32
    %360 = vector.shape_cast %357 : vector<8x1xi1> to vector<8x1xi1>
    %361 = vector.broadcast %360 : vector<8x1xi1> to vector<8x32xi1>
    %362 = vector.broadcast %cst_111 : f32 to vector<8x32xf32>
    %363 = arith.select %361, %359, %362 : vector<8x32xi1>, vector<8x32xf32>
    %cst_112 = arith.constant dense<0.000000e+00> : vector<32xf32>
    %364 = vector.multi_reduction <add>, %363, %cst_112 [0] : vector<8x32xf32> to vector<32xf32>
    %365 = vector.shape_cast %364 : vector<32xf32> to vector<1x32xf32>
    %c1_113 = arith.constant 1 : index
    %366 = memref.load %arg0[%c1_113] : memref<2xi32, #tpu.memory_space<smem>>
    %367 = vector.broadcast %366 : i32 to vector<8x1xi32>
    %368 = arith.cmpi eq, %354, %367 : vector<8x1xi32>
    %369 = vector.extract_strided_slice %353 {offsets = [1, 0, 0], sizes = [1, 8, 32], strides = [1, 1, 1]} : vector<2x8x32xf32> to vector<1x8x32xf32>
    %370 = vector.shape_cast %369 : vector<1x8x32xf32> to vector<8x32xf32>
    %cst_114 = arith.constant 0.000000e+00 : f32
    %371 = vector.shape_cast %368 : vector<8x1xi1> to vector<8x1xi1>
    %372 = vector.broadcast %371 : vector<8x1xi1> to vector<8x32xi1>
    %373 = vector.broadcast %cst_114 : f32 to vector<8x32xf32>
    %374 = arith.select %372, %370, %373 : vector<8x32xi1>, vector<8x32xf32>
    %cst_115 = arith.constant dense<0.000000e+00> : vector<32xf32>
    %375 = vector.multi_reduction <add>, %374, %cst_115 [0] : vector<8x32xf32> to vector<32xf32>
    %376 = vector.shape_cast %375 : vector<32xf32> to vector<1x32xf32>
    %377 = tpu.concatenate %365, %376 in 0 : vector<1x32xf32>, vector<1x32xf32> -> vector<2x32xf32>
    %c0_116 = arith.constant 0 : index
    %c0_117 = arith.constant 0 : index
    %378 = vector.load %arg7[%c0_116, %c0_117] : memref<2x32xf32, #tpu.memory_space<vmem>>, vector<1x32xf32>
    %c1_118 = arith.constant 1 : index
    %c0_119 = arith.constant 0 : index
    %379 = vector.load %arg7[%c1_118, %c0_119] : memref<2x32xf32, #tpu.memory_space<vmem>>, vector<1x32xf32>
    %cst_120 = arith.constant dense<0.000000e+00> : vector<2xf32>
    %380 = vector.multi_reduction <add>, %377, %cst_120 [1] : vector<2x32xf32> to vector<2xf32>
    %381 = vector.shape_cast %380 : vector<2xf32> to vector<2x1xf32>
    %cst_121 = arith.constant 3.200000e+01 : f32
    %382 = vector.broadcast %cst_121 : f32 to vector<2x1xf32>
    %383 = arith.divf %381, %382 : vector<2x1xf32>
    %384 = vector.broadcast %383 : vector<2x1xf32> to vector<2x32xf32>
    %385 = arith.subf %377, %384 : vector<2x32xf32>
    %386 = arith.mulf %385, %385 : vector<2x32xf32>
    %cst_122 = arith.constant dense<0.000000e+00> : vector<2xf32>
    %387 = vector.multi_reduction <add>, %386, %cst_122 [1] : vector<2x32xf32> to vector<2xf32>
    %388 = vector.shape_cast %387 : vector<2xf32> to vector<2x1xf32>
    %cst_123 = arith.constant 3.200000e+01 : f32
    %389 = vector.broadcast %cst_123 : f32 to vector<2x1xf32>
    %390 = arith.divf %388, %389 : vector<2x1xf32>
    %391 = vector.broadcast %383 : vector<2x1xf32> to vector<2x32xf32>
    %392 = arith.subf %377, %391 : vector<2x32xf32>
    %cst_124 = arith.constant 9.99999974E-6 : f32
    %393 = vector.broadcast %cst_124 : f32 to vector<2x1xf32>
    %394 = arith.addf %390, %393 : vector<2x1xf32>
    %395 = math.rsqrt %394 : vector<2x1xf32>
    %396 = vector.broadcast %395 : vector<2x1xf32> to vector<2x32xf32>
    %397 = arith.mulf %392, %396 : vector<2x32xf32>
    %398 = vector.broadcast %378 : vector<1x32xf32> to vector<2x32xf32>
    %399 = arith.mulf %397, %398 : vector<2x32xf32>
    %400 = vector.broadcast %379 : vector<1x32xf32> to vector<2x32xf32>
    %401 = arith.addf %399, %400 : vector<2x32xf32>
    %c0_125 = arith.constant 0 : index
    %c0_126 = arith.constant 0 : index
    %402 = vector.load %arg8[%c0_125, %c0_126] : memref<32x32xf32, #tpu.memory_space<vmem>>, vector<32x32xf32>
    %cst_127 = arith.constant dense<0.000000e+00> : vector<2x32xf32>
    %403 = tpu.matmul %401, %402, %cst_127 {dimension_numbers = #tpu.dot_dimension_numbers<[1], [0], [0], [1], [0, 0, 1, 1], [], []>} : vector<2x32xf32>, vector<32x32xf32>, vector<2x32xf32> -> vector<2x32xf32>
    %c0_128 = arith.constant 0 : index
    %c0_129 = arith.constant 0 : index
    %404 = vector.load %arg9[%c0_128, %c0_129] : memref<2x32xf32, #tpu.memory_space<vmem>>, vector<2x32xf32>
    tpu.vector_store %arg9[%c0_128, %c0_129], %403 {strides = array<i32>} : memref<2x32xf32, #tpu.memory_space<vmem>>, vector<2x32xf32>,
    return
  }
}

</mosaic_0001>

<llo_original>
// kernel: encoder_text_clip_forward.1
$region0: #{encoder_text_clip_forward.1}
  #allocation0 [shape = 'u32[]', space=smem, size = 0x4, offset = 0x4, fixed_abs, tag = 'smem constant byte address 0x4 - core index']
  #allocation1 [shape = 'u32[144,128]{1,0:T(1,128)}', space=vmem, size = 0x12000, scoped, tag = 'internal scratch']
  %s0 = inlined_call_operand.vmem [shape: s32[2], index: 0, kind: input, shape index: {}]
  %s1 = inlined_call_operand.vmem [shape: f32[2,8,32], index: 1, kind: input, shape index: {}]
  %s2 = inlined_call_operand.vmem [shape: f32[2,32,96], index: 2, kind: input, shape index: {}]
  %s3 = inlined_call_operand.vmem [shape: f32[2,32,32], index: 3, kind: input, shape index: {}]
  %s4 = inlined_call_operand.vmem [shape: f32[2,32,128], index: 4, kind: input, shape index: {}]
  %s5 = inlined_call_operand.vmem [shape: f32[2,128,32], index: 5, kind: input, shape index: {}]
  %s6 = inlined_call_operand.vmem [shape: f32[2,8,128], index: 6, kind: input, shape index: {}]
  %s7 = inlined_call_operand.vmem [shape: f32[2,32], index: 7, kind: input, shape index: {}]
  %s8 = inlined_call_operand.vmem [shape: f32[32,32], index: 8, kind: input, shape index: {}]
  %s9 = inlined_call_operand.hbm [shape: f32[2,32], index: 9, kind: output, shape index: {}]
  %s10 = sld [smem:[#allocation0]]
  $region50: #{encoder_text_clip_forward.1} parent=0
    _
  %s12 = ssub.s32 1, %s10
  %s13 = scalar_select 0, %s12, %s10
  $region1: #{encoder_text_clip_forward.1} parent=0
    #allocation2 [shape = 'u8[512]{0}', space=smem, size = 0x200, scoped, tag = 'input window, operand 0, single buffered']
    #allocation3 [shape = 's32[1]{0}', space=sflag, size = 0x4, scoped, tag = 'scoped memory for encoder_text_clip_forward.1']
    #allocation4 [shape = 's32[1]{0}', space=sflag, size = 0x4, scoped, tag = 'scoped memory for encoder_text_clip_forward.1']
    #allocation5 [shape = 'u8[1024]{0}', space=vmem, size = 0x400, scoped, tag = 'output window, operand 0, single buffered']
    %14 = vsyncpa [#allocation4], 0
    %15 = vsyncpa [#allocation3], 0
    // Predicated region
    $region2: #{encoder_text_clip_forward.1} parent=1 // pred_check
      _
    $region3: #{encoder_text_clip_forward.1} parent=1 // pred_check_branch
      %17 = sbr.rel (0) target = $region5
    $region4: #{encoder_text_clip_forward.1} parent=1 // pred_region
      %s19 = ssub.s32 16, 16
      %20 = vsyncadd [#allocation4], %s19
      %s22 = sshll.u32 %s0, 4
      %s23 = int_to_ptr.vmem [resolvable:$true] %s22
      %25 = dma.vmem_to_smem %s23, 16, [#allocation2], [#allocation4]
    $region5: #{encoder_text_clip_forward.1} parent=1 // pred_fallthru
      _
    // Predicated region
    $region6: #{encoder_text_clip_forward.1} parent=1 // pred_check
      _
    $region7: #{encoder_text_clip_forward.1} parent=1 // pred_check_branch
      %27 = sbr.rel (0) target = $region9
    $region8: #{encoder_text_clip_forward.1} parent=1 // pred_region
      _
    $region9: #{encoder_text_clip_forward.1} parent=1 // pred_fallthru
      _
    // Predicated region
    $region10: #{encoder_text_clip_forward.1} parent=1 // pred_check
      _
    $region11: #{encoder_text_clip_forward.1} parent=1 // pred_check_branch
      %29 = sbr.rel (0) target = $region13
    $region12: #{encoder_text_clip_forward.1} parent=1 // pred_region
      _
    $region13: #{encoder_text_clip_forward.1} parent=1 // pred_fallthru
      _
    // Predicated region
    $region14: #{encoder_text_clip_forward.1} parent=1 // pred_check
      _
    $region15: #{encoder_text_clip_forward.1} parent=1 // pred_check_branch
      %31 = sbr.rel (0) target = $region17
    $region16: #{encoder_text_clip_forward.1} parent=1 // pred_region
      _
    $region17: #{encoder_text_clip_forward.1} parent=1 // pred_fallthru
      _
    // Predicated region
    $region18: #{encoder_text_clip_forward.1} parent=1 // pred_check
      _
    $region19: #{encoder_text_clip_forward.1} parent=1 // pred_check_branch
      %33 = sbr.rel (0) target = $region21
    $region20: #{encoder_text_clip_forward.1} parent=1 // pred_region
      _
    $region21: #{encoder_text_clip_forward.1} parent=1 // pred_fallthru
      _
    // Predicated region
    $region22: #{encoder_text_clip_forward.1} parent=1 // pred_check
      _
    $region23: #{encoder_text_clip_forward.1} parent=1 // pred_check_branch
      %35 = sbr.rel (0) target = $region25
    $region24: #{encoder_text_clip_forward.1} parent=1 // pred_region
      _
    $region25: #{encoder_text_clip_forward.1} parent=1 // pred_fallthru
      _
    // Predicated region
    $region26: #{encoder_text_clip_forward.1} parent=1 // pred_check
      _
    $region27: #{encoder_text_clip_forward.1} parent=1 // pred_check_branch
      %37 = sbr.rel (0) target = $region29
    $region28: #{encoder_text_clip_forward.1} parent=1 // pred_region
      _
    $region29: #{encoder_text_clip_forward.1} parent=1 // pred_fallthru
      _
    // Predicated region
    $region30: #{encoder_text_clip_forward.1} parent=1 // pred_check
      _
    $region31: #{encoder_text_clip_forward.1} parent=1 // pred_check_branch
      %39 = sbr.rel (0) target = $region33
    $region32: #{encoder_text_clip_forward.1} parent=1 // pred_region
      _
    $region33: #{encoder_text_clip_forward.1} parent=1 // pred_fallthru
      _
    // Predicated region
    $region34: #{encoder_text_clip_forward.1} parent=1 // pred_check
      _
    $region35: #{encoder_text_clip_forward.1} parent=1 // pred_check_branch
      %41 = sbr.rel (0) target = $region37
    $region36: #{encoder_text_clip_forward.1} parent=1 // pred_region
      _
    $region37: #{encoder_text_clip_forward.1} parent=1 // pred_fallthru
      _
    // Predicated region
    $region38: #{encoder_text_clip_forward.1} parent=1 // pred_check
      _
    $region39: #{encoder_text_clip_forward.1} parent=1 // pred_check_branch
      %43 = sbr.rel (0) target = $region41
    $region40: #{encoder_text_clip_forward.1} parent=1 // pred_region
      %44 = dma.done [#allocation4], 16
    $region41: #{encoder_text_clip_forward.1} parent=1 // pred_fallthru
      _
    %45 = sfence
    %v46 = vlaneseq
    %v47 = vshrl.u32 %v46, 7
    %v48 = vlaneseq
    %v49 = vand.u32 %v48, 127
    %vm50 = vcmp.le.s32.totalorder %v49, %v47
    %v51 = vld [vmem:[%s1] sm:$0xff]
    %v52 = vld [vmem:[%s1 + $0x8] sm:$0xff]
    %v53 = vld [vmem:[%s6] sm:$0xff]
    %vm54 = vcmask 261120
    %v55 = vsel %vm54, %v51, 0.0
    %56 = vadd.xlane.f32.xlu0 %v55
    %v57 = vpop.xlane.xlu0 %56
    %v58 = vsel %vm54, %v52, 0.0
    %59 = vadd.xlane.f32.xlu0 %v58
    %v60 = vpop.xlane.xlu0 %59
    %v61 = vrcp.pop 32.0
    %v62 = vmul.f32 %v57, %v61
    %v63 = vmul.f32 %v60, %v61
    %v64 = vsub.f32 %v51, %v62
    %v65 = vsub.f32 %v52, %v63
    %v66 = vmul.f32 %v64, %v64
    %v67 = vmul.f32 %v65, %v65
    %v68 = vsel %vm54, %v66, 0.0
    %69 = vadd.xlane.f32.xlu0 %v68
    %v70 = vpop.xlane.xlu0 %69
    %v71 = vsel %vm54, %v67, 0.0
    %72 = vadd.xlane.f32.xlu0 %v71
    %v73 = vpop.xlane.xlu0 %72
    %v74 = vmul.f32 %v70, %v61
    %v75 = vmul.f32 %v73, %v61
    %v76 = vadd.f32 %v74, 1e-05
    %v77 = vadd.f32 %v75, 1e-05
    %v78 = vrsqrt.pop %v76
    %v79 = vrsqrt.pop %v77
    %v80 = vmul.f32 %v64, %v78
    %v81 = vmul.f32 %v65, %v79
    %v82 = vlaneseq
    %v83 = vshrl.u32 %v82, 7
    %v84 = vsub.s32 0, %v83
    %v85 = vrot.slane %v53, %v84
    %v86 = vmul.f32 %v80, %v85
    %v87 = vmul.f32 %v81, %v85
    %v88 = vlaneseq
    %v89 = vshrl.u32 %v88, 7
    %v90 = vsub.s32 1, %v89
    %v91 = vrot.slane %v53, %v90
    %v92 = vadd.f32 %v86, %v91
    %v93 = vadd.f32 %v87, %v91
    %v94 = vld [vmem:[%s2] sm:$0xff]
    %v95 = vld [vmem:[%s2 + $0x8] sm:$0xff]
    %v96 = vld [vmem:[%s2 + $0x10] sm:$0xff]
    %v97 = vld [vmem:[%s2 + $0x18] sm:$0xff]
    %v98 = vlaneseq
    %v99 = vshrl.u32 %v98, 7
    %v100 = vsub.s32 2, %v99
    %v101 = vrot.slane %v53, %v100
    %v103 = vsel %vm54, %v92, 0
    %v106 = vsel %vm54, %v93, 0
    %108 = vmatprep.subr.mxu0 0.0
    %109 = vmatpush1.msra.mxu0 %v94
    %110 = vmatprep.subr.mxu0 0.0
    %111 = vmatpush1.msra.mxu0 %v95
    %112 = vmatprep.subr.mxu0 0.0
    %113 = vmatpush1.msra.mxu0 %v96
    %114 = vmatprep.subr.mxu0 0.0
    %115 = vmatpush1.msra.mxu0 %v97
    %116 = vmatprep.subr.mxu0 0.0
    %117 = vmatpush1.msra.mxu0 0.0
    %118 = vmatprep.subr.mxu0 0.0
    %119 = vmatpush1.msra.mxu0 0.0
    %120 = vmatprep.subr.mxu0 0.0
    %121 = vmatpush1.msra.mxu0 0.0
    %122 = vmatprep.subr.mxu0 0.0
    %123 = vmatpush1.msra.mxu0 0.0
    %124 = vmatprep.subr.mxu0 0.0
    %125 = vmatpush1.msra.mxu0 0.0
    %126 = vmatprep.subr.mxu0 0.0
    %127 = vmatpush1.msra.mxu0 0.0
    %128 = vmatprep.subr.mxu0 0.0
    %129 = vmatpush1.msra.mxu0 0.0
    %130 = vmatprep.subr.mxu0 0.0
    %131 = vmatpush1.msra.mxu0 0.0
    %132 = vmatprep.subr.mxu0 0.0
    %133 = vmatpush1.msra.mxu0 0.0
    %134 = vmatprep.subr.mxu0 0.0
    %135 = vmatpush1.msra.mxu0 0.0
    %136 = vmatprep.subr.mxu0 0.0
    %137 = vmatpush1.msra.mxu0 0.0
    %138 = vmatprep.subr.mxu0 0.0
    %139 = vmatpush1.msra.mxu0 0.0
    %140 = vmatprep.subr.mxu0 0.0
    %141 = vmatpush1.msra.mxu0 0.0
    %142 = vmatprep.subr.mxu0 0.0
    %143 = vmatpush1.msra.mxu0 0.0
    %144 = vmatprep.subr.mxu0 0.0
    %145 = vmatpush1.msra.mxu0 0.0
    %146 = vmatprep.subr.mxu0 0.0
    %147 = vmatpush1.msra.mxu0 0.0
    %148 = vmatprep.subr.mxu0 0.0
    %149 = vmatpush1.msra.mxu0 0.0
    %150 = vmatprep.subr.mxu0 0.0
    %151 = vmatpush1.msra.mxu0 0.0
    %152 = vmatprep.subr.mxu0 0.0
    %153 = vmatpush1.msra.mxu0 0.0
    %154 = vmatprep.subr.mxu0 0.0
    %155 = vmatpush1.msra.mxu0 0.0
    %156 = vmatprep.subr.mxu0 0.0
    %157 = vmatpush1.msra.mxu0 0.0
    %158 = vmatprep.subr.mxu0 0.0
    %159 = vmatpush1.msra.mxu0 0.0
    %160 = vmatprep.subr.mxu0 0.0
    %161 = vmatpush1.msra.mxu0 0.0
    %162 = vmatprep.subr.mxu0 0.0
    %163 = vmatpush1.msra.mxu0 0.0
    %164 = vmatprep.subr.mxu0 0.0
    %165 = vmatpush1.msra.mxu0 0.0
    %166 = vmatprep.subr.mxu0 0.0
    %167 = vmatpush1.msra.mxu0 0.0
    %168 = vmatprep.subr.mxu0 0.0
    %169 = vmatpush1.msra.mxu0 0.0
    %170 = vmatprep.subr.mxu0 0.0
    %171 = vmatpush1.msra.mxu0 0.0
    %172 = vmatprep.mubr.f32.mxu0 0.0
    %173 = vmatmul.mubr.f32.gmra.mrb[0].mxu0 %v103
    %v174 = vpop.f32.mrb[0].mxu0
    %v175 = vadd.f32 %v101, %v174
    %v176 = vpop.f32.mrb[0].mxu0
    %177 = vmatprep.mubr.f32.mxu0 0.0
    %178 = vmatmul.mubr.f32.gmra.mrb[0].mxu0 %v106
    %v179 = vpop.f32.mrb[0].mxu0
    %v180 = vadd.f32 %v101, %v179
    %v181 = vpop.f32.mrb[0].mxu0
    %182 = vdwg.mxu0
    %184 = vrot.lane.b32.xlu0 %v175, 96
    %v185 = vpop.permute.xlu0 %184
    %vm186 = vcmask 64512
    %v187 = vsel %vm186, %v175, 0
    %v189 = vsel %vm186, %v185, 0
    %191 = vmatprep.subr.mxu0 0.0
    %192 = vmatpush1.xpose.msra.mxu0 %v189
    %193 = vmatprep.subr.mxu0 0.0
    %194 = vmatpush1.xpose.msra.mxu0 0.0
    %195 = vmatprep.subr.mxu0 0.0
    %196 = vmatpush1.xpose.msra.mxu0 0.0
    %197 = vmatprep.subr.mxu0 0.0
    %198 = vmatpush1.xpose.msra.mxu0 0.0
    %199 = vmatprep.subr.mxu0 0.0
    %200 = vmatpush1.xpose.msra.mxu0 0.0
    %201 = vmatprep.subr.mxu0 0.0
    %202 = vmatpush1.xpose.msra.mxu0 0.0
    %203 = vmatprep.subr.mxu0 0.0
    %204 = vmatpush1.xpose.msra.mxu0 0.0
    %205 = vmatprep.subr.mxu0 0.0
    %206 = vmatpush1.xpose.msra.mxu0 0.0
    %207 = vmatprep.subr.mxu0 0.0
    %208 = vmatpush1.xpose.msra.mxu0 0.0
    %209 = vmatprep.subr.mxu0 0.0
    %210 = vmatpush1.xpose.msra.mxu0 0.0
    %211 = vmatprep.subr.mxu0 0.0
    %212 = vmatpush1.xpose.msra.mxu0 0.0
    %213 = vmatprep.subr.mxu0 0.0
    %214 = vmatpush1.xpose.msra.mxu0 0.0
    %215 = vmatprep.subr.mxu0 0.0
    %216 = vmatpush1.xpose.msra.mxu0 0.0
    %217 = vmatprep.subr.mxu0 0.0
    %218 = vmatpush1.xpose.msra.mxu0 0.0
    %219 = vmatprep.subr.mxu0 0.0
    %220 = vmatpush1.xpose.msra.mxu0 0.0
    %221 = vmatprep.subr.mxu0 0.0
    %222 = vmatpush1.xpose.msra.mxu0 0.0
    %223 = vmatprep.subr.mxu0 0.0
    %224 = vmatpush1.xpose.msra.mxu0 0.0
    %225 = vmatprep.subr.mxu0 0.0
    %226 = vmatpush1.xpose.msra.mxu0 0.0
    %227 = vmatprep.subr.mxu0 0.0
    %228 = vmatpush1.xpose.msra.mxu0 0.0
    %229 = vmatprep.subr.mxu0 0.0
    %230 = vmatpush1.xpose.msra.mxu0 0.0
    %231 = vmatprep.subr.mxu0 0.0
    %232 = vmatpush1.xpose.msra.mxu0 0.0
    %233 = vmatprep.subr.mxu0 0.0
    %234 = vmatpush1.xpose.msra.mxu0 0.0
    %235 = vmatprep.subr.mxu0 0.0
    %236 = vmatpush1.xpose.msra.mxu0 0.0
    %237 = vmatprep.subr.mxu0 0.0
    %238 = vmatpush1.xpose.msra.mxu0 0.0
    %239 = vmatprep.subr.mxu0 0.0
    %240 = vmatpush1.xpose.msra.mxu0 0.0
    %241 = vmatprep.subr.mxu0 0.0
    %242 = vmatpush1.xpose.msra.mxu0 0.0
    %243 = vmatprep.subr.mxu0 0.0
    %244 = vmatpush1.xpose.msra.mxu0 0.0
    %245 = vmatprep.subr.mxu0 0.0
    %246 = vmatpush1.xpose.msra.mxu0 0.0
    %247 = vmatprep.subr.mxu0 0.0
    %248 = vmatpush1.xpose.msra.mxu0 0.0
    %249 = vmatprep.subr.mxu0 0.0
    %250 = vmatpush1.xpose.msra.mxu0 0.0
    %251 = vmatprep.subr.mxu0 0.0
    %252 = vmatpush1.xpose.msra.mxu0 0.0
    %253 = vmatprep.subr.mxu0 0.0
    %254 = vmatpush1.xpose.msra.mxu0 0.0
    %255 = vmatprep.mubr.f32.mxu0 0.0
    %256 = vmatmul.mubr.f32.gmra.mrb[0].mxu0 %v187
    %v257 = vpop.f32.mrb[0].mxu0
    %v258 = vadd.f32 0.0, %v257
    %v259 = vpop.f32.mrb[0].mxu0
    %260 = vdwg.mxu0
    %262 = vrot.lane.b32.xlu0 %v180, 96
    %v263 = vpop.permute.xlu0 %262
    %v264 = vsel %vm186, %v180, 0
    %v266 = vsel %vm186, %v263, 0
    %268 = vmatprep.subr.mxu0 0.0
    %269 = vmatpush1.xpose.msra.mxu0 %v266
    %270 = vmatprep.subr.mxu0 0.0
    %271 = vmatpush1.xpose.msra.mxu0 0.0
    %272 = vmatprep.subr.mxu0 0.0
    %273 = vmatpush1.xpose.msra.mxu0 0.0
    %274 = vmatprep.subr.mxu0 0.0
    %275 = vmatpush1.xpose.msra.mxu0 0.0
    %276 = vmatprep.subr.mxu0 0.0
    %277 = vmatpush1.xpose.msra.mxu0 0.0
    %278 = vmatprep.subr.mxu0 0.0
    %279 = vmatpush1.xpose.msra.mxu0 0.0
    %280 = vmatprep.subr.mxu0 0.0
    %281 = vmatpush1.xpose.msra.mxu0 0.0
    %282 = vmatprep.subr.mxu0 0.0
    %283 = vmatpush1.xpose.msra.mxu0 0.0
    %284 = vmatprep.subr.mxu0 0.0
    %285 = vmatpush1.xpose.msra.mxu0 0.0
    %286 = vmatprep.subr.mxu0 0.0
    %287 = vmatpush1.xpose.msra.mxu0 0.0
    %288 = vmatprep.subr.mxu0 0.0
    %289 = vmatpush1.xpose.msra.mxu0 0.0
    %290 = vmatprep.subr.mxu0 0.0
    %291 = vmatpush1.xpose.msra.mxu0 0.0
    %292 = vmatprep.subr.mxu0 0.0
    %293 = vmatpush1.xpose.msra.mxu0 0.0
    %294 = vmatprep.subr.mxu0 0.0
    %295 = vmatpush1.xpose.msra.mxu0 0.0
    %296 = vmatprep.subr.mxu0 0.0
    %297 = vmatpush1.xpose.msra.mxu0 0.0
    %298 = vmatprep.subr.mxu0 0.0
    %299 = vmatpush1.xpose.msra.mxu0 0.0
    %300 = vmatprep.subr.mxu0 0.0
    %301 = vmatpush1.xpose.msra.mxu0 0.0
    %302 = vmatprep.subr.mxu0 0.0
    %303 = vmatpush1.xpose.msra.mxu0 0.0
    %304 = vmatprep.subr.mxu0 0.0
    %305 = vmatpush1.xpose.msra.mxu0 0.0
    %306 = vmatprep.subr.mxu0 0.0
    %307 = vmatpush1.xpose.msra.mxu0 0.0
    %308 = vmatprep.subr.mxu0 0.0
    %309 = vmatpush1.xpose.msra.mxu0 0.0
    %310 = vmatprep.subr.mxu0 0.0
    %311 = vmatpush1.xpose.msra.mxu0 0.0
    %312 = vmatprep.subr.mxu0 0.0
    %313 = vmatpush1.xpose.msra.mxu0 0.0
    %314 = vmatprep.subr.mxu0 0.0
    %315 = vmatpush1.xpose.msra.mxu0 0.0
    %316 = vmatprep.subr.mxu0 0.0
    %317 = vmatpush1.xpose.msra.mxu0 0.0
    %318 = vmatprep.subr.mxu0 0.0
    %319 = vmatpush1.xpose.msra.mxu0 0.0
    %320 = vmatprep.subr.mxu0 0.0
    %321 = vmatpush1.xpose.msra.mxu0 0.0
    %322 = vmatprep.subr.mxu0 0.0
    %323 = vmatpush1.xpose.msra.mxu0 0.0
    %324 = vmatprep.subr.mxu0 0.0
    %325 = vmatpush1.xpose.msra.mxu0 0.0
    %326 = vmatprep.subr.mxu0 0.0
    %327 = vmatpush1.xpose.msra.mxu0 0.0
    %328 = vmatprep.subr.mxu0 0.0
    %329 = vmatpush1.xpose.msra.mxu0 0.0
    %330 = vmatprep.subr.mxu0 0.0
    %331 = vmatpush1.xpose.msra.mxu0 0.0
    %332 = vmatprep.mubr.f32.mxu0 0.0
    %333 = vmatmul.mubr.f32.gmra.mrb[0].mxu0 %v264
    %v334 = vpop.f32.mrb[0].mxu0
    %v335 = vadd.f32 0.0, %v334
    %v336 = vpop.f32.mrb[0].mxu0
    %337 = vdwg.mxu0
    %v338 = vmul.f32 %v258, 0.35355338
    %v339 = vmul.f32 %v335, 0.35355338
    %v340 = vsel %vm50, 1, 0
    %vm341 = vcmp.eq.s32.totalorder %v340, 1
    %v342 = vsel %vm341, %v338, -1e+09
    %v343 = vsel %vm341, %v339, -1e+09
    %v344 = vsel %vm186, %v342, -inf
    %345 = vmax.xlane.f32.xlu0 %v344
    %v346 = vpop.xlane.xlu0 %345
    %v347 = vsel %vm186, %v343, -inf
    %348 = vmax.xlane.f32.xlu0 %v347
    %v349 = vpop.xlane.xlu0 %348
    %v350 = vsub.f32 %v342, %v346
    %v351 = vsub.f32 %v343, %v349
    %v352 = vmul.f32 %v350, 1.442695
    %v353 = vpow.pop %v352
    %v354 = vmul.f32 %v351, 1.442695
    %v355 = vpow.pop %v354
    %v356 = vsel %vm186, %v353, 0.0
    %357 = vadd.xlane.f32.xlu0 %v356
    %v358 = vpop.xlane.xlu0 %357
    %v359 = vsel %vm186, %v355, 0.0
    %360 = vadd.xlane.f32.xlu0 %v359
    %v361 = vpop.xlane.xlu0 %360
    %v362 = vrcp.pop %v358
    %v363 = vrcp.pop %v361
    %v364 = vmul.f32 %v353, %v362
    %v365 = vmul.f32 %v355, %v363
    %366 = vrot.lane.b32.xlu0 %v175, 64
    %v367 = vpop.permute.xlu0 %366
    %v370 = vsel %vm186, %v364, 0
    %372 = vmatprep.subr.mxu0 0.0
    %373 = vmatpush1.msra.mxu0 %v367
    %374 = vmatprep.subr.mxu0 0.0
    %375 = vmatpush1.msra.mxu0 0.0
    %376 = vmatprep.subr.mxu0 0.0
    %377 = vmatpush1.msra.mxu0 0.0
    %378 = vmatprep.subr.mxu0 0.0
    %379 = vmatpush1.msra.mxu0 0.0
    %380 = vmatprep.subr.mxu0 0.0
    %381 = vmatpush1.msra.mxu0 0.0
    %382 = vmatprep.subr.mxu0 0.0
    %383 = vmatpush1.msra.mxu0 0.0
    %384 = vmatprep.subr.mxu0 0.0
    %385 = vmatpush1.msra.mxu0 0.0
    %386 = vmatprep.subr.mxu0 0.0
    %387 = vmatpush1.msra.mxu0 0.0
    %388 = vmatprep.subr.mxu0 0.0
    %389 = vmatpush1.msra.mxu0 0.0
    %390 = vmatprep.subr.mxu0 0.0
    %391 = vmatpush1.msra.mxu0 0.0
    %392 = vmatprep.subr.mxu0 0.0
    %393 = vmatpush1.msra.mxu0 0.0
    %394 = vmatprep.subr.mxu0 0.0
    %395 = vmatpush1.msra.mxu0 0.0
    %396 = vmatprep.subr.mxu0 0.0
    %397 = vmatpush1.msra.mxu0 0.0
    %398 = vmatprep.subr.mxu0 0.0
    %399 = vmatpush1.msra.mxu0 0.0
    %400 = vmatprep.subr.mxu0 0.0
    %401 = vmatpush1.msra.mxu0 0.0
    %402 = vmatprep.subr.mxu0 0.0
    %403 = vmatpush1.msra.mxu0 0.0
    %404 = vmatprep.subr.mxu0 0.0
    %405 = vmatpush1.msra.mxu0 0.0
    %406 = vmatprep.subr.mxu0 0.0
    %407 = vmatpush1.msra.mxu0 0.0
    %408 = vmatprep.subr.mxu0 0.0
    %409 = vmatpush1.msra.mxu0 0.0
    %410 = vmatprep.subr.mxu0 0.0
    %411 = vmatpush1.msra.mxu0 0.0
    %412 = vmatprep.subr.mxu0 0.0
    %413 = vmatpush1.msra.mxu0 0.0
    %414 = vmatprep.subr.mxu0 0.0
    %415 = vmatpush1.msra.mxu0 0.0
    %416 = vmatprep.subr.mxu0 0.0
    %417 = vmatpush1.msra.mxu0 0.0
    %418 = vmatprep.subr.mxu0 0.0
    %419 = vmatpush1.msra.mxu0 0.0
    %420 = vmatprep.subr.mxu0 0.0
    %421 = vmatpush1.msra.mxu0 0.0
    %422 = vmatprep.subr.mxu0 0.0
    %423 = vmatpush1.msra.mxu0 0.0
    %424 = vmatprep.subr.mxu0 0.0
    %425 = vmatpush1.msra.mxu0 0.0
    %426 = vmatprep.subr.mxu0 0.0
    %427 = vmatpush1.msra.mxu0 0.0
    %428 = vmatprep.subr.mxu0 0.0
    %429 = vmatpush1.msra.mxu0 0.0
    %430 = vmatprep.subr.mxu0 0.0
    %431 = vmatpush1.msra.mxu0 0.0
    %432 = vmatprep.subr.mxu0 0.0
    %433 = vmatpush1.msra.mxu0 0.0
    %434 = vmatprep.subr.mxu0 0.0
    %435 = vmatpush1.msra.mxu0 0.0
    %436 = vmatprep.mubr.f32.mxu0 0.0
    %437 = vmatmul.mubr.f32.gmra.mrb[0].mxu0 %v370
    %v438 = vpop.f32.mrb[0].mxu0
    %v439 = vadd.f32 0.0, %v438
    %v440 = vpop.f32.mrb[0].mxu0
    %441 = vdwg.mxu0
    %442 = vrot.lane.b32.xlu0 %v180, 64
    %v443 = vpop.permute.xlu0 %442
    %v446 = vsel %vm186, %v365, 0
    %448 = vmatprep.subr.mxu0 0.0
    %449 = vmatpush1.msra.mxu0 %v443
    %450 = vmatprep.subr.mxu0 0.0
    %451 = vmatpush1.msra.mxu0 0.0
    %452 = vmatprep.subr.mxu0 0.0
    %453 = vmatpush1.msra.mxu0 0.0
    %454 = vmatprep.subr.mxu0 0.0
    %455 = vmatpush1.msra.mxu0 0.0
    %456 = vmatprep.subr.mxu0 0.0
    %457 = vmatpush1.msra.mxu0 0.0
    %458 = vmatprep.subr.mxu0 0.0
    %459 = vmatpush1.msra.mxu0 0.0
    %460 = vmatprep.subr.mxu0 0.0
    %461 = vmatpush1.msra.mxu0 0.0
    %462 = vmatprep.subr.mxu0 0.0
    %463 = vmatpush1.msra.mxu0 0.0
    %464 = vmatprep.subr.mxu0 0.0
    %465 = vmatpush1.msra.mxu0 0.0
    %466 = vmatprep.subr.mxu0 0.0
    %467 = vmatpush1.msra.mxu0 0.0
    %468 = vmatprep.subr.mxu0 0.0
    %469 = vmatpush1.msra.mxu0 0.0
    %470 = vmatprep.subr.mxu0 0.0
    %471 = vmatpush1.msra.mxu0 0.0
    %472 = vmatprep.subr.mxu0 0.0
    %473 = vmatpush1.msra.mxu0 0.0
    %474 = vmatprep.subr.mxu0 0.0
    %475 = vmatpush1.msra.mxu0 0.0
    %476 = vmatprep.subr.mxu0 0.0
    %477 = vmatpush1.msra.mxu0 0.0
    %478 = vmatprep.subr.mxu0 0.0
    %479 = vmatpush1.msra.mxu0 0.0
    %480 = vmatprep.subr.mxu0 0.0
    %481 = vmatpush1.msra.mxu0 0.0
    %482 = vmatprep.subr.mxu0 0.0
    %483 = vmatpush1.msra.mxu0 0.0
    %484 = vmatprep.subr.mxu0 0.0
    %485 = vmatpush1.msra.mxu0 0.0
    %486 = vmatprep.subr.mxu0 0.0
    %487 = vmatpush1.msra.mxu0 0.0
    %488 = vmatprep.subr.mxu0 0.0
    %489 = vmatpush1.msra.mxu0 0.0
    %490 = vmatprep.subr.mxu0 0.0
    %491 = vmatpush1.msra.mxu0 0.0
    %492 = vmatprep.subr.mxu0 0.0
    %493 = vmatpush1.msra.mxu0 0.0
    %494 = vmatprep.subr.mxu0 0.0
    %495 = vmatpush1.msra.mxu0 0.0
    %496 = vmatprep.subr.mxu0 0.0
    %497 = vmatpush1.msra.mxu0 0.0
    %498 = vmatprep.subr.mxu0 0.0
    %499 = vmatpush1.msra.mxu0 0.0
    %500 = vmatprep.subr.mxu0 0.0
    %501 = vmatpush1.msra.mxu0 0.0
    %502 = vmatprep.subr.mxu0 0.0
    %503 = vmatpush1.msra.mxu0 0.0
    %504 = vmatprep.subr.mxu0 0.0
    %505 = vmatpush1.msra.mxu0 0.0
    %506 = vmatprep.subr.mxu0 0.0
    %507 = vmatpush1.msra.mxu0 0.0
    %508 = vmatprep.subr.mxu0 0.0
    %509 = vmatpush1.msra.mxu0 0.0
    %510 = vmatprep.subr.mxu0 0.0
    %511 = vmatpush1.msra.mxu0 0.0
    %512 = vmatprep.mubr.f32.mxu0 0.0
    %513 = vmatmul.mubr.f32.gmra.mrb[0].mxu0 %v446
    %v514 = vpop.f32.mrb[0].mxu0
    %v515 = vadd.f32 0.0, %v514
    %v516 = vpop.f32.mrb[0].mxu0
    %517 = vdwg.mxu0
    %518 = vrot.lane.b32.xlu0 %v175, 120
    %v519 = vpop.permute.xlu0 %518
    %520 = vrot.lane.b32.xlu0 %v175, 88
    %v521 = vpop.permute.xlu0 %520
    %v522 = vsel %vm186, %v519, 0
    %v524 = vsel %vm186, %v521, 0
    %526 = vmatprep.subr.mxu0 0.0
    %527 = vmatpush1.xpose.msra.mxu0 %v524
    %528 = vmatprep.subr.mxu0 0.0
    %529 = vmatpush1.xpose.msra.mxu0 0.0
    %530 = vmatprep.subr.mxu0 0.0
    %531 = vmatpush1.xpose.msra.mxu0 0.0
    %532 = vmatprep.subr.mxu0 0.0
    %533 = vmatpush1.xpose.msra.mxu0 0.0
    %534 = vmatprep.subr.mxu0 0.0
    %535 = vmatpush1.xpose.msra.mxu0 0.0
    %536 = vmatprep.subr.mxu0 0.0
    %537 = vmatpush1.xpose.msra.mxu0 0.0
    %538 = vmatprep.subr.mxu0 0.0
    %539 = vmatpush1.xpose.msra.mxu0 0.0
    %540 = vmatprep.subr.mxu0 0.0
    %541 = vmatpush1.xpose.msra.mxu0 0.0
    %542 = vmatprep.subr.mxu0 0.0
    %543 = vmatpush1.xpose.msra.mxu0 0.0
    %544 = vmatprep.subr.mxu0 0.0
    %545 = vmatpush1.xpose.msra.mxu0 0.0
    %546 = vmatprep.subr.mxu0 0.0
    %547 = vmatpush1.xpose.msra.mxu0 0.0
    %548 = vmatprep.subr.mxu0 0.0
    %549 = vmatpush1.xpose.msra.mxu0 0.0
    %550 = vmatprep.subr.mxu0 0.0
    %551 = vmatpush1.xpose.msra.mxu0 0.0
    %552 = vmatprep.subr.mxu0 0.0
    %553 = vmatpush1.xpose.msra.mxu0 0.0
    %554 = vmatprep.subr.mxu0 0.0
    %555 = vmatpush1.xpose.msra.mxu0 0.0
    %556 = vmatprep.subr.mxu0 0.0
    %557 = vmatpush1.xpose.msra.mxu0 0.0
    %558 = vmatprep.subr.mxu0 0.0
    %559 = vmatpush1.xpose.msra.mxu0 0.0
    %560 = vmatprep.subr.mxu0 0.0
    %561 = vmatpush1.xpose.msra.mxu0 0.0
    %562 = vmatprep.subr.mxu0 0.0
    %563 = vmatpush1.xpose.msra.mxu0 0.0
    %564 = vmatprep.subr.mxu0 0.0
    %565 = vmatpush1.xpose.msra.mxu0 0.0
    %566 = vmatprep.subr.mxu0 0.0
    %567 = vmatpush1.xpose.msra.mxu0 0.0
    %568 = vmatprep.subr.mxu0 0.0
    %569 = vmatpush1.xpose.msra.mxu0 0.0
    %570 = vmatprep.subr.mxu0 0.0
    %571 = vmatpush1.xpose.msra.mxu0 0.0
    %572 = vmatprep.subr.mxu0 0.0
    %573 = vmatpush1.xpose.msra.mxu0 0.0
    %574 = vmatprep.subr.mxu0 0.0
    %575 = vmatpush1.xpose.msra.mxu0 0.0
    %576 = vmatprep.subr.mxu0 0.0
    %577 = vmatpush1.xpose.msra.mxu0 0.0
    %578 = vmatprep.subr.mxu0 0.0
    %579 = vmatpush1.xpose.msra.mxu0 0.0
    %580 = vmatprep.subr.mxu0 0.0
    %581 = vmatpush1.xpose.msra.mxu0 0.0
    %582 = vmatprep.subr.mxu0 0.0
    %583 = vmatpush1.xpose.msra.mxu0 0.0
    %584 = vmatprep.subr.mxu0 0.0
    %585 = vmatpush1.xpose.msra.mxu0 0.0
    %586 = vmatprep.subr.mxu0 0.0
    %587 = vmatpush1.xpose.msra.mxu0 0.0
    %588 = vmatprep.subr.mxu0 0.0
    %589 = vmatpush1.xpose.msra.mxu0 0.0
    %590 = vmatprep.mubr.f32.mxu0 0.0
    %591 = vmatmul.mubr.f32.gmra.mrb[0].mxu0 %v522
    %v592 = vpop.f32.mrb[0].mxu0
    %v593 = vadd.f32 0.0, %v592
    %v594 = vpop.f32.mrb[0].mxu0
    %595 = vdwg.mxu0
    %596 = vrot.lane.b32.xlu0 %v180, 120
    %v597 = vpop.permute.xlu0 %596
    %598 = vrot.lane.b32.xlu0 %v180, 88
    %v599 = vpop.permute.xlu0 %598
    %v600 = vsel %vm186, %v597, 0
    %v602 = vsel %vm186, %v599, 0
    %604 = vmatprep.subr.mxu0 0.0
    %605 = vmatpush1.xpose.msra.mxu0 %v602
    %606 = vmatprep.subr.mxu0 0.0
    %607 = vmatpush1.xpose.msra.mxu0 0.0
    %608 = vmatprep.subr.mxu0 0.0
    %609 = vmatpush1.xpose.msra.mxu0 0.0
    %610 = vmatprep.subr.mxu0 0.0
    %611 = vmatpush1.xpose.msra.mxu0 0.0
    %612 = vmatprep.subr.mxu0 0.0
    %613 = vmatpush1.xpose.msra.mxu0 0.0
    %614 = vmatprep.subr.mxu0 0.0
    %615 = vmatpush1.xpose.msra.mxu0 0.0
    %616 = vmatprep.subr.mxu0 0.0
    %617 = vmatpush1.xpose.msra.mxu0 0.0
    %618 = vmatprep.subr.mxu0 0.0
    %619 = vmatpush1.xpose.msra.mxu0 0.0
    %620 = vmatprep.subr.mxu0 0.0
    %621 = vmatpush1.xpose.msra.mxu0 0.0
    %622 = vmatprep.subr.mxu0 0.0
    %623 = vmatpush1.xpose.msra.mxu0 0.0
    %624 = vmatprep.subr.mxu0 0.0
    %625 = vmatpush1.xpose.msra.mxu0 0.0
    %626 = vmatprep.subr.mxu0 0.0
    %627 = vmatpush1.xpose.msra.mxu0 0.0
    %628 = vmatprep.subr.mxu0 0.0
    %629 = vmatpush1.xpose.msra.mxu0 0.0
    %630 = vmatprep.subr.mxu0 0.0
    %631 = vmatpush1.xpose.msra.mxu0 0.0
    %632 = vmatprep.subr.mxu0 0.0
    %633 = vmatpush1.xpose.msra.mxu0 0.0
    %634 = vmatprep.subr.mxu0 0.0
    %635 = vmatpush1.xpose.msra.mxu0 0.0
    %636 = vmatprep.subr.mxu0 0.0
    %637 = vmatpush1.xpose.msra.mxu0 0.0
    %638 = vmatprep.subr.mxu0 0.0
    %639 = vmatpush1.xpose.msra.mxu0 0.0
    %640 = vmatprep.subr.mxu0 0.0
    %641 = vmatpush1.xpose.msra.mxu0 0.0
    %642 = vmatprep.subr.mxu0 0.0
    %643 = vmatpush1.xpose.msra.mxu0 0.0
    %644 = vmatprep.subr.mxu0 0.0
    %645 = vmatpush1.xpose.msra.mxu0 0.0
    %646 = vmatprep.subr.mxu0 0.0
    %647 = vmatpush1.xpose.msra.mxu0 0.0
    %648 = vmatprep.subr.mxu0 0.0
    %649 = vmatpush1.xpose.msra.mxu0 0.0
    %650 = vmatprep.subr.mxu0 0.0
    %651 = vmatpush1.xpose.msra.mxu0 0.0
    %652 = vmatprep.subr.mxu0 0.0
    %653 = vmatpush1.xpose.msra.mxu0 0.0
    %654 = vmatprep.subr.mxu0 0.0
    %655 = vmatpush1.xpose.msra.mxu0 0.0
    %656 = vmatprep.subr.mxu0 0.0
    %657 = vmatpush1.xpose.msra.mxu0 0.0
    %658 = vmatprep.subr.mxu0 0.0
    %659 = vmatpush1.xpose.msra.mxu0 0.0
    %660 = vmatprep.subr.mxu0 0.0
    %661 = vmatpush1.xpose.msra.mxu0 0.0
    %662 = vmatprep.subr.mxu0 0.0
    %663 = vmatpush1.xpose.msra.mxu0 0.0
    %664 = vmatprep.subr.mxu0 0.0
    %665 = vmatpush1.xpose.msra.mxu0 0.0
    %666 = vmatprep.subr.mxu0 0.0
    %667 = vmatpush1.xpose.msra.mxu0 0.0
    %668 = vmatprep.mubr.f32.mxu0 0.0
    %669 = vmatmul.mubr.f32.gmra.mrb[0].mxu0 %v600
    %v670 = vpop.f32.mrb[0].mxu0
    %v671 = vadd.f32 0.0, %v670
    %v672 = vpop.f32.mrb[0].mxu0
    %673 = vdwg.mxu0
    %v674 = vmul.f32 %v593, 0.35355338
    %v675 = vmul.f32 %v671, 0.35355338
    %v676 = vsel %vm341, %v674, -1e+09
    %v677 = vsel %vm341, %v675, -1e+09
    %v678 = vsel %vm186, %v676, -inf
    %679 = vmax.xlane.f32.xlu0 %v678
    %v680 = vpop.xlane.xlu0 %679
    %v681 = vsel %vm186, %v677, -inf
    %682 = vmax.xlane.f32.xlu0 %v681
    %v683 = vpop.xlane.xlu0 %682
    %v684 = vsub.f32 %v676, %v680
    %v685 = vsub.f32 %v677, %v683
    %v686 = vmul.f32 %v684, 1.442695
    %v687 = vpow.pop %v686
    %v688 = vmul.f32 %v685, 1.442695
    %v689 = vpow.pop %v688
    %v690 = vsel %vm186, %v687, 0.0
    %691 = vadd.xlane.f32.xlu0 %v690
    %v692 = vpop.xlane.xlu0 %691
    %v693 = vsel %vm186, %v689, 0.0
    %694 = vadd.xlane.f32.xlu0 %v693
    %v695 = vpop.xlane.xlu0 %694
    %v696 = vrcp.pop %v692
    %v697 = vrcp.pop %v695
    %v698 = vmul.f32 %v687, %v696
    %v699 = vmul.f32 %v689, %v697
    %700 = vrot.lane.b32.xlu0 %v175, 56
    %v701 = vpop.permute.xlu0 %700
    %v704 = vsel %vm186, %v698, 0
    %706 = vmatprep.subr.mxu0 0.0
    %707 = vmatpush1.msra.mxu0 %v701
    %708 = vmatprep.subr.mxu0 0.0
    %709 = vmatpush1.msra.mxu0 0.0
    %710 = vmatprep.subr.mxu0 0.0
    %711 = vmatpush1.msra.mxu0 0.0
    %712 = vmatprep.subr.mxu0 0.0
    %713 = vmatpush1.msra.mxu0 0.0
    %714 = vmatprep.subr.mxu0 0.0
    %715 = vmatpush1.msra.mxu0 0.0
    %716 = vmatprep.subr.mxu0 0.0
    %717 = vmatpush1.msra.mxu0 0.0
    %718 = vmatprep.subr.mxu0 0.0
    %719 = vmatpush1.msra.mxu0 0.0
    %720 = vmatprep.subr.mxu0 0.0
    %721 = vmatpush1.msra.mxu0 0.0
    %722 = vmatprep.subr.mxu0 0.0
    %723 = vmatpush1.msra.mxu0 0.0
    %724 = vmatprep.subr.mxu0 0.0
    %725 = vmatpush1.msra.mxu0 0.0
    %726 = vmatprep.subr.mxu0 0.0
    %727 = vmatpush1.msra.mxu0 0.0
    %728 = vmatprep.subr.mxu0 0.0
    %729 = vmatpush1.msra.mxu0 0.0
    %730 = vmatprep.subr.mxu0 0.0
    %731 = vmatpush1.msra.mxu0 0.0
    %732 = vmatprep.subr.mxu0 0.0
    %733 = vmatpush1.msra.mxu0 0.0
    %734 = vmatprep.subr.mxu0 0.0
    %735 = vmatpush1.msra.mxu0 0.0
    %736 = vmatprep.subr.mxu0 0.0
    %737 = vmatpush1.msra.mxu0 0.0
    %738 = vmatprep.subr.mxu0 0.0
    %739 = vmatpush1.msra.mxu0 0.0
    %740 = vmatprep.subr.mxu0 0.0
    %741 = vmatpush1.msra.mxu0 0.0
    %742 = vmatprep.subr.mxu0 0.0
    %743 = vmatpush1.msra.mxu0 0.0
    %744 = vmatprep.subr.mxu0 0.0
    %745 = vmatpush1.msra.mxu0 0.0
    %746 = vmatprep.subr.mxu0 0.0
    %747 = vmatpush1.msra.mxu0 0.0
    %748 = vmatprep.subr.mxu0 0.0
    %749 = vmatpush1.msra.mxu0 0.0
    %750 = vmatprep.subr.mxu0 0.0
    %751 = vmatpush1.msra.mxu0 0.0
    %752 = vmatprep.subr.mxu0 0.0
    %753 = vmatpush1.msra.mxu0 0.0
    %754 = vmatprep.subr.mxu0 0.0
    %755 = vmatpush1.msra.mxu0 0.0
    %756 = vmatprep.subr.mxu0 0.0
    %757 = vmatpush1.msra.mxu0 0.0
    %758 = vmatprep.subr.mxu0 0.0
    %759 = vmatpush1.msra.mxu0 0.0
    %760 = vmatprep.subr.mxu0 0.0
    %761 = vmatpush1.msra.mxu0 0.0
    %762 = vmatprep.subr.mxu0 0.0
    %763 = vmatpush1.msra.mxu0 0.0
    %764 = vmatprep.subr.mxu0 0.0
    %765 = vmatpush1.msra.mxu0 0.0
    %766 = vmatprep.subr.mxu0 0.0
    %767 = vmatpush1.msra.mxu0 0.0
    %768 = vmatprep.subr.mxu0 0.0
    %769 = vmatpush1.msra.mxu0 0.0
    %770 = vmatprep.mubr.f32.mxu0 0.0
    %771 = vmatmul.mubr.f32.gmra.mrb[0].mxu0 %v704
    %v772 = vpop.f32.mrb[0].mxu0
    %v773 = vadd.f32 0.0, %v772
    %v774 = vpop.f32.mrb[0].mxu0
    %775 = vdwg.mxu0
    %776 = vrot.lane.b32.xlu0 %v180, 56
    %v777 = vpop.permute.xlu0 %776
    %v780 = vsel %vm186, %v699, 0
    %782 = vmatprep.subr.mxu0 0.0
    %783 = vmatpush1.msra.mxu0 %v777
    %784 = vmatprep.subr.mxu0 0.0
    %785 = vmatpush1.msra.mxu0 0.0
    %786 = vmatprep.subr.mxu0 0.0
    %787 = vmatpush1.msra.mxu0 0.0
    %788 = vmatprep.subr.mxu0 0.0
    %789 = vmatpush1.msra.mxu0 0.0
    %790 = vmatprep.subr.mxu0 0.0
    %791 = vmatpush1.msra.mxu0 0.0
    %792 = vmatprep.subr.mxu0 0.0
    %793 = vmatpush1.msra.mxu0 0.0
    %794 = vmatprep.subr.mxu0 0.0
    %795 = vmatpush1.msra.mxu0 0.0
    %796 = vmatprep.subr.mxu0 0.0
    %797 = vmatpush1.msra.mxu0 0.0
    %798 = vmatprep.subr.mxu0 0.0
    %799 = vmatpush1.msra.mxu0 0.0
    %800 = vmatprep.subr.mxu0 0.0
    %801 = vmatpush1.msra.mxu0 0.0
    %802 = vmatprep.subr.mxu0 0.0
    %803 = vmatpush1.msra.mxu0 0.0
    %804 = vmatprep.subr.mxu0 0.0
    %805 = vmatpush1.msra.mxu0 0.0
    %806 = vmatprep.subr.mxu0 0.0
    %807 = vmatpush1.msra.mxu0 0.0
    %808 = vmatprep.subr.mxu0 0.0
    %809 = vmatpush1.msra.mxu0 0.0
    %810 = vmatprep.subr.mxu0 0.0
    %811 = vmatpush1.msra.mxu0 0.0
    %812 = vmatprep.subr.mxu0 0.0
    %813 = vmatpush1.msra.mxu0 0.0
    %814 = vmatprep.subr.mxu0 0.0
    %815 = vmatpush1.msra.mxu0 0.0
    %816 = vmatprep.subr.mxu0 0.0
    %817 = vmatpush1.msra.mxu0 0.0
    %818 = vmatprep.subr.mxu0 0.0
    %819 = vmatpush1.msra.mxu0 0.0
    %820 = vmatprep.subr.mxu0 0.0
    %821 = vmatpush1.msra.mxu0 0.0
    %822 = vmatprep.subr.mxu0 0.0
    %823 = vmatpush1.msra.mxu0 0.0
    %824 = vmatprep.subr.mxu0 0.0
    %825 = vmatpush1.msra.mxu0 0.0
    %826 = vmatprep.subr.mxu0 0.0
    %827 = vmatpush1.msra.mxu0 0.0
    %828 = vmatprep.subr.mxu0 0.0
    %829 = vmatpush1.msra.mxu0 0.0
    %830 = vmatprep.subr.mxu0 0.0
    %831 = vmatpush1.msra.mxu0 0.0
    %832 = vmatprep.subr.mxu0 0.0
    %833 = vmatpush1.msra.mxu0 0.0
    %834 = vmatprep.subr.mxu0 0.0
    %835 = vmatpush1.msra.mxu0 0.0
    %836 = vmatprep.subr.mxu0 0.0
    %837 = vmatpush1.msra.mxu0 0.0
    %838 = vmatprep.subr.mxu0 0.0
    %839 = vmatpush1.msra.mxu0 0.0
    %840 = vmatprep.subr.mxu0 0.0
    %841 = vmatpush1.msra.mxu0 0.0
    %842 = vmatprep.subr.mxu0 0.0
    %843 = vmatpush1.msra.mxu0 0.0
    %844 = vmatprep.subr.mxu0 0.0
    %845 = vmatpush1.msra.mxu0 0.0
    %846 = vmatprep.mubr.f32.mxu0 0.0
    %847 = vmatmul.mubr.f32.gmra.mrb[0].mxu0 %v780
    %v848 = vpop.f32.mrb[0].mxu0
    %v849 = vadd.f32 0.0, %v848
    %v850 = vpop.f32.mrb[0].mxu0
    %851 = vdwg.mxu0
    %852 = vrot.lane.b32.xlu0 %v175, 112
    %v853 = vpop.permute.xlu0 %852
    %854 = vrot.lane.b32.xlu0 %v175, 80
    %v855 = vpop.permute.xlu0 %854
    %v856 = vsel %vm186, %v853, 0
    %v858 = vsel %vm186, %v855, 0
    %860 = vmatprep.subr.mxu0 0.0
    %861 = vmatpush1.xpose.msra.mxu0 %v858
    %862 = vmatprep.subr.mxu0 0.0
    %863 = vmatpush1.xpose.msra.mxu0 0.0
    %864 = vmatprep.subr.mxu0 0.0
    %865 = vmatpush1.xpose.msra.mxu0 0.0
    %866 = vmatprep.subr.mxu0 0.0
    %867 = vmatpush1.xpose.msra.mxu0 0.0
    %868 = vmatprep.subr.mxu0 0.0
    %869 = vmatpush1.xpose.msra.mxu0 0.0
    %870 = vmatprep.subr.mxu0 0.0
    %871 = vmatpush1.xpose.msra.mxu0 0.0
    %872 = vmatprep.subr.mxu0 0.0
    %873 = vmatpush1.xpose.msra.mxu0 0.0
    %874 = vmatprep.subr.mxu0 0.0
    %875 = vmatpush1.xpose.msra.mxu0 0.0
    %876 = vmatprep.subr.mxu0 0.0
    %877 = vmatpush1.xpose.msra.mxu0 0.0
    %878 = vmatprep.subr.mxu0 0.0
    %879 = vmatpush1.xpose.msra.mxu0 0.0
    %880 = vmatprep.subr.mxu0 0.0
    %881 = vmatpush1.xpose.msra.mxu0 0.0
    %882 = vmatprep.subr.mxu0 0.0
    %883 = vmatpush1.xpose.msra.mxu0 0.0
    %884 = vmatprep.subr.mxu0 0.0
    %885 = vmatpush1.xpose.msra.mxu0 0.0
    %886 = vmatprep.subr.mxu0 0.0
    %887 = vmatpush1.xpose.msra.mxu0 0.0
    %888 = vmatprep.subr.mxu0 0.0
    %889 = vmatpush1.xpose.msra.mxu0 0.0
    %890 = vmatprep.subr.mxu0 0.0
    %891 = vmatpush1.xpose.msra.mxu0 0.0
    %892 = vmatprep.subr.mxu0 0.0
    %893 = vmatpush1.xpose.msra.mxu0 0.0
    %894 = vmatprep.subr.mxu0 0.0
    %895 = vmatpush1.xpose.msra.mxu0 0.0
    %896 = vmatprep.subr.mxu0 0.0
    %897 = vmatpush1.xpose.msra.mxu0 0.0
    %898 = vmatprep.subr.mxu0 0.0
    %899 = vmatpush1.xpose.msra.mxu0 0.0
    %900 = vmatprep.subr.mxu0 0.0
    %901 = vmatpush1.xpose.msra.mxu0 0.0
    %902 = vmatprep.subr.mxu0 0.0
    %903 = vmatpush1.xpose.msra.mxu0 0.0
    %904 = vmatprep.subr.mxu0 0.0
    %905 = vmatpush1.xpose.msra.mxu0 0.0
    %906 = vmatprep.subr.mxu0 0.0
    %907 = vmatpush1.xpose.msra.mxu0 0.0
    %908 = vmatprep.subr.mxu0 0.0
    %909 = vmatpush1.xpose.msra.mxu0 0.0
    %910 = vmatprep.subr.mxu0 0.0
    %911 = vmatpush1.xpose.msra.mxu0 0.0
    %912 = vmatprep.subr.mxu0 0.0
    %913 = vmatpush1.xpose.msra.mxu0 0.0
    %914 = vmatprep.subr.mxu0 0.0
    %915 = vmatpush1.xpose.msra.mxu0 0.0
    %916 = vmatprep.subr.mxu0 0.0
    %917 = vmatpush1.xpose.msra.mxu0 0.0
    %918 = vmatprep.subr.mxu0 0.0
    %919 = vmatpush1.xpose.msra.mxu0 0.0
    %920 = vmatprep.subr.mxu0 0.0
    %921 = vmatpush1.xpose.msra.mxu0 0.0
    %922 = vmatprep.subr.mxu0 0.0
    %923 = vmatpush1.xpose.msra.mxu0 0.0
    %924 = vmatprep.mubr.f32.mxu0 0.0
    %925 = vmatmul.mubr.f32.gmra.mrb[0].mxu0 %v856
    %v926 = vpop.f32.mrb[0].mxu0
    %v927 = vadd.f32 0.0, %v926
    %v928 = vpop.f32.mrb[0].mxu0
    %929 = vdwg.mxu0
    %930 = vrot.lane.b32.xlu0 %v180, 112
    %v931 = vpop.permute.xlu0 %930
    %932 = vrot.lane.b32.xlu0 %v180, 80
    %v933 = vpop.permute.xlu0 %932
    %v934 = vsel %vm186, %v931, 0
    %v936 = vsel %vm186, %v933, 0
    %938 = vmatprep.subr.mxu0 0.0
    %939 = vmatpush1.xpose.msra.mxu0 %v936
    %940 = vmatprep.subr.mxu0 0.0
    %941 = vmatpush1.xpose.msra.mxu0 0.0
    %942 = vmatprep.subr.mxu0 0.0
    %943 = vmatpush1.xpose.msra.mxu0 0.0
    %944 = vmatprep.subr.mxu0 0.0
    %945 = vmatpush1.xpose.msra.mxu0 0.0
    %946 = vmatprep.subr.mxu0 0.0
    %947 = vmatpush1.xpose.msra.mxu0 0.0
    %948 = vmatprep.subr.mxu0 0.0
    %949 = vmatpush1.xpose.msra.mxu0 0.0
    %950 = vmatprep.subr.mxu0 0.0
    %951 = vmatpush1.xpose.msra.mxu0 0.0
    %952 = vmatprep.subr.mxu0 0.0
    %953 = vmatpush1.xpose.msra.mxu0 0.0
    %954 = vmatprep.subr.mxu0 0.0
    %955 = vmatpush1.xpose.msra.mxu0 0.0
    %956 = vmatprep.subr.mxu0 0.0
    %957 = vmatpush1.xpose.msra.mxu0 0.0
    %958 = vmatprep.subr.mxu0 0.0
    %959 = vmatpush1.xpose.msra.mxu0 0.0
    %960 = vmatprep.subr.mxu0 0.0
    %961 = vmatpush1.xpose.msra.mxu0 0.0
    %962 = vmatprep.subr.mxu0 0.0
    %963 = vmatpush1.xpose.msra.mxu0 0.0
    %964 = vmatprep.subr.mxu0 0.0
    %965 = vmatpush1.xpose.msra.mxu0 0.0
    %966 = vmatprep.subr.mxu0 0.0
    %967 = vmatpush1.xpose.msra.mxu0 0.0
    %968 = vmatprep.subr.mxu0 0.0
    %969 = vmatpush1.xpose.msra.mxu0 0.0
    %970 = vmatprep.subr.mxu0 0.0
    %971 = vmatpush1.xpose.msra.mxu0 0.0
    %972 = vmatprep.subr.mxu0 0.0
    %973 = vmatpush1.xpose.msra.mxu0 0.0
    %974 = vmatprep.subr.mxu0 0.0
    %975 = vmatpush1.xpose.msra.mxu0 0.0
    %976 = vmatprep.subr.mxu0 0.0
    %977 = vmatpush1.xpose.msra.mxu0 0.0
    %978 = vmatprep.subr.mxu0 0.0
    %979 = vmatpush1.xpose.msra.mxu0 0.0
    %980 = vmatprep.subr.mxu0 0.0
    %981 = vmatpush1.xpose.msra.mxu0 0.0
    %982 = vmatprep.subr.mxu0 0.0
    %983 = vmatpush1.xpose.msra.mxu0 0.0
    %984 = vmatprep.subr.mxu0 0.0
    %985 = vmatpush1.xpose.msra.mxu0 0.0
    %986 = vmatprep.subr.mxu0 0.0
    %987 = vmatpush1.xpose.msra.mxu0 0.0
    %988 = vmatprep.subr.mxu0 0.0
    %989 = vmatpush1.xpose.msra.mxu0 0.0
    %990 = vmatprep.subr.mxu0 0.0
    %991 = vmatpush1.xpose.msra.mxu0 0.0
    %992 = vmatprep.subr.mxu0 0.0
    %993 = vmatpush1.xpose.msra.mxu0 0.0
    %994 = vmatprep.subr.mxu0 0.0
    %995 = vmatpush1.xpose.msra.mxu0 0.0
    %996 = vmatprep.subr.mxu0 0.0
    %997 = vmatpush1.xpose.msra.mxu0 0.0
    %998 = vmatprep.subr.mxu0 0.0
    %999 = vmatpush1.xpose.msra.mxu0 0.0
    %1000 = vmatprep.subr.mxu0 0.0
    %1001 = vmatpush1.xpose.msra.mxu0 0.0
    %1002 = vmatprep.mubr.f32.mxu0 0.0
    %1003 = vmatmul.mubr.f32.gmra.mrb[0].mxu0 %v934
    %v1004 = vpop.f32.mrb[0].mxu0
    %v1005 = vadd.f32 0.0, %v1004
    %v1006 = vpop.f32.mrb[0].mxu0
    %1007 = vdwg.mxu0
    %v1008 = vmul.f32 %v927, 0.35355338
    %v1009 = vmul.f32 %v1005, 0.35355338
    %v1010 = vsel %vm341, %v1008, -1e+09
    %v1011 = vsel %vm341, %v1009, -1e+09
    %v1012 = vsel %vm186, %v1010, -inf
    %1013 = vmax.xlane.f32.xlu0 %v1012
    %v1014 = vpop.xlane.xlu0 %1013
    %v1015 = vsel %vm186, %v1011, -inf
    %1016 = vmax.xlane.f32.xlu0 %v1015
    %v1017 = vpop.xlane.xlu0 %1016
    %v1018 = vsub.f32 %v1010, %v1014
    %v1019 = vsub.f32 %v1011, %v1017
    %v1020 = vmul.f32 %v1018, 1.442695
    %v1021 = vpow.pop %v1020
    %v1022 = vmul.f32 %v1019, 1.442695
    %v1023 = vpow.pop %v1022
    %v1024 = vsel %vm186, %v1021, 0.0
    %1025 = vadd.xlane.f32.xlu0 %v1024
    %v1026 = vpop.xlane.xlu0 %1025
    %v1027 = vsel %vm186, %v1023, 0.0
    %1028 = vadd.xlane.f32.xlu0 %v1027
    %v1029 = vpop.xlane.xlu0 %1028
    %v1030 = vrcp.pop %v1026
    %v1031 = vrcp.pop %v1029
    %v1032 = vmul.f32 %v1021, %v1030
    %v1033 = vmul.f32 %v1023, %v1031
    %1034 = vrot.lane.b32.xlu0 %v175, 48
    %v1035 = vpop.permute.xlu0 %1034
    %v1038 = vsel %vm186, %v1032, 0
    %1040 = vmatprep.subr.mxu0 0.0
    %1041 = vmatpush1.msra.mxu0 %v1035
    %1042 = vmatprep.subr.mxu0 0.0
    %1043 = vmatpush1.msra.mxu0 0.0
    %1044 = vmatprep.subr.mxu0 0.0
    %1045 = vmatpush1.msra.mxu0 0.0
    %1046 = vmatprep.subr.mxu0 0.0
    %1047 = vmatpush1.msra.mxu0 0.0
    %1048 = vmatprep.subr.mxu0 0.0
    %1049 = vmatpush1.msra.mxu0 0.0
    %1050 = vmatprep.subr.mxu0 0.0
    %1051 = vmatpush1.msra.mxu0 0.0
    %1052 = vmatprep.subr.mxu0 0.0
    %1053 = vmatpush1.msra.mxu0 0.0
    %1054 = vmatprep.subr.mxu0 0.0
    %1055 = vmatpush1.msra.mxu0 0.0
    %1056 = vmatprep.subr.mxu0 0.0
    %1057 = vmatpush1.msra.mxu0 0.0
    %1058 = vmatprep.subr.mxu0 0.0
    %1059 = vmatpush1.msra.mxu0 0.0
    %1060 = vmatprep.subr.mxu0 0.0
    %1061 = vmatpush1.msra.mxu0 0.0
    %1062 = vmatprep.subr.mxu0 0.0
    %1063 = vmatpush1.msra.mxu0 0.0
    %1064 = vmatprep.subr.mxu0 0.0
    %1065 = vmatpush1.msra.mxu0 0.0
    %1066 = vmatprep.subr.mxu0 0.0
    %1067 = vmatpush1.msra.mxu0 0.0
    %1068 = vmatprep.subr.mxu0 0.0
    %1069 = vmatpush1.msra.mxu0 0.0
    %1070 = vmatprep.subr.mxu0 0.0
    %1071 = vmatpush1.msra.mxu0 0.0
    %1072 = vmatprep.subr.mxu0 0.0
    %1073 = vmatpush1.msra.mxu0 0.0
    %1074 = vmatprep.subr.mxu0 0.0
    %1075 = vmatpush1.msra.mxu0 0.0
    %1076 = vmatprep.subr.mxu0 0.0
    %1077 = vmatpush1.msra.mxu0 0.0
    %1078 = vmatprep.subr.mxu0 0.0
    %1079 = vmatpush1.msra.mxu0 0.0
    %1080 = vmatprep.subr.mxu0 0.0
    %1081 = vmatpush1.msra.mxu0 0.0
    %1082 = vmatprep.subr.mxu0 0.0
    %1083 = vmatpush1.msra.mxu0 0.0
    %1084 = vmatprep.subr.mxu0 0.0
    %1085 = vmatpush1.msra.mxu0 0.0
    %1086 = vmatprep.subr.mxu0 0.0
    %1087 = vmatpush1.msra.mxu0 0.0
    %1088 = vmatprep.subr.mxu0 0.0
    %1089 = vmatpush1.msra.mxu0 0.0
    %1090 = vmatprep.subr.mxu0 0.0
    %1091 = vmatpush1.msra.mxu0 0.0
    %1092 = vmatprep.subr.mxu0 0.0
    %1093 = vmatpush1.msra.mxu0 0.0
    %1094 = vmatprep.subr.mxu0 0.0
    %1095 = vmatpush1.msra.mxu0 0.0
    %1096 = vmatprep.subr.mxu0 0.0
    %1097 = vmatpush1.msra.mxu0 0.0
    %1098 = vmatprep.subr.mxu0 0.0
    %1099 = vmatpush1.msra.mxu0 0.0
    %1100 = vmatprep.subr.mxu0 0.0
    %1101 = vmatpush1.msra.mxu0 0.0
    %1102 = vmatprep.subr.mxu0 0.0
    %1103 = vmatpush1.msra.mxu0 0.0
    %1104 = vmatprep.mubr.f32.mxu0 0.0
    %1105 = vmatmul.mubr.f32.gmra.mrb[0].mxu0 %v1038
    %v1106 = vpop.f32.mrb[0].mxu0
    %v1107 = vadd.f32 0.0, %v1106
    %v1108 = vpop.f32.mrb[0].mxu0
    %1109 = vdwg.mxu0
    %1110 = vrot.lane.b32.xlu0 %v180, 48
    %v1111 = vpop.permute.xlu0 %1110
    %v1114 = vsel %vm186, %v1033, 0
    %1116 = vmatprep.subr.mxu0 0.0
    %1117 = vmatpush1.msra.mxu0 %v1111
    %1118 = vmatprep.subr.mxu0 0.0
    %1119 = vmatpush1.msra.mxu0 0.0
    %1120 = vmatprep.subr.mxu0 0.0
    %1121 = vmatpush1.msra.mxu0 0.0
    %1122 = vmatprep.subr.mxu0 0.0
    %1123 = vmatpush1.msra.mxu0 0.0
    %1124 = vmatprep.subr.mxu0 0.0
    %1125 = vmatpush1.msra.mxu0 0.0
    %1126 = vmatprep.subr.mxu0 0.0
    %1127 = vmatpush1.msra.mxu0 0.0
    %1128 = vmatprep.subr.mxu0 0.0
    %1129 = vmatpush1.msra.mxu0 0.0
    %1130 = vmatprep.subr.mxu0 0.0
    %1131 = vmatpush1.msra.mxu0 0.0
    %1132 = vmatprep.subr.mxu0 0.0
    %1133 = vmatpush1.msra.mxu0 0.0
    %1134 = vmatprep.subr.mxu0 0.0
    %1135 = vmatpush1.msra.mxu0 0.0
    %1136 = vmatprep.subr.mxu0 0.0
    %1137 = vmatpush1.msra.mxu0 0.0
    %1138 = vmatprep.subr.mxu0 0.0
    %1139 = vmatpush1.msra.mxu0 0.0
    %1140 = vmatprep.subr.mxu0 0.0
    %1141 = vmatpush1.msra.mxu0 0.0
    %1142 = vmatprep.subr.mxu0 0.0
    %1143 = vmatpush1.msra.mxu0 0.0
    %1144 = vmatprep.subr.mxu0 0.0
    %1145 = vmatpush1.msra.mxu0 0.0
    %1146 = vmatprep.subr.mxu0 0.0
    %1147 = vmatpush1.msra.mxu0 0.0
    %1148 = vmatprep.subr.mxu0 0.0
    %1149 = vmatpush1.msra.mxu0 0.0
    %1150 = vmatprep.subr.mxu0 0.0
    %1151 = vmatpush1.msra.mxu0 0.0
    %1152 = vmatprep.subr.mxu0 0.0
    %1153 = vmatpush1.msra.mxu0 0.0
    %1154 = vmatprep.subr.mxu0 0.0
    %1155 = vmatpush1.msra.mxu0 0.0
    %1156 = vmatprep.subr.mxu0 0.0
    %1157 = vmatpush1.msra.mxu0 0.0
    %1158 = vmatprep.subr.mxu0 0.0
    %1159 = vmatpush1.msra.mxu0 0.0
    %1160 = vmatprep.subr.mxu0 0.0
    %1161 = vmatpush1.msra.mxu0 0.0
    %1162 = vmatprep.subr.mxu0 0.0
    %1163 = vmatpush1.msra.mxu0 0.0
    %1164 = vmatprep.subr.mxu0 0.0
    %1165 = vmatpush1.msra.mxu0 0.0
    %1166 = vmatprep.subr.mxu0 0.0
    %1167 = vmatpush1.msra.mxu0 0.0
    %1168 = vmatprep.subr.mxu0 0.0
    %1169 = vmatpush1.msra.mxu0 0.0
    %1170 = vmatprep.subr.mxu0 0.0
    %1171 = vmatpush1.msra.mxu0 0.0
    %1172 = vmatprep.subr.mxu0 0.0
    %1173 = vmatpush1.msra.mxu0 0.0
    %1174 = vmatprep.subr.mxu0 0.0
    %1175 = vmatpush1.msra.mxu0 0.0
    %1176 = vmatprep.subr.mxu0 0.0
    %1177 = vmatpush1.msra.mxu0 0.0
    %1178 = vmatprep.subr.mxu0 0.0
    %1179 = vmatpush1.msra.mxu0 0.0
    %1180 = vmatprep.mubr.f32.mxu0 0.0
    %1181 = vmatmul.mubr.f32.gmra.mrb[0].mxu0 %v1114
    %v1182 = vpop.f32.mrb[0].mxu0
    %v1183 = vadd.f32 0.0, %v1182
    %v1184 = vpop.f32.mrb[0].mxu0
    %1185 = vdwg.mxu0
    %1186 = vrot.lane.b32.xlu0 %v175, 104
    %v1187 = vpop.permute.xlu0 %1186
    %1188 = vrot.lane.b32.xlu0 %v175, 72
    %v1189 = vpop.permute.xlu0 %1188
    %v1190 = vsel %vm186, %v1187, 0
    %v1192 = vsel %vm186, %v1189, 0
    %1194 = vmatprep.subr.mxu0 0.0
    %1195 = vmatpush1.xpose.msra.mxu0 %v1192
    %1196 = vmatprep.subr.mxu0 0.0
    %1197 = vmatpush1.xpose.msra.mxu0 0.0
    %1198 = vmatprep.subr.mxu0 0.0
    %1199 = vmatpush1.xpose.msra.mxu0 0.0
    %1200 = vmatprep.subr.mxu0 0.0
    %1201 = vmatpush1.xpose.msra.mxu0 0.0
    %1202 = vmatprep.subr.mxu0 0.0
    %1203 = vmatpush1.xpose.msra.mxu0 0.0
    %1204 = vmatprep.subr.mxu0 0.0
    %1205 = vmatpush1.xpose.msra.mxu0 0.0
    %1206 = vmatprep.subr.mxu0 0.0
    %1207 = vmatpush1.xpose.msra.mxu0 0.0
    %1208 = vmatprep.subr.mxu0 0.0
    %1209 = vmatpush1.xpose.msra.mxu0 0.0
    %1210 = vmatprep.subr.mxu0 0.0
    %1211 = vmatpush1.xpose.msra.mxu0 0.0
    %1212 = vmatprep.subr.mxu0 0.0
    %1213 = vmatpush1.xpose.msra.mxu0 0.0
    %1214 = vmatprep.subr.mxu0 0.0
    %1215 = vmatpush1.xpose.msra.mxu0 0.0
    %1216 = vmatprep.subr.mxu0 0.0
    %1217 = vmatpush1.xpose.msra.mxu0 0.0
    %1218 = vmatprep.subr.mxu0 0.0
    %1219 = vmatpush1.xpose.msra.mxu0 0.0
    %1220 = vmatprep.subr.mxu0 0.0
    %1221 = vmatpush1.xpose.msra.mxu0 0.0
    %1222 = vmatprep.subr.mxu0 0.0
    %1223 = vmatpush1.xpose.msra.mxu0 0.0
    %1224 = vmatprep.subr.mxu0 0.0
    %1225 = vmatpush1.xpose.msra.mxu0 0.0
    %1226 = vmatprep.subr.mxu0 0.0
    %1227 = vmatpush1.xpose.msra.mxu0 0.0
    %1228 = vmatprep.subr.mxu0 0.0
    %1229 = vmatpush1.xpose.msra.mxu0 0.0
    %1230 = vmatprep.subr.mxu0 0.0
    %1231 = vmatpush1.xpose.msra.mxu0 0.0
    %1232 = vmatprep.subr.mxu0 0.0
    %1233 = vmatpush1.xpose.msra.mxu0 0.0
    %1234 = vmatprep.subr.mxu0 0.0
    %1235 = vmatpush1.xpose.msra.mxu0 0.0
    %1236 = vmatprep.subr.mxu0 0.0
    %1237 = vmatpush1.xpose.msra.mxu0 0.0
    %1238 = vmatprep.subr.mxu0 0.0
    %1239 = vmatpush1.xpose.msra.mxu0 0.0
    %1240 = vmatprep.subr.mxu0 0.0
    %1241 = vmatpush1.xpose.msra.mxu0 0.0
    %1242 = vmatprep.subr.mxu0 0.0
    %1243 = vmatpush1.xpose.msra.mxu0 0.0
    %1244 = vmatprep.subr.mxu0 0.0
    %1245 = vmatpush1.xpose.msra.mxu0 0.0
    %1246 = vmatprep.subr.mxu0 0.0
    %1247 = vmatpush1.xpose.msra.mxu0 0.0
    %1248 = vmatprep.subr.mxu0 0.0
    %1249 = vmatpush1.xpose.msra.mxu0 0.0
    %1250 = vmatprep.subr.mxu0 0.0
    %1251 = vmatpush1.xpose.msra.mxu0 0.0
    %1252 = vmatprep.subr.mxu0 0.0
    %1253 = vmatpush1.xpose.msra.mxu0 0.0
    %1254 = vmatprep.subr.mxu0 0.0
    %1255 = vmatpush1.xpose.msra.mxu0 0.0
    %1256 = vmatprep.subr.mxu0 0.0
    %1257 = vmatpush1.xpose.msra.mxu0 0.0
    %1258 = vmatprep.mubr.f32.mxu0 0.0
    %1259 = vmatmul.mubr.f32.gmra.mrb[0].mxu0 %v1190
    %v1260 = vpop.f32.mrb[0].mxu0
    %v1261 = vadd.f32 0.0, %v1260
    %v1262 = vpop.f32.mrb[0].mxu0
    %1263 = vdwg.mxu0
    %1264 = vrot.lane.b32.xlu0 %v180, 104
    %v1265 = vpop.permute.xlu0 %1264
    %1266 = vrot.lane.b32.xlu0 %v180, 72
    %v1267 = vpop.permute.xlu0 %1266
    %v1268 = vsel %vm186, %v1265, 0
    %v1270 = vsel %vm186, %v1267, 0
    %1272 = vmatprep.subr.mxu0 0.0
    %1273 = vmatpush1.xpose.msra.mxu0 %v1270
    %1274 = vmatprep.subr.mxu0 0.0
    %1275 = vmatpush1.xpose.msra.mxu0 0.0
    %1276 = vmatprep.subr.mxu0 0.0
    %1277 = vmatpush1.xpose.msra.mxu0 0.0
    %1278 = vmatprep.subr.mxu0 0.0
    %1279 = vmatpush1.xpose.msra.mxu0 0.0
    %1280 = vmatprep.subr.mxu0 0.0
    %1281 = vmatpush1.xpose.msra.mxu0 0.0
    %1282 = vmatprep.subr.mxu0 0.0
    %1283 = vmatpush1.xpose.msra.mxu0 0.0
    %1284 = vmatprep.subr.mxu0 0.0
    %1285 = vmatpush1.xpose.msra.mxu0 0.0
    %1286 = vmatprep.subr.mxu0 0.0
    %1287 = vmatpush1.xpose.msra.mxu0 0.0
    %1288 = vmatprep.subr.mxu0 0.0
    %1289 = vmatpush1.xpose.msra.mxu0 0.0
    %1290 = vmatprep.subr.mxu0 0.0
    %1291 = vmatpush1.xpose.msra.mxu0 0.0
    %1292 = vmatprep.subr.mxu0 0.0
    %1293 = vmatpush1.xpose.msra.mxu0 0.0
    %1294 = vmatprep.subr.mxu0 0.0
    %1295 = vmatpush1.xpose.msra.mxu0 0.0
    %1296 = vmatprep.subr.mxu0 0.0
    %1297 = vmatpush1.xpose.msra.mxu0 0.0
    %1298 = vmatprep.subr.mxu0 0.0
    %1299 = vmatpush1.xpose.msra.mxu0 0.0
    %1300 = vmatprep.subr.mxu0 0.0
    %1301 = vmatpush1.xpose.msra.mxu0 0.0
    %1302 = vmatprep.subr.mxu0 0.0
    %1303 = vmatpush1.xpose.msra.mxu0 0.0
    %1304 = vmatprep.subr.mxu0 0.0
    %1305 = vmatpush1.xpose.msra.mxu0 0.0
    %1306 = vmatprep.subr.mxu0 0.0
    %1307 = vmatpush1.xpose.msra.mxu0 0.0
    %1308 = vmatprep.subr.mxu0 0.0
    %1309 = vmatpush1.xpose.msra.mxu0 0.0
    %1310 = vmatprep.subr.mxu0 0.0
    %1311 = vmatpush1.xpose.msra.mxu0 0.0
    %1312 = vmatprep.subr.mxu0 0.0
    %1313 = vmatpush1.xpose.msra.mxu0 0.0
    %1314 = vmatprep.subr.mxu0 0.0
    %1315 = vmatpush1.xpose.msra.mxu0 0.0
    %1316 = vmatprep.subr.mxu0 0.0
    %1317 = vmatpush1.xpose.msra.mxu0 0.0
    %1318 = vmatprep.subr.mxu0 0.0
    %1319 = vmatpush1.xpose.msra.mxu0 0.0
    %1320 = vmatprep.subr.mxu0 0.0
    %1321 = vmatpush1.xpose.msra.mxu0 0.0
    %1322 = vmatprep.subr.mxu0 0.0
    %1323 = vmatpush1.xpose.msra.mxu0 0.0
    %1324 = vmatprep.subr.mxu0 0.0
    %1325 = vmatpush1.xpose.msra.mxu0 0.0
    %1326 = vmatprep.subr.mxu0 0.0
    %1327 = vmatpush1.xpose.msra.mxu0 0.0
    %1328 = vmatprep.subr.mxu0 0.0
    %1329 = vmatpush1.xpose.msra.mxu0 0.0
    %1330 = vmatprep.subr.mxu0 0.0
    %1331 = vmatpush1.xpose.msra.mxu0 0.0
    %1332 = vmatprep.subr.mxu0 0.0
    %1333 = vmatpush1.xpose.msra.mxu0 0.0
    %1334 = vmatprep.subr.mxu0 0.0
    %1335 = vmatpush1.xpose.msra.mxu0 0.0
    %1336 = vmatprep.mubr.f32.mxu0 0.0
    %1337 = vmatmul.mubr.f32.gmra.mrb[0].mxu0 %v1268
    %v1338 = vpop.f32.mrb[0].mxu0
    %v1339 = vadd.f32 0.0, %v1338
    %v1340 = vpop.f32.mrb[0].mxu0
    %1341 = vdwg.mxu0
    %v1342 = vmul.f32 %v1261, 0.35355338
    %v1343 = vmul.f32 %v1339, 0.35355338
    %v1344 = vsel %vm341, %v1342, -1e+09
    %v1345 = vsel %vm341, %v1343, -1e+09
    %v1346 = vsel %vm186, %v1344, -inf
    %1347 = vmax.xlane.f32.xlu0 %v1346
    %v1348 = vpop.xlane.xlu0 %1347
    %v1349 = vsel %vm186, %v1345, -inf
    %1350 = vmax.xlane.f32.xlu0 %v1349
    %v1351 = vpop.xlane.xlu0 %1350
    %v1352 = vsub.f32 %v1344, %v1348
    %v1353 = vsub.f32 %v1345, %v1351
    %v1354 = vmul.f32 %v1352, 1.442695
    %v1355 = vpow.pop %v1354
    %v1356 = vmul.f32 %v1353, 1.442695
    %v1357 = vpow.pop %v1356
    %v1358 = vsel %vm186, %v1355, 0.0
    %1359 = vadd.xlane.f32.xlu0 %v1358
    %v1360 = vpop.xlane.xlu0 %1359
    %v1361 = vsel %vm186, %v1357, 0.0
    %1362 = vadd.xlane.f32.xlu0 %v1361
    %v1363 = vpop.xlane.xlu0 %1362
    %v1364 = vrcp.pop %v1360
    %v1365 = vrcp.pop %v1363
    %v1366 = vmul.f32 %v1355, %v1364
    %v1367 = vmul.f32 %v1357, %v1365
    %1368 = vrot.lane.b32.xlu0 %v175, 40
    %v1369 = vpop.permute.xlu0 %1368
    %v1372 = vsel %vm186, %v1366, 0
    %1374 = vmatprep.subr.mxu0 0.0
    %1375 = vmatpush1.msra.mxu0 %v1369
    %1376 = vmatprep.subr.mxu0 0.0
    %1377 = vmatpush1.msra.mxu0 0.0
    %1378 = vmatprep.subr.mxu0 0.0
    %1379 = vmatpush1.msra.mxu0 0.0
    %1380 = vmatprep.subr.mxu0 0.0
    %1381 = vmatpush1.msra.mxu0 0.0
    %1382 = vmatprep.subr.mxu0 0.0
    %1383 = vmatpush1.msra.mxu0 0.0
    %1384 = vmatprep.subr.mxu0 0.0
    %1385 = vmatpush1.msra.mxu0 0.0
    %1386 = vmatprep.subr.mxu0 0.0
    %1387 = vmatpush1.msra.mxu0 0.0
    %1388 = vmatprep.subr.mxu0 0.0
    %1389 = vmatpush1.msra.mxu0 0.0
    %1390 = vmatprep.subr.mxu0 0.0
    %1391 = vmatpush1.msra.mxu0 0.0
    %1392 = vmatprep.subr.mxu0 0.0
    %1393 = vmatpush1.msra.mxu0 0.0
    %1394 = vmatprep.subr.mxu0 0.0
    %1395 = vmatpush1.msra.mxu0 0.0
    %1396 = vmatprep.subr.mxu0 0.0
    %1397 = vmatpush1.msra.mxu0 0.0
    %1398 = vmatprep.subr.mxu0 0.0
    %1399 = vmatpush1.msra.mxu0 0.0
    %1400 = vmatprep.subr.mxu0 0.0
    %1401 = vmatpush1.msra.mxu0 0.0
    %1402 = vmatprep.subr.mxu0 0.0
    %1403 = vmatpush1.msra.mxu0 0.0
    %1404 = vmatprep.subr.mxu0 0.0
    %1405 = vmatpush1.msra.mxu0 0.0
    %1406 = vmatprep.subr.mxu0 0.0
    %1407 = vmatpush1.msra.mxu0 0.0
    %1408 = vmatprep.subr.mxu0 0.0
    %1409 = vmatpush1.msra.mxu0 0.0
    %1410 = vmatprep.subr.mxu0 0.0
    %1411 = vmatpush1.msra.mxu0 0.0
    %1412 = vmatprep.subr.mxu0 0.0
    %1413 = vmatpush1.msra.mxu0 0.0
    %1414 = vmatprep.subr.mxu0 0.0
    %1415 = vmatpush1.msra.mxu0 0.0
    %1416 = vmatprep.subr.mxu0 0.0
    %1417 = vmatpush1.msra.mxu0 0.0
    %1418 = vmatprep.subr.mxu0 0.0
    %1419 = vmatpush1.msra.mxu0 0.0
    %1420 = vmatprep.subr.mxu0 0.0
    %1421 = vmatpush1.msra.mxu0 0.0
    %1422 = vmatprep.subr.mxu0 0.0
    %1423 = vmatpush1.msra.mxu0 0.0
    %1424 = vmatprep.subr.mxu0 0.0
    %1425 = vmatpush1.msra.mxu0 0.0
    %1426 = vmatprep.subr.mxu0 0.0
    %1427 = vmatpush1.msra.mxu0 0.0
    %1428 = vmatprep.subr.mxu0 0.0
    %1429 = vmatpush1.msra.mxu0 0.0
    %1430 = vmatprep.subr.mxu0 0.0
    %1431 = vmatpush1.msra.mxu0 0.0
    %1432 = vmatprep.subr.mxu0 0.0
    %1433 = vmatpush1.msra.mxu0 0.0
    %1434 = vmatprep.subr.mxu0 0.0
    %1435 = vmatpush1.msra.mxu0 0.0
    %1436 = vmatprep.subr.mxu0 0.0
    %1437 = vmatpush1.msra.mxu0 0.0
    %1438 = vmatprep.mubr.f32.mxu0 0.0
    %1439 = vmatmul.mubr.f32.gmra.mrb[0].mxu0 %v1372
    %v1440 = vpop.f32.mrb[0].mxu0
    %v1441 = vadd.f32 0.0, %v1440
    %v1442 = vpop.f32.mrb[0].mxu0
    %1443 = vdwg.mxu0
    %1444 = vrot.lane.b32.xlu0 %v180, 40
    %v1445 = vpop.permute.xlu0 %1444
    %v1448 = vsel %vm186, %v1367, 0
    %1450 = vmatprep.subr.mxu0 0.0
    %1451 = vmatpush1.msra.mxu0 %v1445
    %1452 = vmatprep.subr.mxu0 0.0
    %1453 = vmatpush1.msra.mxu0 0.0
    %1454 = vmatprep.subr.mxu0 0.0
    %1455 = vmatpush1.msra.mxu0 0.0
    %1456 = vmatprep.subr.mxu0 0.0
    %1457 = vmatpush1.msra.mxu0 0.0
    %1458 = vmatprep.subr.mxu0 0.0
    %1459 = vmatpush1.msra.mxu0 0.0
    %1460 = vmatprep.subr.mxu0 0.0
    %1461 = vmatpush1.msra.mxu0 0.0
    %1462 = vmatprep.subr.mxu0 0.0
    %1463 = vmatpush1.msra.mxu0 0.0
    %1464 = vmatprep.subr.mxu0 0.0
    %1465 = vmatpush1.msra.mxu0 0.0
    %1466 = vmatprep.subr.mxu0 0.0
    %1467 = vmatpush1.msra.mxu0 0.0
    %1468 = vmatprep.subr.mxu0 0.0
    %1469 = vmatpush1.msra.mxu0 0.0
    %1470 = vmatprep.subr.mxu0 0.0
    %1471 = vmatpush1.msra.mxu0 0.0
    %1472 = vmatprep.subr.mxu0 0.0
    %1473 = vmatpush1.msra.mxu0 0.0
    %1474 = vmatprep.subr.mxu0 0.0
    %1475 = vmatpush1.msra.mxu0 0.0
    %1476 = vmatprep.subr.mxu0 0.0
    %1477 = vmatpush1.msra.mxu0 0.0
    %1478 = vmatprep.subr.mxu0 0.0
    %1479 = vmatpush1.msra.mxu0 0.0
    %1480 = vmatprep.subr.mxu0 0.0
    %1481 = vmatpush1.msra.mxu0 0.0
    %1482 = vmatprep.subr.mxu0 0.0
    %1483 = vmatpush1.msra.mxu0 0.0
    %1484 = vmatprep.subr.mxu0 0.0
    %1485 = vmatpush1.msra.mxu0 0.0
    %1486 = vmatprep.subr.mxu0 0.0
    %1487 = vmatpush1.msra.mxu0 0.0
    %1488 = vmatprep.subr.mxu0 0.0
    %1489 = vmatpush1.msra.mxu0 0.0
    %1490 = vmatprep.subr.mxu0 0.0
    %1491 = vmatpush1.msra.mxu0 0.0
    %1492 = vmatprep.subr.mxu0 0.0
    %1493 = vmatpush1.msra.mxu0 0.0
    %1494 = vmatprep.subr.mxu0 0.0
    %1495 = vmatpush1.msra.mxu0 0.0
    %1496 = vmatprep.subr.mxu0 0.0
    %1497 = vmatpush1.msra.mxu0 0.0
    %1498 = vmatprep.subr.mxu0 0.0
    %1499 = vmatpush1.msra.mxu0 0.0
    %1500 = vmatprep.subr.mxu0 0.0
    %1501 = vmatpush1.msra.mxu0 0.0
    %1502 = vmatprep.subr.mxu0 0.0
    %1503 = vmatpush1.msra.mxu0 0.0
    %1504 = vmatprep.subr.mxu0 0.0
    %1505 = vmatpush1.msra.mxu0 0.0
    %1506 = vmatprep.subr.mxu0 0.0
    %1507 = vmatpush1.msra.mxu0 0.0
    %1508 = vmatprep.subr.mxu0 0.0
    %1509 = vmatpush1.msra.mxu0 0.0
    %1510 = vmatprep.subr.mxu0 0.0
    %1511 = vmatpush1.msra.mxu0 0.0
    %1512 = vmatprep.subr.mxu0 0.0
    %1513 = vmatpush1.msra.mxu0 0.0
    %1514 = vmatprep.mubr.f32.mxu0 0.0
    %1515 = vmatmul.mubr.f32.gmra.mrb[0].mxu0 %v1448
    %v1516 = vpop.f32.mrb[0].mxu0
    %v1517 = vadd.f32 0.0, %v1516
    %v1518 = vpop.f32.mrb[0].mxu0
    %1519 = vdwg.mxu0
    %1522 = vrot.lane.b32.xlu0 %v773, 8
    %v1523 = vpop.permute.xlu0 %1522
    %1524 = vrot.lane.b32.xlu0 %v849, 8
    %v1525 = vpop.permute.xlu0 %1524
    %1530 = vrot.lane.b32.xlu0 %v1107, 16
    %v1531 = vpop.permute.xlu0 %1530
    %1532 = vrot.lane.b32.xlu0 %v1183, 16
    %v1533 = vpop.permute.xlu0 %1532
    %1538 = vrot.lane.b32.xlu0 %v1441, 24
    %v1539 = vpop.permute.xlu0 %1538
    %1540 = vrot.lane.b32.xlu0 %v1517, 24
    %v1541 = vpop.permute.xlu0 %1540
    %v1544 = vsel %vm186, %v439, %v1523
    %v1545 = vsel %vm186, %v515, %v1525
    %vm1546 = vcmask 130048
    %v1547 = vsel %vm1546, %v1544, %v1531
    %v1548 = vsel %vm1546, %v1545, %v1533
    %vm1549 = vcmask 195584
    %v1550 = vsel %vm1549, %v1547, %v1539
    %v1551 = vsel %vm1549, %v1548, %v1541
    %v1552 = vld [vmem:[%s3] sm:$0xff]
    %v1553 = vld [vmem:[%s3 + $0x8] sm:$0xff]
    %v1554 = vld [vmem:[%s3 + $0x10] sm:$0xff]
    %v1555 = vld [vmem:[%s3 + $0x18] sm:$0xff]
    %v1556 = vlaneseq
    %v1557 = vshrl.u32 %v1556, 7
    %v1558 = vsub.s32 3, %v1557
    %v1559 = vrot.slane %v53, %v1558
    %v1561 = vsel %vm54, %v1550, 0
    %v1564 = vsel %vm54, %v1551, 0
    %1566 = vmatprep.subr.mxu0 0.0
    %1567 = vmatpush1.msra.mxu0 %v1552
    %1568 = vmatprep.subr.mxu0 0.0
    %1569 = vmatpush1.msra.mxu0 %v1553
    %1570 = vmatprep.subr.mxu0 0.0
    %1571 = vmatpush1.msra.mxu0 %v1554
    %1572 = vmatprep.subr.mxu0 0.0
    %1573 = vmatpush1.msra.mxu0 %v1555
    %1574 = vmatprep.subr.mxu0 0.0
    %1575 = vmatpush1.msra.mxu0 0.0
    %1576 = vmatprep.subr.mxu0 0.0
    %1577 = vmatpush1.msra.mxu0 0.0
    %1578 = vmatprep.subr.mxu0 0.0
    %1579 = vmatpush1.msra.mxu0 0.0
    %1580 = vmatprep.subr.mxu0 0.0
    %1581 = vmatpush1.msra.mxu0 0.0
    %1582 = vmatprep.subr.mxu0 0.0
    %1583 = vmatpush1.msra.mxu0 0.0
    %1584 = vmatprep.subr.mxu0 0.0
    %1585 = vmatpush1.msra.mxu0 0.0
    %1586 = vmatprep.subr.mxu0 0.0
    %1587 = vmatpush1.msra.mxu0 0.0
    %1588 = vmatprep.subr.mxu0 0.0
    %1589 = vmatpush1.msra.mxu0 0.0
    %1590 = vmatprep.subr.mxu0 0.0
    %1591 = vmatpush1.msra.mxu0 0.0
    %1592 = vmatprep.subr.mxu0 0.0
    %1593 = vmatpush1.msra.mxu0 0.0
    %1594 = vmatprep.subr.mxu0 0.0
    %1595 = vmatpush1.msra.mxu0 0.0
    %1596 = vmatprep.subr.mxu0 0.0
    %1597 = vmatpush1.msra.mxu0 0.0
    %1598 = vmatprep.subr.mxu0 0.0
    %1599 = vmatpush1.msra.mxu0 0.0
    %1600 = vmatprep.subr.mxu0 0.0
    %1601 = vmatpush1.msra.mxu0 0.0
    %1602 = vmatprep.subr.mxu0 0.0
    %1603 = vmatpush1.msra.mxu0 0.0
    %1604 = vmatprep.subr.mxu0 0.0
    %1605 = vmatpush1.msra.mxu0 0.0
    %1606 = vmatprep.subr.mxu0 0.0
    %1607 = vmatpush1.msra.mxu0 0.0
    %1608 = vmatprep.subr.mxu0 0.0
    %1609 = vmatpush1.msra.mxu0 0.0
    %1610 = vmatprep.subr.mxu0 0.0
    %1611 = vmatpush1.msra.mxu0 0.0
    %1612 = vmatprep.subr.mxu0 0.0
    %1613 = vmatpush1.msra.mxu0 0.0
    %1614 = vmatprep.subr.mxu0 0.0
    %1615 = vmatpush1.msra.mxu0 0.0
    %1616 = vmatprep.subr.mxu0 0.0
    %1617 = vmatpush1.msra.mxu0 0.0
    %1618 = vmatprep.subr.mxu0 0.0
    %1619 = vmatpush1.msra.mxu0 0.0
    %1620 = vmatprep.subr.mxu0 0.0
    %1621 = vmatpush1.msra.mxu0 0.0
    %1622 = vmatprep.subr.mxu0 0.0
    %1623 = vmatpush1.msra.mxu0 0.0
    %1624 = vmatprep.subr.mxu0 0.0
    %1625 = vmatpush1.msra.mxu0 0.0
    %1626 = vmatprep.subr.mxu0 0.0
    %1627 = vmatpush1.msra.mxu0 0.0
    %1628 = vmatprep.subr.mxu0 0.0
    %1629 = vmatpush1.msra.mxu0 0.0
    %1630 = vmatprep.mubr.f32.mxu0 0.0
    %1631 = vmatmul.mubr.f32.gmra.mrb[0].mxu0 %v1561
    %v1632 = vpop.f32.mrb[0].mxu0
    %v1633 = vadd.f32 %v1559, %v1632
    %v1634 = vpop.f32.mrb[0].mxu0
    %1635 = vmatprep.mubr.f32.mxu0 0.0
    %1636 = vmatmul.mubr.f32.gmra.mrb[0].mxu0 %v1564
    %v1637 = vpop.f32.mrb[0].mxu0
    %v1638 = vadd.f32 %v1559, %v1637
    %v1639 = vpop.f32.mrb[0].mxu0
    %1640 = vdwg.mxu0
    %v1641 = vadd.f32 %v51, %v1633
    %v1642 = vadd.f32 %v52, %v1638
    %v1643 = vsel %vm54, %v1641, 0.0
    %1644 = vadd.xlane.f32.xlu0 %v1643
    %v1645 = vpop.xlane.xlu0 %1644
    %v1646 = vsel %vm54, %v1642, 0.0
    %1647 = vadd.xlane.f32.xlu0 %v1646
    %v1648 = vpop.xlane.xlu0 %1647
    %v1649 = vmul.f32 %v1645, %v61
    %v1650 = vmul.f32 %v1648, %v61
    %v1651 = vsub.f32 %v1641, %v1649
    %v1652 = vsub.f32 %v1642, %v1650
    %v1653 = vmul.f32 %v1651, %v1651
    %v1654 = vmul.f32 %v1652, %v1652
    %v1655 = vsel %vm54, %v1653, 0.0
    %1656 = vadd.xlane.f32.xlu0 %v1655
    %v1657 = vpop.xlane.xlu0 %1656
    %v1658 = vsel %vm54, %v1654, 0.0
    %1659 = vadd.xlane.f32.xlu0 %v1658
    %v1660 = vpop.xlane.xlu0 %1659
    %v1661 = vmul.f32 %v1657, %v61
    %v1662 = vmul.f32 %v1660, %v61
    %v1663 = vadd.f32 %v1661, 1e-05
    %v1664 = vadd.f32 %v1662, 1e-05
    %v1665 = vrsqrt.pop %v1663
    %v1666 = vrsqrt.pop %v1664
    %v1667 = vmul.f32 %v1651, %v1665
    %v1668 = vmul.f32 %v1652, %v1666
    %v1669 = vlaneseq
    %v1670 = vshrl.u32 %v1669, 7
    %v1671 = vsub.s32 4, %v1670
    %v1672 = vrot.slane %v53, %v1671
    %v1673 = vmul.f32 %v1667, %v1672
    %v1674 = vmul.f32 %v1668, %v1672
    %v1675 = vlaneseq
    %v1676 = vshrl.u32 %v1675, 7
    %v1677 = vsub.s32 5, %v1676
    %v1678 = vrot.slane %v53, %v1677
    %v1679 = vadd.f32 %v1673, %v1678
    %v1680 = vadd.f32 %v1674, %v1678
    %v1681 = vld [vmem:[%s4] sm:$0xff]
    %v1682 = vld [vmem:[%s4 + $0x8] sm:$0xff]
    %v1683 = vld [vmem:[%s4 + $0x10] sm:$0xff]
    %v1684 = vld [vmem:[%s4 + $0x18] sm:$0xff]
    %v1685 = vlaneseq
    %v1686 = vshrl.u32 %v1685, 7
    %v1687 = vsub.s32 6, %v1686
    %v1688 = vrot.slane %v53, %v1687
    %v1690 = vsel %vm54, %v1679, 0
    %v1693 = vsel %vm54, %v1680, 0
    %1695 = vmatprep.subr.mxu0 0.0
    %1696 = vmatpush1.msra.mxu0 %v1681
    %1697 = vmatprep.subr.mxu0 0.0
    %1698 = vmatpush1.msra.mxu0 %v1682
    %1699 = vmatprep.subr.mxu0 0.0
    %1700 = vmatpush1.msra.mxu0 %v1683
    %1701 = vmatprep.subr.mxu0 0.0
    %1702 = vmatpush1.msra.mxu0 %v1684
    %1703 = vmatprep.subr.mxu0 0.0
    %1704 = vmatpush1.msra.mxu0 0.0
    %1705 = vmatprep.subr.mxu0 0.0
    %1706 = vmatpush1.msra.mxu0 0.0
    %1707 = vmatprep.subr.mxu0 0.0
    %1708 = vmatpush1.msra.mxu0 0.0
    %1709 = vmatprep.subr.mxu0 0.0
    %1710 = vmatpush1.msra.mxu0 0.0
    %1711 = vmatprep.subr.mxu0 0.0
    %1712 = vmatpush1.msra.mxu0 0.0
    %1713 = vmatprep.subr.mxu0 0.0
    %1714 = vmatpush1.msra.mxu0 0.0
    %1715 = vmatprep.subr.mxu0 0.0
    %1716 = vmatpush1.msra.mxu0 0.0
    %1717 = vmatprep.subr.mxu0 0.0
    %1718 = vmatpush1.msra.mxu0 0.0
    %1719 = vmatprep.subr.mxu0 0.0
    %1720 = vmatpush1.msra.mxu0 0.0
    %1721 = vmatprep.subr.mxu0 0.0
    %1722 = vmatpush1.msra.mxu0 0.0
    %1723 = vmatprep.subr.mxu0 0.0
    %1724 = vmatpush1.msra.mxu0 0.0
    %1725 = vmatprep.subr.mxu0 0.0
    %1726 = vmatpush1.msra.mxu0 0.0
    %1727 = vmatprep.subr.mxu0 0.0
    %1728 = vmatpush1.msra.mxu0 0.0
    %1729 = vmatprep.subr.mxu0 0.0
    %1730 = vmatpush1.msra.mxu0 0.0
    %1731 = vmatprep.subr.mxu0 0.0
    %1732 = vmatpush1.msra.mxu0 0.0
    %1733 = vmatprep.subr.mxu0 0.0
    %1734 = vmatpush1.msra.mxu0 0.0
    %1735 = vmatprep.subr.mxu0 0.0
    %1736 = vmatpush1.msra.mxu0 0.0
    %1737 = vmatprep.subr.mxu0 0.0
    %1738 = vmatpush1.msra.mxu0 0.0
    %1739 = vmatprep.subr.mxu0 0.0
    %1740 = vmatpush1.msra.mxu0 0.0
    %1741 = vmatprep.subr.mxu0 0.0
    %1742 = vmatpush1.msra.mxu0 0.0
    %1743 = vmatprep.subr.mxu0 0.0
    %1744 = vmatpush1.msra.mxu0 0.0
    %1745 = vmatprep.subr.mxu0 0.0
    %1746 = vmatpush1.msra.mxu0 0.0
    %1747 = vmatprep.subr.mxu0 0.0
    %1748 = vmatpush1.msra.mxu0 0.0
    %1749 = vmatprep.subr.mxu0 0.0
    %1750 = vmatpush1.msra.mxu0 0.0
    %1751 = vmatprep.subr.mxu0 0.0
    %1752 = vmatpush1.msra.mxu0 0.0
    %1753 = vmatprep.subr.mxu0 0.0
    %1754 = vmatpush1.msra.mxu0 0.0
    %1755 = vmatprep.subr.mxu0 0.0
    %1756 = vmatpush1.msra.mxu0 0.0
    %1757 = vmatprep.subr.mxu0 0.0
    %1758 = vmatpush1.msra.mxu0 0.0
    %1759 = vmatprep.mubr.f32.mxu0 0.0
    %1760 = vmatmul.mubr.f32.gmra.mrb[0].mxu0 %v1690
    %v1761 = vpop.f32.mrb[0].mxu0
    %v1762 = vadd.f32 %v1688, %v1761
    %v1763 = vpop.f32.mrb[0].mxu0
    %1764 = vmatprep.mubr.f32.mxu0 0.0
    %1765 = vmatmul.mubr.f32.gmra.mrb[0].mxu0 %v1693
    %v1766 = vpop.f32.mrb[0].mxu0
    %v1767 = vadd.f32 %v1688, %v1766
    %v1768 = vpop.f32.mrb[0].mxu0
    %1769 = vdwg.mxu0
    %v1770 = vmul.f32 %v1762, 1.702
    %v1771 = vmul.f32 %v1767, 1.702
    %v1772 = vxor.u32 %v1770, 2147483648
    %v1773 = vxor.u32 %v1771, 2147483648
    %v1774 = vmul.f32 %v1772, 1.442695
    %v1775 = vpow.pop %v1774
    %v1776 = vmul.f32 %v1773, 1.442695
    %v1777 = vpow.pop %v1776
    %v1778 = vadd.f32 %v1775, 1.0
    %v1779 = vadd.f32 %v1777, 1.0
    %v1780 = vrcp.pop %v1778
    %v1781 = vmul.f32 1.0, %v1780
    %v1782 = vrcp.pop %v1779
    %v1783 = vmul.f32 1.0, %v1782
    %v1784 = vmul.f32 %v1762, %v1781
    %v1785 = vmul.f32 %v1767, %v1783
    %v1786 = vld [vmem:[%s5] sm:$0xff]
    %v1787 = vld [vmem:[%s5 + $0x8] sm:$0xff]
    %v1788 = vld [vmem:[%s5 + $0x10] sm:$0xff]
    %v1789 = vld [vmem:[%s5 + $0x18] sm:$0xff]
    %v1790 = vld [vmem:[%s5 + $0x20] sm:$0xff]
    %v1791 = vld [vmem:[%s5 + $0x28] sm:$0xff]
    %v1792 = vld [vmem:[%s5 + $0x30] sm:$0xff]
    %v1793 = vld [vmem:[%s5 + $0x38] sm:$0xff]
    %v1794 = vld [vmem:[%s5 + $0x40] sm:$0xff]
    %v1795 = vld [vmem:[%s5 + $0x48] sm:$0xff]
    %v1796 = vld [vmem:[%s5 + $0x50] sm:$0xff]
    %v1797 = vld [vmem:[%s5 + $0x58] sm:$0xff]
    %v1798 = vld [vmem:[%s5 + $0x60] sm:$0xff]
    %v1799 = vld [vmem:[%s5 + $0x68] sm:$0xff]
    %v1800 = vld [vmem:[%s5 + $0x70] sm:$0xff]
    %v1801 = vld [vmem:[%s5 + $0x78] sm:$0xff]
    %v1802 = vlaneseq
    %v1803 = vshrl.u32 %v1802, 7
    %v1804 = vsub.s32 7, %v1803
    %v1805 = vrot.slane %v53, %v1804
    %1806 = vmatprep.subr.mxu0 0.0
    %1807 = vmatpush1.msra.mxu0 %v1786
    %1808 = vmatprep.subr.mxu0 0.0
    %1809 = vmatpush1.msra.mxu0 %v1787
    %1810 = vmatprep.subr.mxu0 0.0
    %1811 = vmatpush1.msra.mxu0 %v1788
    %1812 = vmatprep.subr.mxu0 0.0
    %1813 = vmatpush1.msra.mxu0 %v1789
    %1814 = vmatprep.subr.mxu0 0.0
    %1815 = vmatpush1.msra.mxu0 %v1790
    %1816 = vmatprep.subr.mxu0 0.0
    %1817 = vmatpush1.msra.mxu0 %v1791
    %1818 = vmatprep.subr.mxu0 0.0
    %1819 = vmatpush1.msra.mxu0 %v1792
    %1820 = vmatprep.subr.mxu0 0.0
    %1821 = vmatpush1.msra.mxu0 %v1793
    %1822 = vmatprep.subr.mxu0 0.0
    %1823 = vmatpush1.msra.mxu0 %v1794
    %1824 = vmatprep.subr.mxu0 0.0
    %1825 = vmatpush1.msra.mxu0 %v1795
    %1826 = vmatprep.subr.mxu0 0.0
    %1827 = vmatpush1.msra.mxu0 %v1796
    %1828 = vmatprep.subr.mxu0 0.0
    %1829 = vmatpush1.msra.mxu0 %v1797
    %1830 = vmatprep.subr.mxu0 0.0
    %1831 = vmatpush1.msra.mxu0 %v1798
    %1832 = vmatprep.subr.mxu0 0.0
    %1833 = vmatpush1.msra.mxu0 %v1799
    %1834 = vmatprep.subr.mxu0 0.0
    %1835 = vmatpush1.msra.mxu0 %v1800
    %1836 = vmatprep.subr.mxu0 0.0
    %1837 = vmatpush1.msra.mxu0 %v1801
    %1838 = vmatprep.subr.mxu0 0.0
    %1839 = vmatpush1.msra.mxu0 0.0
    %1840 = vmatprep.subr.mxu0 0.0
    %1841 = vmatpush1.msra.mxu0 0.0
    %1842 = vmatprep.subr.mxu0 0.0
    %1843 = vmatpush1.msra.mxu0 0.0
    %1844 = vmatprep.subr.mxu0 0.0
    %1845 = vmatpush1.msra.mxu0 0.0
    %1846 = vmatprep.subr.mxu0 0.0
    %1847 = vmatpush1.msra.mxu0 0.0
    %1848 = vmatprep.subr.mxu0 0.0
    %1849 = vmatpush1.msra.mxu0 0.0
    %1850 = vmatprep.subr.mxu0 0.0
    %1851 = vmatpush1.msra.mxu0 0.0
    %1852 = vmatprep.subr.mxu0 0.0
    %1853 = vmatpush1.msra.mxu0 0.0
    %1854 = vmatprep.subr.mxu0 0.0
    %1855 = vmatpush1.msra.mxu0 0.0
    %1856 = vmatprep.subr.mxu0 0.0
    %1857 = vmatpush1.msra.mxu0 0.0
    %1858 = vmatprep.subr.mxu0 0.0
    %1859 = vmatpush1.msra.mxu0 0.0
    %1860 = vmatprep.subr.mxu0 0.0
    %1861 = vmatpush1.msra.mxu0 0.0
    %1862 = vmatprep.subr.mxu0 0.0
    %1863 = vmatpush1.msra.mxu0 0.0
    %1864 = vmatprep.subr.mxu0 0.0
    %1865 = vmatpush1.msra.mxu0 0.0
    %1866 = vmatprep.subr.mxu0 0.0
    %1867 = vmatpush1.msra.mxu0 0.0
    %1868 = vmatprep.subr.mxu0 0.0
    %1869 = vmatpush1.msra.mxu0 0.0
    %1870 = vmatprep.mubr.f32.mxu0 0.0
    %1871 = vmatmul.mubr.f32.gmra.mrb[0].mxu0 %v1784
    %v1872 = vpop.f32.mrb[0].mxu0
    %v1873 = vadd.f32 %v1805, %v1872
    %v1874 = vpop.f32.mrb[0].mxu0
    %1875 = vmatprep.mubr.f32.mxu0 0.0
    %1876 = vmatmul.mubr.f32.gmra.mrb[0].mxu0 %v1785
    %v1877 = vpop.f32.mrb[0].mxu0
    %v1878 = vadd.f32 %v1805, %v1877
    %v1879 = vpop.f32.mrb[0].mxu0
    %1880 = vdwg.mxu0
    %v1881 = vadd.f32 %v1641, %v1873
    %v1882 = vadd.f32 %v1642, %v1878
    %s1883 = scalar_lea.vmem %s6, 8
    %v1884 = vld [vmem:[%s1883] sm:$0xff]
    %v1885 = vsel %vm54, %v1881, 0.0
    %1886 = vadd.xlane.f32.xlu0 %v1885
    %v1887 = vpop.xlane.xlu0 %1886
    %v1888 = vsel %vm54, %v1882, 0.0
    %1889 = vadd.xlane.f32.xlu0 %v1888
    %v1890 = vpop.xlane.xlu0 %1889
    %v1891 = vmul.f32 %v1887, %v61
    %v1892 = vmul.f32 %v1890, %v61
    %v1893 = vsub.f32 %v1881, %v1891
    %v1894 = vsub.f32 %v1882, %v1892
    %v1895 = vmul.f32 %v1893, %v1893
    %v1896 = vmul.f32 %v1894, %v1894
    %v1897 = vsel %vm54, %v1895, 0.0
    %1898 = vadd.xlane.f32.xlu0 %v1897
    %v1899 = vpop.xlane.xlu0 %1898
    %v1900 = vsel %vm54, %v1896, 0.0
    %1901 = vadd.xlane.f32.xlu0 %v1900
    %v1902 = vpop.xlane.xlu0 %1901
    %v1903 = vmul.f32 %v1899, %v61
    %v1904 = vmul.f32 %v1902, %v61
    %v1905 = vadd.f32 %v1903, 1e-05
    %v1906 = vadd.f32 %v1904, 1e-05
    %v1907 = vrsqrt.pop %v1905
    %v1908 = vrsqrt.pop %v1906
    %v1909 = vmul.f32 %v1893, %v1907
    %v1910 = vmul.f32 %v1894, %v1908
    %v1911 = vlaneseq
    %v1912 = vshrl.u32 %v1911, 7
    %v1913 = vsub.s32 0, %v1912
    %v1914 = vrot.slane %v1884, %v1913
    %v1915 = vmul.f32 %v1909, %v1914
    %v1916 = vmul.f32 %v1910, %v1914
    %v1917 = vlaneseq
    %v1918 = vshrl.u32 %v1917, 7
    %v1919 = vsub.s32 1, %v1918
    %v1920 = vrot.slane %v1884, %v1919
    %v1921 = vadd.f32 %v1915, %v1920
    %v1922 = vadd.f32 %v1916, %v1920
    %s1923 = scalar_lea.vmem %s2, 32
    %v1924 = vld [vmem:[%s1923] sm:$0xff]
    %v1925 = vld [vmem:[%s1923 + $0x8] sm:$0xff]
    %v1926 = vld [vmem:[%s1923 + $0x10] sm:$0xff]
    %v1927 = vld [vmem:[%s1923 + $0x18] sm:$0xff]
    %v1928 = vlaneseq
    %v1929 = vshrl.u32 %v1928, 7
    %v1930 = vsub.s32 2, %v1929
    %v1931 = vrot.slane %v1884, %v1930
    %v1933 = vsel %vm54, %v1921, 0
    %v1936 = vsel %vm54, %v1922, 0
    %1938 = vmatprep.subr.mxu0 0.0
    %1939 = vmatpush1.msra.mxu0 %v1924
    %1940 = vmatprep.subr.mxu0 0.0
    %1941 = vmatpush1.msra.mxu0 %v1925
    %1942 = vmatprep.subr.mxu0 0.0
    %1943 = vmatpush1.msra.mxu0 %v1926
    %1944 = vmatprep.subr.mxu0 0.0
    %1945 = vmatpush1.msra.mxu0 %v1927
    %1946 = vmatprep.subr.mxu0 0.0
    %1947 = vmatpush1.msra.mxu0 0.0
    %1948 = vmatprep.subr.mxu0 0.0
    %1949 = vmatpush1.msra.mxu0 0.0
    %1950 = vmatprep.subr.mxu0 0.0
    %1951 = vmatpush1.msra.mxu0 0.0
    %1952 = vmatprep.subr.mxu0 0.0
    %1953 = vmatpush1.msra.mxu0 0.0
    %1954 = vmatprep.subr.mxu0 0.0
    %1955 = vmatpush1.msra.mxu0 0.0
    %1956 = vmatprep.subr.mxu0 0.0
    %1957 = vmatpush1.msra.mxu0 0.0
    %1958 = vmatprep.subr.mxu0 0.0
    %1959 = vmatpush1.msra.mxu0 0.0
    %1960 = vmatprep.subr.mxu0 0.0
    %1961 = vmatpush1.msra.mxu0 0.0
    %1962 = vmatprep.subr.mxu0 0.0
    %1963 = vmatpush1.msra.mxu0 0.0
    %1964 = vmatprep.subr.mxu0 0.0
    %1965 = vmatpush1.msra.mxu0 0.0
    %1966 = vmatprep.subr.mxu0 0.0
    %1967 = vmatpush1.msra.mxu0 0.0
    %1968 = vmatprep.subr.mxu0 0.0
    %1969 = vmatpush1.msra.mxu0 0.0
    %1970 = vmatprep.subr.mxu0 0.0
    %1971 = vmatpush1.msra.mxu0 0.0
    %1972 = vmatprep.subr.mxu0 0.0
    %1973 = vmatpush1.msra.mxu0 0.0
    %1974 = vmatprep.subr.mxu0 0.0
    %1975 = vmatpush1.msra.mxu0 0.0
    %1976 = vmatprep.subr.mxu0 0.0
    %1977 = vmatpush1.msra.mxu0 0.0
    %1978 = vmatprep.subr.mxu0 0.0
    %1979 = vmatpush1.msra.mxu0 0.0
    %1980 = vmatprep.subr.mxu0 0.0
    %1981 = vmatpush1.msra.mxu0 0.0
    %1982 = vmatprep.subr.mxu0 0.0
    %1983 = vmatpush1.msra.mxu0 0.0
    %1984 = vmatprep.subr.mxu0 0.0
    %1985 = vmatpush1.msra.mxu0 0.0
    %1986 = vmatprep.subr.mxu0 0.0
    %1987 = vmatpush1.msra.mxu0 0.0
    %1988 = vmatprep.subr.mxu0 0.0
    %1989 = vmatpush1.msra.mxu0 0.0
    %1990 = vmatprep.subr.mxu0 0.0
    %1991 = vmatpush1.msra.mxu0 0.0
    %1992 = vmatprep.subr.mxu0 0.0
    %1993 = vmatpush1.msra.mxu0 0.0
    %1994 = vmatprep.subr.mxu0 0.0
    %1995 = vmatpush1.msra.mxu0 0.0
    %1996 = vmatprep.subr.mxu0 0.0
    %1997 = vmatpush1.msra.mxu0 0.0
    %1998 = vmatprep.subr.mxu0 0.0
    %1999 = vmatpush1.msra.mxu0 0.0
    %2000 = vmatprep.subr.mxu0 0.0
    %2001 = vmatpush1.msra.mxu0 0.0
    %2002 = vmatprep.mubr.f32.mxu0 0.0
    %2003 = vmatmul.mubr.f32.gmra.mrb[0].mxu0 %v1933
    %v2004 = vpop.f32.mrb[0].mxu0
    %v2005 = vadd.f32 %v1931, %v2004
    %v2006 = vpop.f32.mrb[0].mxu0
    %2007 = vmatprep.mubr.f32.mxu0 0.0
    %2008 = vmatmul.mubr.f32.gmra.mrb[0].mxu0 %v1936
    %v2009 = vpop.f32.mrb[0].mxu0
    %v2010 = vadd.f32 %v1931, %v2009
    %v2011 = vpop.f32.mrb[0].mxu0
    %2012 = vdwg.mxu0
    %2014 = vrot.lane.b32.xlu0 %v2005, 96
    %v2015 = vpop.permute.xlu0 %2014
    %v2016 = vsel %vm186, %v2005, 0
    %v2018 = vsel %vm186, %v2015, 0
    %2020 = vmatprep.subr.mxu0 0.0
    %2021 = vmatpush1.xpose.msra.mxu0 %v2018
    %2022 = vmatprep.subr.mxu0 0.0
    %2023 = vmatpush1.xpose.msra.mxu0 0.0
    %2024 = vmatprep.subr.mxu0 0.0
    %2025 = vmatpush1.xpose.msra.mxu0 0.0
    %2026 = vmatprep.subr.mxu0 0.0
    %2027 = vmatpush1.xpose.msra.mxu0 0.0
    %2028 = vmatprep.subr.mxu0 0.0
    %2029 = vmatpush1.xpose.msra.mxu0 0.0
    %2030 = vmatprep.subr.mxu0 0.0
    %2031 = vmatpush1.xpose.msra.mxu0 0.0
    %2032 = vmatprep.subr.mxu0 0.0
    %2033 = vmatpush1.xpose.msra.mxu0 0.0
    %2034 = vmatprep.subr.mxu0 0.0
    %2035 = vmatpush1.xpose.msra.mxu0 0.0
    %2036 = vmatprep.subr.mxu0 0.0
    %2037 = vmatpush1.xpose.msra.mxu0 0.0
    %2038 = vmatprep.subr.mxu0 0.0
    %2039 = vmatpush1.xpose.msra.mxu0 0.0
    %2040 = vmatprep.subr.mxu0 0.0
    %2041 = vmatpush1.xpose.msra.mxu0 0.0
    %2042 = vmatprep.subr.mxu0 0.0
    %2043 = vmatpush1.xpose.msra.mxu0 0.0
    %2044 = vmatprep.subr.mxu0 0.0
    %2045 = vmatpush1.xpose.msra.mxu0 0.0
    %2046 = vmatprep.subr.mxu0 0.0
    %2047 = vmatpush1.xpose.msra.mxu0 0.0
    %2048 = vmatprep.subr.mxu0 0.0
    %2049 = vmatpush1.xpose.msra.mxu0 0.0
    %2050 = vmatprep.subr.mxu0 0.0
    %2051 = vmatpush1.xpose.msra.mxu0 0.0
    %2052 = vmatprep.subr.mxu0 0.0
    %2053 = vmatpush1.xpose.msra.mxu0 0.0
    %2054 = vmatprep.subr.mxu0 0.0
    %2055 = vmatpush1.xpose.msra.mxu0 0.0
    %2056 = vmatprep.subr.mxu0 0.0
    %2057 = vmatpush1.xpose.msra.mxu0 0.0
    %2058 = vmatprep.subr.mxu0 0.0
    %2059 = vmatpush1.xpose.msra.mxu0 0.0
    %2060 = vmatprep.subr.mxu0 0.0
    %2061 = vmatpush1.xpose.msra.mxu0 0.0
    %2062 = vmatprep.subr.mxu0 0.0
    %2063 = vmatpush1.xpose.msra.mxu0 0.0
    %2064 = vmatprep.subr.mxu0 0.0
    %2065 = vmatpush1.xpose.msra.mxu0 0.0
    %2066 = vmatprep.subr.mxu0 0.0
    %2067 = vmatpush1.xpose.msra.mxu0 0.0
    %2068 = vmatprep.subr.mxu0 0.0
    %2069 = vmatpush1.xpose.msra.mxu0 0.0
    %2070 = vmatprep.subr.mxu0 0.0
    %2071 = vmatpush1.xpose.msra.mxu0 0.0
    %2072 = vmatprep.subr.mxu0 0.0
    %2073 = vmatpush1.xpose.msra.mxu0 0.0
    %2074 = vmatprep.subr.mxu0 0.0
    %2075 = vmatpush1.xpose.msra.mxu0 0.0
    %2076 = vmatprep.subr.mxu0 0.0
    %2077 = vmatpush1.xpose.msra.mxu0 0.0
    %2078 = vmatprep.subr.mxu0 0.0
    %2079 = vmatpush1.xpose.msra.mxu0 0.0
    %2080 = vmatprep.subr.mxu0 0.0
    %2081 = vmatpush1.xpose.msra.mxu0 0.0
    %2082 = vmatprep.subr.mxu0 0.0
    %2083 = vmatpush1.xpose.msra.mxu0 0.0
    %2084 = vmatprep.mubr.f32.mxu0 0.0
    %2085 = vmatmul.mubr.f32.gmra.mrb[0].mxu0 %v2016
    %v2086 = vpop.f32.mrb[0].mxu0
    %v2087 = vadd.f32 0.0, %v2086
    %v2088 = vpop.f32.mrb[0].mxu0
    %2089 = vdwg.mxu0
    %2091 = vrot.lane.b32.xlu0 %v2010, 96
    %v2092 = vpop.permute.xlu0 %2091
    %v2093 = vsel %vm186, %v2010, 0
    %v2095 = vsel %vm186, %v2092, 0
    %2097 = vmatprep.subr.mxu0 0.0
    %2098 = vmatpush1.xpose.msra.mxu0 %v2095
    %2099 = vmatprep.subr.mxu0 0.0
    %2100 = vmatpush1.xpose.msra.mxu0 0.0
    %2101 = vmatprep.subr.mxu0 0.0
    %2102 = vmatpush1.xpose.msra.mxu0 0.0
    %2103 = vmatprep.subr.mxu0 0.0
    %2104 = vmatpush1.xpose.msra.mxu0 0.0
    %2105 = vmatprep.subr.mxu0 0.0
    %2106 = vmatpush1.xpose.msra.mxu0 0.0
    %2107 = vmatprep.subr.mxu0 0.0
    %2108 = vmatpush1.xpose.msra.mxu0 0.0
    %2109 = vmatprep.subr.mxu0 0.0
    %2110 = vmatpush1.xpose.msra.mxu0 0.0
    %2111 = vmatprep.subr.mxu0 0.0
    %2112 = vmatpush1.xpose.msra.mxu0 0.0
    %2113 = vmatprep.subr.mxu0 0.0
    %2114 = vmatpush1.xpose.msra.mxu0 0.0
    %2115 = vmatprep.subr.mxu0 0.0
    %2116 = vmatpush1.xpose.msra.mxu0 0.0
    %2117 = vmatprep.subr.mxu0 0.0
    %2118 = vmatpush1.xpose.msra.mxu0 0.0
    %2119 = vmatprep.subr.mxu0 0.0
    %2120 = vmatpush1.xpose.msra.mxu0 0.0
    %2121 = vmatprep.subr.mxu0 0.0
    %2122 = vmatpush1.xpose.msra.mxu0 0.0
    %2123 = vmatprep.subr.mxu0 0.0
    %2124 = vmatpush1.xpose.msra.mxu0 0.0
    %2125 = vmatprep.subr.mxu0 0.0
    %2126 = vmatpush1.xpose.msra.mxu0 0.0
    %2127 = vmatprep.subr.mxu0 0.0
    %2128 = vmatpush1.xpose.msra.mxu0 0.0
    %2129 = vmatprep.subr.mxu0 0.0
    %2130 = vmatpush1.xpose.msra.mxu0 0.0
    %2131 = vmatprep.subr.mxu0 0.0
    %2132 = vmatpush1.xpose.msra.mxu0 0.0
    %2133 = vmatprep.subr.mxu0 0.0
    %2134 = vmatpush1.xpose.msra.mxu0 0.0
    %2135 = vmatprep.subr.mxu0 0.0
    %2136 = vmatpush1.xpose.msra.mxu0 0.0
    %2137 = vmatprep.subr.mxu0 0.0
    %2138 = vmatpush1.xpose.msra.mxu0 0.0
    %2139 = vmatprep.subr.mxu0 0.0
    %2140 = vmatpush1.xpose.msra.mxu0 0.0
    %2141 = vmatprep.subr.mxu0 0.0
    %2142 = vmatpush1.xpose.msra.mxu0 0.0
    %2143 = vmatprep.subr.mxu0 0.0
    %2144 = vmatpush1.xpose.msra.mxu0 0.0
    %2145 = vmatprep.subr.mxu0 0.0
    %2146 = vmatpush1.xpose.msra.mxu0 0.0
    %2147 = vmatprep.subr.mxu0 0.0
    %2148 = vmatpush1.xpose.msra.mxu0 0.0
    %2149 = vmatprep.subr.mxu0 0.0
    %2150 = vmatpush1.xpose.msra.mxu0 0.0
    %2151 = vmatprep.subr.mxu0 0.0
    %2152 = vmatpush1.xpose.msra.mxu0 0.0
    %2153 = vmatprep.subr.mxu0 0.0
    %2154 = vmatpush1.xpose.msra.mxu0 0.0
    %2155 = vmatprep.subr.mxu0 0.0
    %2156 = vmatpush1.xpose.msra.mxu0 0.0
    %2157 = vmatprep.subr.mxu0 0.0
    %2158 = vmatpush1.xpose.msra.mxu0 0.0
    %2159 = vmatprep.subr.mxu0 0.0
    %2160 = vmatpush1.xpose.msra.mxu0 0.0
    %2161 = vmatprep.mubr.f32.mxu0 0.0
    %2162 = vmatmul.mubr.f32.gmra.mrb[0].mxu0 %v2093
    %v2163 = vpop.f32.mrb[0].mxu0
    %v2164 = vadd.f32 0.0, %v2163
    %v2165 = vpop.f32.mrb[0].mxu0
    %2166 = vdwg.mxu0
    %v2167 = vmul.f32 %v2087, 0.35355338
    %v2168 = vmul.f32 %v2164, 0.35355338
    %v2169 = vsel %vm341, %v2167, -1e+09
    %v2170 = vsel %vm341, %v2168, -1e+09
    %v2171 = vsel %vm186, %v2169, -inf
    %2172 = vmax.xlane.f32.xlu0 %v2171
    %v2173 = vpop.xlane.xlu0 %2172
    %v2174 = vsel %vm186, %v2170, -inf
    %2175 = vmax.xlane.f32.xlu0 %v2174
    %v2176 = vpop.xlane.xlu0 %2175
    %v2177 = vsub.f32 %v2169, %v2173
    %v2178 = vsub.f32 %v2170, %v2176
    %v2179 = vmul.f32 %v2177, 1.442695
    %v2180 = vpow.pop %v2179
    %v2181 = vmul.f32 %v2178, 1.442695
    %v2182 = vpow.pop %v2181
    %v2183 = vsel %vm186, %v2180, 0.0
    %2184 = vadd.xlane.f32.xlu0 %v2183
    %v2185 = vpop.xlane.xlu0 %2184
    %v2186 = vsel %vm186, %v2182, 0.0
    %2187 = vadd.xlane.f32.xlu0 %v2186
    %v2188 = vpop.xlane.xlu0 %2187
    %v2189 = vrcp.pop %v2185
    %v2190 = vrcp.pop %v2188
    %v2191 = vmul.f32 %v2180, %v2189
    %v2192 = vmul.f32 %v2182, %v2190
    %2193 = vrot.lane.b32.xlu0 %v2005, 64
    %v2194 = vpop.permute.xlu0 %2193
    %v2197 = vsel %vm186, %v2191, 0
    %2199 = vmatprep.subr.mxu0 0.0
    %2200 = vmatpush1.msra.mxu0 %v2194
    %2201 = vmatprep.subr.mxu0 0.0
    %2202 = vmatpush1.msra.mxu0 0.0
    %2203 = vmatprep.subr.mxu0 0.0
    %2204 = vmatpush1.msra.mxu0 0.0
    %2205 = vmatprep.subr.mxu0 0.0
    %2206 = vmatpush1.msra.mxu0 0.0
    %2207 = vmatprep.subr.mxu0 0.0
    %2208 = vmatpush1.msra.mxu0 0.0
    %2209 = vmatprep.subr.mxu0 0.0
    %2210 = vmatpush1.msra.mxu0 0.0
    %2211 = vmatprep.subr.mxu0 0.0
    %2212 = vmatpush1.msra.mxu0 0.0
    %2213 = vmatprep.subr.mxu0 0.0
    %2214 = vmatpush1.msra.mxu0 0.0
    %2215 = vmatprep.subr.mxu0 0.0
    %2216 = vmatpush1.msra.mxu0 0.0
    %2217 = vmatprep.subr.mxu0 0.0
    %2218 = vmatpush1.msra.mxu0 0.0
    %2219 = vmatprep.subr.mxu0 0.0
    %2220 = vmatpush1.msra.mxu0 0.0
    %2221 = vmatprep.subr.mxu0 0.0
    %2222 = vmatpush1.msra.mxu0 0.0
    %2223 = vmatprep.subr.mxu0 0.0
    %2224 = vmatpush1.msra.mxu0 0.0
    %2225 = vmatprep.subr.mxu0 0.0
    %2226 = vmatpush1.msra.mxu0 0.0
    %2227 = vmatprep.subr.mxu0 0.0
    %2228 = vmatpush1.msra.mxu0 0.0
    %2229 = vmatprep.subr.mxu0 0.0
    %2230 = vmatpush1.msra.mxu0 0.0
    %2231 = vmatprep.subr.mxu0 0.0
    %2232 = vmatpush1.msra.mxu0 0.0
    %2233 = vmatprep.subr.mxu0 0.0
    %2234 = vmatpush1.msra.mxu0 0.0
    %2235 = vmatprep.subr.mxu0 0.0
    %2236 = vmatpush1.msra.mxu0 0.0
    %2237 = vmatprep.subr.mxu0 0.0
    %2238 = vmatpush1.msra.mxu0 0.0
    %2239 = vmatprep.subr.mxu0 0.0
    %2240 = vmatpush1.msra.mxu0 0.0
    %2241 = vmatprep.subr.mxu0 0.0
    %2242 = vmatpush1.msra.mxu0 0.0
    %2243 = vmatprep.subr.mxu0 0.0
    %2244 = vmatpush1.msra.mxu0 0.0
    %2245 = vmatprep.subr.mxu0 0.0
    %2246 = vmatpush1.msra.mxu0 0.0
    %2247 = vmatprep.subr.mxu0 0.0
    %2248 = vmatpush1.msra.mxu0 0.0
    %2249 = vmatprep.subr.mxu0 0.0
    %2250 = vmatpush1.msra.mxu0 0.0
    %2251 = vmatprep.subr.mxu0 0.0
    %2252 = vmatpush1.msra.mxu0 0.0
    %2253 = vmatprep.subr.mxu0 0.0
    %2254 = vmatpush1.msra.mxu0 0.0
    %2255 = vmatprep.subr.mxu0 0.0
    %2256 = vmatpush1.msra.mxu0 0.0
    %2257 = vmatprep.subr.mxu0 0.0
    %2258 = vmatpush1.msra.mxu0 0.0
    %2259 = vmatprep.subr.mxu0 0.0
    %2260 = vmatpush1.msra.mxu0 0.0
    %2261 = vmatprep.subr.mxu0 0.0
    %2262 = vmatpush1.msra.mxu0 0.0
    %2263 = vmatprep.mubr.f32.mxu0 0.0
    %2264 = vmatmul.mubr.f32.gmra.mrb[0].mxu0 %v2197
    %v2265 = vpop.f32.mrb[0].mxu0
    %v2266 = vadd.f32 0.0, %v2265
    %v2267 = vpop.f32.mrb[0].mxu0
    %2268 = vdwg.mxu0
    %2269 = vrot.lane.b32.xlu0 %v2010, 64
    %v2270 = vpop.permute.xlu0 %2269
    %v2273 = vsel %vm186, %v2192, 0
    %2275 = vmatprep.subr.mxu0 0.0
    %2276 = vmatpush1.msra.mxu0 %v2270
    %2277 = vmatprep.subr.mxu0 0.0
    %2278 = vmatpush1.msra.mxu0 0.0
    %2279 = vmatprep.subr.mxu0 0.0
    %2280 = vmatpush1.msra.mxu0 0.0
    %2281 = vmatprep.subr.mxu0 0.0
    %2282 = vmatpush1.msra.mxu0 0.0
    %2283 = vmatprep.subr.mxu0 0.0
    %2284 = vmatpush1.msra.mxu0 0.0
    %2285 = vmatprep.subr.mxu0 0.0
    %2286 = vmatpush1.msra.mxu0 0.0
    %2287 = vmatprep.subr.mxu0 0.0
    %2288 = vmatpush1.msra.mxu0 0.0
    %2289 = vmatprep.subr.mxu0 0.0
    %2290 = vmatpush1.msra.mxu0 0.0
    %2291 = vmatprep.subr.mxu0 0.0
    %2292 = vmatpush1.msra.mxu0 0.0
    %2293 = vmatprep.subr.mxu0 0.0
    %2294 = vmatpush1.msra.mxu0 0.0
    %2295 = vmatprep.subr.mxu0 0.0
    %2296 = vmatpush1.msra.mxu0 0.0
    %2297 = vmatprep.subr.mxu0 0.0
    %2298 = vmatpush1.msra.mxu0 0.0
    %2299 = vmatprep.subr.mxu0 0.0
    %2300 = vmatpush1.msra.mxu0 0.0
    %2301 = vmatprep.subr.mxu0 0.0
    %2302 = vmatpush1.msra.mxu0 0.0
    %2303 = vmatprep.subr.mxu0 0.0
    %2304 = vmatpush1.msra.mxu0 0.0
    %2305 = vmatprep.subr.mxu0 0.0
    %2306 = vmatpush1.msra.mxu0 0.0
    %2307 = vmatprep.subr.mxu0 0.0
    %2308 = vmatpush1.msra.mxu0 0.0
    %2309 = vmatprep.subr.mxu0 0.0
    %2310 = vmatpush1.msra.mxu0 0.0
    %2311 = vmatprep.subr.mxu0 0.0
    %2312 = vmatpush1.msra.mxu0 0.0
    %2313 = vmatprep.subr.mxu0 0.0
    %2314 = vmatpush1.msra.mxu0 0.0
    %2315 = vmatprep.subr.mxu0 0.0
    %2316 = vmatpush1.msra.mxu0 0.0
    %2317 = vmatprep.subr.mxu0 0.0
    %2318 = vmatpush1.msra.mxu0 0.0
    %2319 = vmatprep.subr.mxu0 0.0
    %2320 = vmatpush1.msra.mxu0 0.0
    %2321 = vmatprep.subr.mxu0 0.0
    %2322 = vmatpush1.msra.mxu0 0.0
    %2323 = vmatprep.subr.mxu0 0.0
    %2324 = vmatpush1.msra.mxu0 0.0
    %2325 = vmatprep.subr.mxu0 0.0
    %2326 = vmatpush1.msra.mxu0 0.0
    %2327 = vmatprep.subr.mxu0 0.0
    %2328 = vmatpush1.msra.mxu0 0.0
    %2329 = vmatprep.subr.mxu0 0.0
    %2330 = vmatpush1.msra.mxu0 0.0
    %2331 = vmatprep.subr.mxu0 0.0
    %2332 = vmatpush1.msra.mxu0 0.0
    %2333 = vmatprep.subr.mxu0 0.0
    %2334 = vmatpush1.msra.mxu0 0.0
    %2335 = vmatprep.subr.mxu0 0.0
    %2336 = vmatpush1.msra.mxu0 0.0
    %2337 = vmatprep.subr.mxu0 0.0
    %2338 = vmatpush1.msra.mxu0 0.0
    %2339 = vmatprep.mubr.f32.mxu0 0.0
    %2340 = vmatmul.mubr.f32.gmra.mrb[0].mxu0 %v2273
    %v2341 = vpop.f32.mrb[0].mxu0
    %v2342 = vadd.f32 0.0, %v2341
    %v2343 = vpop.f32.mrb[0].mxu0
    %2344 = vdwg.mxu0
    %2345 = vrot.lane.b32.xlu0 %v2005, 120
    %v2346 = vpop.permute.xlu0 %2345
    %2347 = vrot.lane.b32.xlu0 %v2005, 88
    %v2348 = vpop.permute.xlu0 %2347
    %v2349 = vsel %vm186, %v2346, 0
    %v2351 = vsel %vm186, %v2348, 0
    %2353 = vmatprep.subr.mxu0 0.0
    %2354 = vmatpush1.xpose.msra.mxu0 %v2351
    %2355 = vmatprep.subr.mxu0 0.0
    %2356 = vmatpush1.xpose.msra.mxu0 0.0
    %2357 = vmatprep.subr.mxu0 0.0
    %2358 = vmatpush1.xpose.msra.mxu0 0.0
    %2359 = vmatprep.subr.mxu0 0.0
    %2360 = vmatpush1.xpose.msra.mxu0 0.0
    %2361 = vmatprep.subr.mxu0 0.0
    %2362 = vmatpush1.xpose.msra.mxu0 0.0
    %2363 = vmatprep.subr.mxu0 0.0
    %2364 = vmatpush1.xpose.msra.mxu0 0.0
    %2365 = vmatprep.subr.mxu0 0.0
    %2366 = vmatpush1.xpose.msra.mxu0 0.0
    %2367 = vmatprep.subr.mxu0 0.0
    %2368 = vmatpush1.xpose.msra.mxu0 0.0
    %2369 = vmatprep.subr.mxu0 0.0
    %2370 = vmatpush1.xpose.msra.mxu0 0.0
    %2371 = vmatprep.subr.mxu0 0.0
    %2372 = vmatpush1.xpose.msra.mxu0 0.0
    %2373 = vmatprep.subr.mxu0 0.0
    %2374 = vmatpush1.xpose.msra.mxu0 0.0
    %2375 = vmatprep.subr.mxu0 0.0
    %2376 = vmatpush1.xpose.msra.mxu0 0.0
    %2377 = vmatprep.subr.mxu0 0.0
    %2378 = vmatpush1.xpose.msra.mxu0 0.0
    %2379 = vmatprep.subr.mxu0 0.0
    %2380 = vmatpush1.xpose.msra.mxu0 0.0
    %2381 = vmatprep.subr.mxu0 0.0
    %2382 = vmatpush1.xpose.msra.mxu0 0.0
    %2383 = vmatprep.subr.mxu0 0.0
    %2384 = vmatpush1.xpose.msra.mxu0 0.0
    %2385 = vmatprep.subr.mxu0 0.0
    %2386 = vmatpush1.xpose.msra.mxu0 0.0
    %2387 = vmatprep.subr.mxu0 0.0
    %2388 = vmatpush1.xpose.msra.mxu0 0.0
    %2389 = vmatprep.subr.mxu0 0.0
    %2390 = vmatpush1.xpose.msra.mxu0 0.0
    %2391 = vmatprep.subr.mxu0 0.0
    %2392 = vmatpush1.xpose.msra.mxu0 0.0
    %2393 = vmatprep.subr.mxu0 0.0
    %2394 = vmatpush1.xpose.msra.mxu0 0.0
    %2395 = vmatprep.subr.mxu0 0.0
    %2396 = vmatpush1.xpose.msra.mxu0 0.0
    %2397 = vmatprep.subr.mxu0 0.0
    %2398 = vmatpush1.xpose.msra.mxu0 0.0
    %2399 = vmatprep.subr.mxu0 0.0
    %2400 = vmatpush1.xpose.msra.mxu0 0.0
    %2401 = vmatprep.subr.mxu0 0.0
    %2402 = vmatpush1.xpose.msra.mxu0 0.0
    %2403 = vmatprep.subr.mxu0 0.0
    %2404 = vmatpush1.xpose.msra.mxu0 0.0
    %2405 = vmatprep.subr.mxu0 0.0
    %2406 = vmatpush1.xpose.msra.mxu0 0.0
    %2407 = vmatprep.subr.mxu0 0.0
    %2408 = vmatpush1.xpose.msra.mxu0 0.0
    %2409 = vmatprep.subr.mxu0 0.0
    %2410 = vmatpush1.xpose.msra.mxu0 0.0
    %2411 = vmatprep.subr.mxu0 0.0
    %2412 = vmatpush1.xpose.msra.mxu0 0.0
    %2413 = vmatprep.subr.mxu0 0.0
    %2414 = vmatpush1.xpose.msra.mxu0 0.0
    %2415 = vmatprep.subr.mxu0 0.0
    %2416 = vmatpush1.xpose.msra.mxu0 0.0
    %2417 = vmatprep.mubr.f32.mxu0 0.0
    %2418 = vmatmul.mubr.f32.gmra.mrb[0].mxu0 %v2349
    %v2419 = vpop.f32.mrb[0].mxu0
    %v2420 = vadd.f32 0.0, %v2419
    %v2421 = vpop.f32.mrb[0].mxu0
    %2422 = vdwg.mxu0
    %2423 = vrot.lane.b32.xlu0 %v2010, 120
    %v2424 = vpop.permute.xlu0 %2423
    %2425 = vrot.lane.b32.xlu0 %v2010, 88
    %v2426 = vpop.permute.xlu0 %2425
    %v2427 = vsel %vm186, %v2424, 0
    %v2429 = vsel %vm186, %v2426, 0
    %2431 = vmatprep.subr.mxu0 0.0
    %2432 = vmatpush1.xpose.msra.mxu0 %v2429
    %2433 = vmatprep.subr.mxu0 0.0
    %2434 = vmatpush1.xpose.msra.mxu0 0.0
    %2435 = vmatprep.subr.mxu0 0.0
    %2436 = vmatpush1.xpose.msra.mxu0 0.0
    %2437 = vmatprep.subr.mxu0 0.0
    %2438 = vmatpush1.xpose.msra.mxu0 0.0
    %2439 = vmatprep.subr.mxu0 0.0
    %2440 = vmatpush1.xpose.msra.mxu0 0.0
    %2441 = vmatprep.subr.mxu0 0.0
    %2442 = vmatpush1.xpose.msra.mxu0 0.0
    %2443 = vmatprep.subr.mxu0 0.0
    %2444 = vmatpush1.xpose.msra.mxu0 0.0
    %2445 = vmatprep.subr.mxu0 0.0
    %2446 = vmatpush1.xpose.msra.mxu0 0.0
    %2447 = vmatprep.subr.mxu0 0.0
    %2448 = vmatpush1.xpose.msra.mxu0 0.0
    %2449 = vmatprep.subr.mxu0 0.0
    %2450 = vmatpush1.xpose.msra.mxu0 0.0
    %2451 = vmatprep.subr.mxu0 0.0
    %2452 = vmatpush1.xpose.msra.mxu0 0.0
    %2453 = vmatprep.subr.mxu0 0.0
    %2454 = vmatpush1.xpose.msra.mxu0 0.0
    %2455 = vmatprep.subr.mxu0 0.0
    %2456 = vmatpush1.xpose.msra.mxu0 0.0
    %2457 = vmatprep.subr.mxu0 0.0
    %2458 = vmatpush1.xpose.msra.mxu0 0.0
    %2459 = vmatprep.subr.mxu0 0.0
    %2460 = vmatpush1.xpose.msra.mxu0 0.0
    %2461 = vmatprep.subr.mxu0 0.0
    %2462 = vmatpush1.xpose.msra.mxu0 0.0
    %2463 = vmatprep.subr.mxu0 0.0
    %2464 = vmatpush1.xpose.msra.mxu0 0.0
    %2465 = vmatprep.subr.mxu0 0.0
    %2466 = vmatpush1.xpose.msra.mxu0 0.0
    %2467 = vmatprep.subr.mxu0 0.0
    %2468 = vmatpush1.xpose.msra.mxu0 0.0
    %2469 = vmatprep.subr.mxu0 0.0
    %2470 = vmatpush1.xpose.msra.mxu0 0.0
    %2471 = vmatprep.subr.mxu0 0.0
    %2472 = vmatpush1.xpose.msra.mxu0 0.0
    %2473 = vmatprep.subr.mxu0 0.0
    %2474 = vmatpush1.xpose.msra.mxu0 0.0
    %2475 = vmatprep.subr.mxu0 0.0
    %2476 = vmatpush1.xpose.msra.mxu0 0.0
    %2477 = vmatprep.subr.mxu0 0.0
    %2478 = vmatpush1.xpose.msra.mxu0 0.0
    %2479 = vmatprep.subr.mxu0 0.0
    %2480 = vmatpush1.xpose.msra.mxu0 0.0
    %2481 = vmatprep.subr.mxu0 0.0
    %2482 = vmatpush1.xpose.msra.mxu0 0.0
    %2483 = vmatprep.subr.mxu0 0.0
    %2484 = vmatpush1.xpose.msra.mxu0 0.0
    %2485 = vmatprep.subr.mxu0 0.0
    %2486 = vmatpush1.xpose.msra.mxu0 0.0
    %2487 = vmatprep.subr.mxu0 0.0
    %2488 = vmatpush1.xpose.msra.mxu0 0.0
    %2489 = vmatprep.subr.mxu0 0.0
    %2490 = vmatpush1.xpose.msra.mxu0 0.0
    %2491 = vmatprep.subr.mxu0 0.0
    %2492 = vmatpush1.xpose.msra.mxu0 0.0
    %2493 = vmatprep.subr.mxu0 0.0
    %2494 = vmatpush1.xpose.msra.mxu0 0.0
    %2495 = vmatprep.mubr.f32.mxu0 0.0
    %2496 = vmatmul.mubr.f32.gmra.mrb[0].mxu0 %v2427
    %v2497 = vpop.f32.mrb[0].mxu0
    %v2498 = vadd.f32 0.0, %v2497
    %v2499 = vpop.f32.mrb[0].mxu0
    %2500 = vdwg.mxu0
    %v2501 = vmul.f32 %v2420, 0.35355338
    %v2502 = vmul.f32 %v2498, 0.35355338
    %v2503 = vsel %vm341, %v2501, -1e+09
    %v2504 = vsel %vm341, %v2502, -1e+09
    %v2505 = vsel %vm186, %v2503, -inf
    %2506 = vmax.xlane.f32.xlu0 %v2505
    %v2507 = vpop.xlane.xlu0 %2506
    %v2508 = vsel %vm186, %v2504, -inf
    %2509 = vmax.xlane.f32.xlu0 %v2508
    %v2510 = vpop.xlane.xlu0 %2509
    %v2511 = vsub.f32 %v2503, %v2507
    %v2512 = vsub.f32 %v2504, %v2510
    %v2513 = vmul.f32 %v2511, 1.442695
    %v2514 = vpow.pop %v2513
    %v2515 = vmul.f32 %v2512, 1.442695
    %v2516 = vpow.pop %v2515
    %v2517 = vsel %vm186, %v2514, 0.0
    %2518 = vadd.xlane.f32.xlu0 %v2517
    %v2519 = vpop.xlane.xlu0 %2518
    %v2520 = vsel %vm186, %v2516, 0.0
    %2521 = vadd.xlane.f32.xlu0 %v2520
    %v2522 = vpop.xlane.xlu0 %2521
    %v2523 = vrcp.pop %v2519
    %v2524 = vrcp.pop %v2522
    %v2525 = vmul.f32 %v2514, %v2523
    %v2526 = vmul.f32 %v2516, %v2524
    %2527 = vrot.lane.b32.xlu0 %v2005, 56
    %v2528 = vpop.permute.xlu0 %2527
    %v2531 = vsel %vm186, %v2525, 0
    %2533 = vmatprep.subr.mxu0 0.0
    %2534 = vmatpush1.msra.mxu0 %v2528
    %2535 = vmatprep.subr.mxu0 0.0
    %2536 = vmatpush1.msra.mxu0 0.0
    %2537 = vmatprep.subr.mxu0 0.0
    %2538 = vmatpush1.msra.mxu0 0.0
    %2539 = vmatprep.subr.mxu0 0.0
    %2540 = vmatpush1.msra.mxu0 0.0
    %2541 = vmatprep.subr.mxu0 0.0
    %2542 = vmatpush1.msra.mxu0 0.0
    %2543 = vmatprep.subr.mxu0 0.0
    %2544 = vmatpush1.msra.mxu0 0.0
    %2545 = vmatprep.subr.mxu0 0.0
    %2546 = vmatpush1.msra.mxu0 0.0
    %2547 = vmatprep.subr.mxu0 0.0
    %2548 = vmatpush1.msra.mxu0 0.0
    %2549 = vmatprep.subr.mxu0 0.0
    %2550 = vmatpush1.msra.mxu0 0.0
    %2551 = vmatprep.subr.mxu0 0.0
    %2552 = vmatpush1.msra.mxu0 0.0
    %2553 = vmatprep.subr.mxu0 0.0
    %2554 = vmatpush1.msra.mxu0 0.0
    %2555 = vmatprep.subr.mxu0 0.0
    %2556 = vmatpush1.msra.mxu0 0.0
    %2557 = vmatprep.subr.mxu0 0.0
    %2558 = vmatpush1.msra.mxu0 0.0
    %2559 = vmatprep.subr.mxu0 0.0
    %2560 = vmatpush1.msra.mxu0 0.0
    %2561 = vmatprep.subr.mxu0 0.0
    %2562 = vmatpush1.msra.mxu0 0.0
    %2563 = vmatprep.subr.mxu0 0.0
    %2564 = vmatpush1.msra.mxu0 0.0
    %2565 = vmatprep.subr.mxu0 0.0
    %2566 = vmatpush1.msra.mxu0 0.0
    %2567 = vmatprep.subr.mxu0 0.0
    %2568 = vmatpush1.msra.mxu0 0.0
    %2569 = vmatprep.subr.mxu0 0.0
    %2570 = vmatpush1.msra.mxu0 0.0
    %2571 = vmatprep.subr.mxu0 0.0
    %2572 = vmatpush1.msra.mxu0 0.0
    %2573 = vmatprep.subr.mxu0 0.0
    %2574 = vmatpush1.msra.mxu0 0.0
    %2575 = vmatprep.subr.mxu0 0.0
    %2576 = vmatpush1.msra.mxu0 0.0
    %2577 = vmatprep.subr.mxu0 0.0
    %2578 = vmatpush1.msra.mxu0 0.0
    %2579 = vmatprep.subr.mxu0 0.0
    %2580 = vmatpush1.msra.mxu0 0.0
    %2581 = vmatprep.subr.mxu0 0.0
    %2582 = vmatpush1.msra.mxu0 0.0
    %2583 = vmatprep.subr.mxu0 0.0
    %2584 = vmatpush1.msra.mxu0 0.0
    %2585 = vmatprep.subr.mxu0 0.0
    %2586 = vmatpush1.msra.mxu0 0.0
    %2587 = vmatprep.subr.mxu0 0.0
    %2588 = vmatpush1.msra.mxu0 0.0
    %2589 = vmatprep.subr.mxu0 0.0
    %2590 = vmatpush1.msra.mxu0 0.0
    %2591 = vmatprep.subr.mxu0 0.0
    %2592 = vmatpush1.msra.mxu0 0.0
    %2593 = vmatprep.subr.mxu0 0.0
    %2594 = vmatpush1.msra.mxu0 0.0
    %2595 = vmatprep.subr.mxu0 0.0
    %2596 = vmatpush1.msra.mxu0 0.0
    %2597 = vmatprep.mubr.f32.mxu0 0.0
    %2598 = vmatmul.mubr.f32.gmra.mrb[0].mxu0 %v2531
    %v2599 = vpop.f32.mrb[0].mxu0
    %v2600 = vadd.f32 0.0, %v2599
    %v2601 = vpop.f32.mrb[0].mxu0
    %2602 = vdwg.mxu0
    %2603 = vrot.lane.b32.xlu0 %v2010, 56
    %v2604 = vpop.permute.xlu0 %2603
    %v2607 = vsel %vm186, %v2526, 0
    %2609 = vmatprep.subr.mxu0 0.0
    %2610 = vmatpush1.msra.mxu0 %v2604
    %2611 = vmatprep.subr.mxu0 0.0
    %2612 = vmatpush1.msra.mxu0 0.0
    %2613 = vmatprep.subr.mxu0 0.0
    %2614 = vmatpush1.msra.mxu0 0.0
    %2615 = vmatprep.subr.mxu0 0.0
    %2616 = vmatpush1.msra.mxu0 0.0
    %2617 = vmatprep.subr.mxu0 0.0
    %2618 = vmatpush1.msra.mxu0 0.0
    %2619 = vmatprep.subr.mxu0 0.0
    %2620 = vmatpush1.msra.mxu0 0.0
    %2621 = vmatprep.subr.mxu0 0.0
    %2622 = vmatpush1.msra.mxu0 0.0
    %2623 = vmatprep.subr.mxu0 0.0
    %2624 = vmatpush1.msra.mxu0 0.0
    %2625 = vmatprep.subr.mxu0 0.0
    %2626 = vmatpush1.msra.mxu0 0.0
    %2627 = vmatprep.subr.mxu0 0.0
    %2628 = vmatpush1.msra.mxu0 0.0
    %2629 = vmatprep.subr.mxu0 0.0
    %2630 = vmatpush1.msra.mxu0 0.0
    %2631 = vmatprep.subr.mxu0 0.0
    %2632 = vmatpush1.msra.mxu0 0.0
    %2633 = vmatprep.subr.mxu0 0.0
    %2634 = vmatpush1.msra.mxu0 0.0
    %2635 = vmatprep.subr.mxu0 0.0
    %2636 = vmatpush1.msra.mxu0 0.0
    %2637 = vmatprep.subr.mxu0 0.0
    %2638 = vmatpush1.msra.mxu0 0.0
    %2639 = vmatprep.subr.mxu0 0.0
    %2640 = vmatpush1.msra.mxu0 0.0
    %2641 = vmatprep.subr.mxu0 0.0
    %2642 = vmatpush1.msra.mxu0 0.0
    %2643 = vmatprep.subr.mxu0 0.0
    %2644 = vmatpush1.msra.mxu0 0.0
    %2645 = vmatprep.subr.mxu0 0.0
    %2646 = vmatpush1.msra.mxu0 0.0
    %2647 = vmatprep.subr.mxu0 0.0
    %2648 = vmatpush1.msra.mxu0 0.0
    %2649 = vmatprep.subr.mxu0 0.0
    %2650 = vmatpush1.msra.mxu0 0.0
    %2651 = vmatprep.subr.mxu0 0.0
    %2652 = vmatpush1.msra.mxu0 0.0
    %2653 = vmatprep.subr.mxu0 0.0
    %2654 = vmatpush1.msra.mxu0 0.0
    %2655 = vmatprep.subr.mxu0 0.0
    %2656 = vmatpush1.msra.mxu0 0.0
    %2657 = vmatprep.subr.mxu0 0.0
    %2658 = vmatpush1.msra.mxu0 0.0
    %2659 = vmatprep.subr.mxu0 0.0
    %2660 = vmatpush1.msra.mxu0 0.0
    %2661 = vmatprep.subr.mxu0 0.0
    %2662 = vmatpush1.msra.mxu0 0.0
    %2663 = vmatprep.subr.mxu0 0.0
    %2664 = vmatpush1.msra.mxu0 0.0
    %2665 = vmatprep.subr.mxu0 0.0
    %2666 = vmatpush1.msra.mxu0 0.0
    %2667 = vmatprep.subr.mxu0 0.0
    %2668 = vmatpush1.msra.mxu0 0.0
    %2669 = vmatprep.subr.mxu0 0.0
    %2670 = vmatpush1.msra.mxu0 0.0
    %2671 = vmatprep.subr.mxu0 0.0
    %2672 = vmatpush1.msra.mxu0 0.0
    %2673 = vmatprep.mubr.f32.mxu0 0.0
    %2674 = vmatmul.mubr.f32.gmra.mrb[0].mxu0 %v2607
    %v2675 = vpop.f32.mrb[0].mxu0
    %v2676 = vadd.f32 0.0, %v2675
    %v2677 = vpop.f32.mrb[0].mxu0
    %2678 = vdwg.mxu0
    %2679 = vrot.lane.b32.xlu0 %v2005, 112
    %v2680 = vpop.permute.xlu0 %2679
    %2681 = vrot.lane.b32.xlu0 %v2005, 80
    %v2682 = vpop.permute.xlu0 %2681
    %v2683 = vsel %vm186, %v2680, 0
    %v2685 = vsel %vm186, %v2682, 0
    %2687 = vmatprep.subr.mxu0 0.0
    %2688 = vmatpush1.xpose.msra.mxu0 %v2685
    %2689 = vmatprep.subr.mxu0 0.0
    %2690 = vmatpush1.xpose.msra.mxu0 0.0
    %2691 = vmatprep.subr.mxu0 0.0
    %2692 = vmatpush1.xpose.msra.mxu0 0.0
    %2693 = vmatprep.subr.mxu0 0.0
    %2694 = vmatpush1.xpose.msra.mxu0 0.0
    %2695 = vmatprep.subr.mxu0 0.0
    %2696 = vmatpush1.xpose.msra.mxu0 0.0
    %2697 = vmatprep.subr.mxu0 0.0
    %2698 = vmatpush1.xpose.msra.mxu0 0.0
    %2699 = vmatprep.subr.mxu0 0.0
    %2700 = vmatpush1.xpose.msra.mxu0 0.0
    %2701 = vmatprep.subr.mxu0 0.0
    %2702 = vmatpush1.xpose.msra.mxu0 0.0
    %2703 = vmatprep.subr.mxu0 0.0
    %2704 = vmatpush1.xpose.msra.mxu0 0.0
    %2705 = vmatprep.subr.mxu0 0.0
    %2706 = vmatpush1.xpose.msra.mxu0 0.0
    %2707 = vmatprep.subr.mxu0 0.0
    %2708 = vmatpush1.xpose.msra.mxu0 0.0
    %2709 = vmatprep.subr.mxu0 0.0
    %2710 = vmatpush1.xpose.msra.mxu0 0.0
    %2711 = vmatprep.subr.mxu0 0.0
    %2712 = vmatpush1.xpose.msra.mxu0 0.0
    %2713 = vmatprep.subr.mxu0 0.0
    %2714 = vmatpush1.xpose.msra.mxu0 0.0
    %2715 = vmatprep.subr.mxu0 0.0
    %2716 = vmatpush1.xpose.msra.mxu0 0.0
    %2717 = vmatprep.subr.mxu0 0.0
    %2718 = vmatpush1.xpose.msra.mxu0 0.0
    %2719 = vmatprep.subr.mxu0 0.0
    %2720 = vmatpush1.xpose.msra.mxu0 0.0
    %2721 = vmatprep.subr.mxu0 0.0
    %2722 = vmatpush1.xpose.msra.mxu0 0.0
    %2723 = vmatprep.subr.mxu0 0.0
    %2724 = vmatpush1.xpose.msra.mxu0 0.0
    %2725 = vmatprep.subr.mxu0 0.0
    %2726 = vmatpush1.xpose.msra.mxu0 0.0
    %2727 = vmatprep.subr.mxu0 0.0
    %2728 = vmatpush1.xpose.msra.mxu0 0.0
    %2729 = vmatprep.subr.mxu0 0.0
    %2730 = vmatpush1.xpose.msra.mxu0 0.0
    %2731 = vmatprep.subr.mxu0 0.0
    %2732 = vmatpush1.xpose.msra.mxu0 0.0
    %2733 = vmatprep.subr.mxu0 0.0
    %2734 = vmatpush1.xpose.msra.mxu0 0.0
    %2735 = vmatprep.subr.mxu0 0.0
    %2736 = vmatpush1.xpose.msra.mxu0 0.0
    %2737 = vmatprep.subr.mxu0 0.0
    %2738 = vmatpush1.xpose.msra.mxu0 0.0
    %2739 = vmatprep.subr.mxu0 0.0
    %2740 = vmatpush1.xpose.msra.mxu0 0.0
    %2741 = vmatprep.subr.mxu0 0.0
    %2742 = vmatpush1.xpose.msra.mxu0 0.0
    %2743 = vmatprep.subr.mxu0 0.0
    %2744 = vmatpush1.xpose.msra.mxu0 0.0
    %2745 = vmatprep.subr.mxu0 0.0
    %2746 = vmatpush1.xpose.msra.mxu0 0.0
    %2747 = vmatprep.subr.mxu0 0.0
    %2748 = vmatpush1.xpose.msra.mxu0 0.0
    %2749 = vmatprep.subr.mxu0 0.0
    %2750 = vmatpush1.xpose.msra.mxu0 0.0
    %2751 = vmatprep.mubr.f32.mxu0 0.0
    %2752 = vmatmul.mubr.f32.gmra.mrb[0].mxu0 %v2683
    %v2753 = vpop.f32.mrb[0].mxu0
    %v2754 = vadd.f32 0.0, %v2753
    %v2755 = vpop.f32.mrb[0].mxu0
    %2756 = vdwg.mxu0
    %2757 = vrot.lane.b32.xlu0 %v2010, 112
    %v2758 = vpop.permute.xlu0 %2757
    %2759 = vrot.lane.b32.xlu0 %v2010, 80
    %v2760 = vpop.permute.xlu0 %2759
    %v2761 = vsel %vm186, %v2758, 0
    %v2763 = vsel %vm186, %v2760, 0
    %2765 = vmatprep.subr.mxu0 0.0
    %2766 = vmatpush1.xpose.msra.mxu0 %v2763
    %2767 = vmatprep.subr.mxu0 0.0
    %2768 = vmatpush1.xpose.msra.mxu0 0.0
    %2769 = vmatprep.subr.mxu0 0.0
    %2770 = vmatpush1.xpose.msra.mxu0 0.0
    %2771 = vmatprep.subr.mxu0 0.0
    %2772 = vmatpush1.xpose.msra.mxu0 0.0
    %2773 = vmatprep.subr.mxu0 0.0
    %2774 = vmatpush1.xpose.msra.mxu0 0.0
    %2775 = vmatprep.subr.mxu0 0.0
    %2776 = vmatpush1.xpose.msra.mxu0 0.0
    %2777 = vmatprep.subr.mxu0 0.0
    %2778 = vmatpush1.xpose.msra.mxu0 0.0
    %2779 = vmatprep.subr.mxu0 0.0
    %2780 = vmatpush1.xpose.msra.mxu0 0.0
    %2781 = vmatprep.subr.mxu0 0.0
    %2782 = vmatpush1.xpose.msra.mxu0 0.0
    %2783 = vmatprep.subr.mxu0 0.0
    %2784 = vmatpush1.xpose.msra.mxu0 0.0
    %2785 = vmatprep.subr.mxu0 0.0
    %2786 = vmatpush1.xpose.msra.mxu0 0.0
    %2787 = vmatprep.subr.mxu0 0.0
    %2788 = vmatpush1.xpose.msra.mxu0 0.0
    %2789 = vmatprep.subr.mxu0 0.0
    %2790 = vmatpush1.xpose.msra.mxu0 0.0
    %2791 = vmatprep.subr.mxu0 0.0
    %2792 = vmatpush1.xpose.msra.mxu0 0.0
    %2793 = vmatprep.subr.mxu0 0.0
    %2794 = vmatpush1.xpose.msra.mxu0 0.0
    %2795 = vmatprep.subr.mxu0 0.0
    %2796 = vmatpush1.xpose.msra.mxu0 0.0
    %2797 = vmatprep.subr.mxu0 0.0
    %2798 = vmatpush1.xpose.msra.mxu0 0.0
    %2799 = vmatprep.subr.mxu0 0.0
    %2800 = vmatpush1.xpose.msra.mxu0 0.0
    %2801 = vmatprep.subr.mxu0 0.0
    %2802 = vmatpush1.xpose.msra.mxu0 0.0
    %2803 = vmatprep.subr.mxu0 0.0
    %2804 = vmatpush1.xpose.msra.mxu0 0.0
    %2805 = vmatprep.subr.mxu0 0.0
    %2806 = vmatpush1.xpose.msra.mxu0 0.0
    %2807 = vmatprep.subr.mxu0 0.0
    %2808 = vmatpush1.xpose.msra.mxu0 0.0
    %2809 = vmatprep.subr.mxu0 0.0
    %2810 = vmatpush1.xpose.msra.mxu0 0.0
    %2811 = vmatprep.subr.mxu0 0.0
    %2812 = vmatpush1.xpose.msra.mxu0 0.0
    %2813 = vmatprep.subr.mxu0 0.0
    %2814 = vmatpush1.xpose.msra.mxu0 0.0
    %2815 = vmatprep.subr.mxu0 0.0
    %2816 = vmatpush1.xpose.msra.mxu0 0.0
    %2817 = vmatprep.subr.mxu0 0.0
    %2818 = vmatpush1.xpose.msra.mxu0 0.0
    %2819 = vmatprep.subr.mxu0 0.0
    %2820 = vmatpush1.xpose.msra.mxu0 0.0
    %2821 = vmatprep.subr.mxu0 0.0
    %2822 = vmatpush1.xpose.msra.mxu0 0.0
    %2823 = vmatprep.subr.mxu0 0.0
    %2824 = vmatpush1.xpose.msra.mxu0 0.0
    %2825 = vmatprep.subr.mxu0 0.0
    %2826 = vmatpush1.xpose.msra.mxu0 0.0
    %2827 = vmatprep.subr.mxu0 0.0
    %2828 = vmatpush1.xpose.msra.mxu0 0.0
    %2829 = vmatprep.mubr.f32.mxu0 0.0
    %2830 = vmatmul.mubr.f32.gmra.mrb[0].mxu0 %v2761
    %v2831 = vpop.f32.mrb[0].mxu0
    %v2832 = vadd.f32 0.0, %v2831
    %v2833 = vpop.f32.mrb[0].mxu0
    %2834 = vdwg.mxu0
    %v2835 = vmul.f32 %v2754, 0.35355338
    %v2836 = vmul.f32 %v2832, 0.35355338
    %v2837 = vsel %vm341, %v2835, -1e+09
    %v2838 = vsel %vm341, %v2836, -1e+09
    %v2839 = vsel %vm186, %v2837, -inf
    %2840 = vmax.xlane.f32.xlu0 %v2839
    %v2841 = vpop.xlane.xlu0 %2840
    %v2842 = vsel %vm186, %v2838, -inf
    %2843 = vmax.xlane.f32.xlu0 %v2842
    %v2844 = vpop.xlane.xlu0 %2843
    %v2845 = vsub.f32 %v2837, %v2841
    %v2846 = vsub.f32 %v2838, %v2844
    %v2847 = vmul.f32 %v2845, 1.442695
    %v2848 = vpow.pop %v2847
    %v2849 = vmul.f32 %v2846, 1.442695
    %v2850 = vpow.pop %v2849
    %v2851 = vsel %vm186, %v2848, 0.0
    %2852 = vadd.xlane.f32.xlu0 %v2851
    %v2853 = vpop.xlane.xlu0 %2852
    %v2854 = vsel %vm186, %v2850, 0.0
    %2855 = vadd.xlane.f32.xlu0 %v2854
    %v2856 = vpop.xlane.xlu0 %2855
    %v2857 = vrcp.pop %v2853
    %v2858 = vrcp.pop %v2856
    %v2859 = vmul.f32 %v2848, %v2857
    %v2860 = vmul.f32 %v2850, %v2858
    %2861 = vrot.lane.b32.xlu0 %v2005, 48
    %v2862 = vpop.permute.xlu0 %2861
    %v2865 = vsel %vm186, %v2859, 0
    %2867 = vmatprep.subr.mxu0 0.0
    %2868 = vmatpush1.msra.mxu0 %v2862
    %2869 = vmatprep.subr.mxu0 0.0
    %2870 = vmatpush1.msra.mxu0 0.0
    %2871 = vmatprep.subr.mxu0 0.0
    %2872 = vmatpush1.msra.mxu0 0.0
    %2873 = vmatprep.subr.mxu0 0.0
    %2874 = vmatpush1.msra.mxu0 0.0
    %2875 = vmatprep.subr.mxu0 0.0
    %2876 = vmatpush1.msra.mxu0 0.0
    %2877 = vmatprep.subr.mxu0 0.0
    %2878 = vmatpush1.msra.mxu0 0.0
    %2879 = vmatprep.subr.mxu0 0.0
    %2880 = vmatpush1.msra.mxu0 0.0
    %2881 = vmatprep.subr.mxu0 0.0
    %2882 = vmatpush1.msra.mxu0 0.0
    %2883 = vmatprep.subr.mxu0 0.0
    %2884 = vmatpush1.msra.mxu0 0.0
    %2885 = vmatprep.subr.mxu0 0.0
    %2886 = vmatpush1.msra.mxu0 0.0
    %2887 = vmatprep.subr.mxu0 0.0
    %2888 = vmatpush1.msra.mxu0 0.0
    %2889 = vmatprep.subr.mxu0 0.0
    %2890 = vmatpush1.msra.mxu0 0.0
    %2891 = vmatprep.subr.mxu0 0.0
    %2892 = vmatpush1.msra.mxu0 0.0
    %2893 = vmatprep.subr.mxu0 0.0
    %2894 = vmatpush1.msra.mxu0 0.0
    %2895 = vmatprep.subr.mxu0 0.0
    %2896 = vmatpush1.msra.mxu0 0.0
    %2897 = vmatprep.subr.mxu0 0.0
    %2898 = vmatpush1.msra.mxu0 0.0
    %2899 = vmatprep.subr.mxu0 0.0
    %2900 = vmatpush1.msra.mxu0 0.0
    %2901 = vmatprep.subr.mxu0 0.0
    %2902 = vmatpush1.msra.mxu0 0.0
    %2903 = vmatprep.subr.mxu0 0.0
    %2904 = vmatpush1.msra.mxu0 0.0
    %2905 = vmatprep.subr.mxu0 0.0
    %2906 = vmatpush1.msra.mxu0 0.0
    %2907 = vmatprep.subr.mxu0 0.0
    %2908 = vmatpush1.msra.mxu0 0.0
    %2909 = vmatprep.subr.mxu0 0.0
    %2910 = vmatpush1.msra.mxu0 0.0
    %2911 = vmatprep.subr.mxu0 0.0
    %2912 = vmatpush1.msra.mxu0 0.0
    %2913 = vmatprep.subr.mxu0 0.0
    %2914 = vmatpush1.msra.mxu0 0.0
    %2915 = vmatprep.subr.mxu0 0.0
    %2916 = vmatpush1.msra.mxu0 0.0
    %2917 = vmatprep.subr.mxu0 0.0
    %2918 = vmatpush1.msra.mxu0 0.0
    %2919 = vmatprep.subr.mxu0 0.0
    %2920 = vmatpush1.msra.mxu0 0.0
    %2921 = vmatprep.subr.mxu0 0.0
    %2922 = vmatpush1.msra.mxu0 0.0
    %2923 = vmatprep.subr.mxu0 0.0
    %2924 = vmatpush1.msra.mxu0 0.0
    %2925 = vmatprep.subr.mxu0 0.0
    %2926 = vmatpush1.msra.mxu0 0.0
    %2927 = vmatprep.subr.mxu0 0.0
    %2928 = vmatpush1.msra.mxu0 0.0
    %2929 = vmatprep.subr.mxu0 0.0
    %2930 = vmatpush1.msra.mxu0 0.0
    %2931 = vmatprep.mubr.f32.mxu0 0.0
    %2932 = vmatmul.mubr.f32.gmra.mrb[0].mxu0 %v2865
    %v2933 = vpop.f32.mrb[0].mxu0
    %v2934 = vadd.f32 0.0, %v2933
    %v2935 = vpop.f32.mrb[0].mxu0
    %2936 = vdwg.mxu0
    %2937 = vrot.lane.b32.xlu0 %v2010, 48
    %v2938 = vpop.permute.xlu0 %2937
    %v2941 = vsel %vm186, %v2860, 0
    %2943 = vmatprep.subr.mxu0 0.0
    %2944 = vmatpush1.msra.mxu0 %v2938
    %2945 = vmatprep.subr.mxu0 0.0
    %2946 = vmatpush1.msra.mxu0 0.0
    %2947 = vmatprep.subr.mxu0 0.0
    %2948 = vmatpush1.msra.mxu0 0.0
    %2949 = vmatprep.subr.mxu0 0.0
    %2950 = vmatpush1.msra.mxu0 0.0
    %2951 = vmatprep.subr.mxu0 0.0
    %2952 = vmatpush1.msra.mxu0 0.0
    %2953 = vmatprep.subr.mxu0 0.0
    %2954 = vmatpush1.msra.mxu0 0.0
    %2955 = vmatprep.subr.mxu0 0.0
    %2956 = vmatpush1.msra.mxu0 0.0
    %2957 = vmatprep.subr.mxu0 0.0
    %2958 = vmatpush1.msra.mxu0 0.0
    %2959 = vmatprep.subr.mxu0 0.0
    %2960 = vmatpush1.msra.mxu0 0.0
    %2961 = vmatprep.subr.mxu0 0.0
    %2962 = vmatpush1.msra.mxu0 0.0
    %2963 = vmatprep.subr.mxu0 0.0
    %2964 = vmatpush1.msra.mxu0 0.0
    %2965 = vmatprep.subr.mxu0 0.0
    %2966 = vmatpush1.msra.mxu0 0.0
    %2967 = vmatprep.subr.mxu0 0.0
    %2968 = vmatpush1.msra.mxu0 0.0
    %2969 = vmatprep.subr.mxu0 0.0
    %2970 = vmatpush1.msra.mxu0 0.0
    %2971 = vmatprep.subr.mxu0 0.0
    %2972 = vmatpush1.msra.mxu0 0.0
    %2973 = vmatprep.subr.mxu0 0.0
    %2974 = vmatpush1.msra.mxu0 0.0
    %2975 = vmatprep.subr.mxu0 0.0
    %2976 = vmatpush1.msra.mxu0 0.0
    %2977 = vmatprep.subr.mxu0 0.0
    %2978 = vmatpush1.msra.mxu0 0.0
    %2979 = vmatprep.subr.mxu0 0.0
    %2980 = vmatpush1.msra.mxu0 0.0
    %2981 = vmatprep.subr.mxu0 0.0
    %2982 = vmatpush1.msra.mxu0 0.0
    %2983 = vmatprep.subr.mxu0 0.0
    %2984 = vmatpush1.msra.mxu0 0.0
    %2985 = vmatprep.subr.mxu0 0.0
    %2986 = vmatpush1.msra.mxu0 0.0
    %2987 = vmatprep.subr.mxu0 0.0
    %2988 = vmatpush1.msra.mxu0 0.0
    %2989 = vmatprep.subr.mxu0 0.0
    %2990 = vmatpush1.msra.mxu0 0.0
    %2991 = vmatprep.subr.mxu0 0.0
    %2992 = vmatpush1.msra.mxu0 0.0
    %2993 = vmatprep.subr.mxu0 0.0
    %2994 = vmatpush1.msra.mxu0 0.0
    %2995 = vmatprep.subr.mxu0 0.0
    %2996 = vmatpush1.msra.mxu0 0.0
    %2997 = vmatprep.subr.mxu0 0.0
    %2998 = vmatpush1.msra.mxu0 0.0
    %2999 = vmatprep.subr.mxu0 0.0
    %3000 = vmatpush1.msra.mxu0 0.0
    %3001 = vmatprep.subr.mxu0 0.0
    %3002 = vmatpush1.msra.mxu0 0.0
    %3003 = vmatprep.subr.mxu0 0.0
    %3004 = vmatpush1.msra.mxu0 0.0
    %3005 = vmatprep.subr.mxu0 0.0
    %3006 = vmatpush1.msra.mxu0 0.0
    %3007 = vmatprep.mubr.f32.mxu0 0.0
    %3008 = vmatmul.mubr.f32.gmra.mrb[0].mxu0 %v2941
    %v3009 = vpop.f32.mrb[0].mxu0
    %v3010 = vadd.f32 0.0, %v3009
    %v3011 = vpop.f32.mrb[0].mxu0
    %3012 = vdwg.mxu0
    %3013 = vrot.lane.b32.xlu0 %v2005, 104
    %v3014 = vpop.permute.xlu0 %3013
    %3015 = vrot.lane.b32.xlu0 %v2005, 72
    %v3016 = vpop.permute.xlu0 %3015
    %v3017 = vsel %vm186, %v3014, 0
    %v3019 = vsel %vm186, %v3016, 0
    %3021 = vmatprep.subr.mxu0 0.0
    %3022 = vmatpush1.xpose.msra.mxu0 %v3019
    %3023 = vmatprep.subr.mxu0 0.0
    %3024 = vmatpush1.xpose.msra.mxu0 0.0
    %3025 = vmatprep.subr.mxu0 0.0
    %3026 = vmatpush1.xpose.msra.mxu0 0.0
    %3027 = vmatprep.subr.mxu0 0.0
    %3028 = vmatpush1.xpose.msra.mxu0 0.0
    %3029 = vmatprep.subr.mxu0 0.0
    %3030 = vmatpush1.xpose.msra.mxu0 0.0
    %3031 = vmatprep.subr.mxu0 0.0
    %3032 = vmatpush1.xpose.msra.mxu0 0.0
    %3033 = vmatprep.subr.mxu0 0.0
    %3034 = vmatpush1.xpose.msra.mxu0 0.0
    %3035 = vmatprep.subr.mxu0 0.0
    %3036 = vmatpush1.xpose.msra.mxu0 0.0
    %3037 = vmatprep.subr.mxu0 0.0
    %3038 = vmatpush1.xpose.msra.mxu0 0.0
    %3039 = vmatprep.subr.mxu0 0.0
    %3040 = vmatpush1.xpose.msra.mxu0 0.0
    %3041 = vmatprep.subr.mxu0 0.0
    %3042 = vmatpush1.xpose.msra.mxu0 0.0
    %3043 = vmatprep.subr.mxu0 0.0
    %3044 = vmatpush1.xpose.msra.mxu0 0.0
    %3045 = vmatprep.subr.mxu0 0.0
    %3046 = vmatpush1.xpose.msra.mxu0 0.0
    %3047 = vmatprep.subr.mxu0 0.0
    %3048 = vmatpush1.xpose.msra.mxu0 0.0
    %3049 = vmatprep.subr.mxu0 0.0
    %3050 = vmatpush1.xpose.msra.mxu0 0.0
    %3051 = vmatprep.subr.mxu0 0.0
    %3052 = vmatpush1.xpose.msra.mxu0 0.0
    %3053 = vmatprep.subr.mxu0 0.0
    %3054 = vmatpush1.xpose.msra.mxu0 0.0
    %3055 = vmatprep.subr.mxu0 0.0
    %3056 = vmatpush1.xpose.msra.mxu0 0.0
    %3057 = vmatprep.subr.mxu0 0.0
    %3058 = vmatpush1.xpose.msra.mxu0 0.0
    %3059 = vmatprep.subr.mxu0 0.0
    %3060 = vmatpush1.xpose.msra.mxu0 0.0
    %3061 = vmatprep.subr.mxu0 0.0
    %3062 = vmatpush1.xpose.msra.mxu0 0.0
    %3063 = vmatprep.subr.mxu0 0.0
    %3064 = vmatpush1.xpose.msra.mxu0 0.0
    %3065 = vmatprep.subr.mxu0 0.0
    %3066 = vmatpush1.xpose.msra.mxu0 0.0
    %3067 = vmatprep.subr.mxu0 0.0
    %3068 = vmatpush1.xpose.msra.mxu0 0.0
    %3069 = vmatprep.subr.mxu0 0.0
    %3070 = vmatpush1.xpose.msra.mxu0 0.0
    %3071 = vmatprep.subr.mxu0 0.0
    %3072 = vmatpush1.xpose.msra.mxu0 0.0
    %3073 = vmatprep.subr.mxu0 0.0
    %3074 = vmatpush1.xpose.msra.mxu0 0.0
    %3075 = vmatprep.subr.mxu0 0.0
    %3076 = vmatpush1.xpose.msra.mxu0 0.0
    %3077 = vmatprep.subr.mxu0 0.0
    %3078 = vmatpush1.xpose.msra.mxu0 0.0
    %3079 = vmatprep.subr.mxu0 0.0
    %3080 = vmatpush1.xpose.msra.mxu0 0.0
    %3081 = vmatprep.subr.mxu0 0.0
    %3082 = vmatpush1.xpose.msra.mxu0 0.0
    %3083 = vmatprep.subr.mxu0 0.0
    %3084 = vmatpush1.xpose.msra.mxu0 0.0
    %3085 = vmatprep.mubr.f32.mxu0 0.0
    %3086 = vmatmul.mubr.f32.gmra.mrb[0].mxu0 %v3017
    %v3087 = vpop.f32.mrb[0].mxu0
    %v3088 = vadd.f32 0.0, %v3087
    %v3089 = vpop.f32.mrb[0].mxu0
    %3090 = vdwg.mxu0
    %3091 = vrot.lane.b32.xlu0 %v2010, 104
    %v3092 = vpop.permute.xlu0 %3091
    %3093 = vrot.lane.b32.xlu0 %v2010, 72
    %v3094 = vpop.permute.xlu0 %3093
    %v3095 = vsel %vm186, %v3092, 0
    %v3097 = vsel %vm186, %v3094, 0
    %3099 = vmatprep.subr.mxu0 0.0
    %3100 = vmatpush1.xpose.msra.mxu0 %v3097
    %3101 = vmatprep.subr.mxu0 0.0
    %3102 = vmatpush1.xpose.msra.mxu0 0.0
    %3103 = vmatprep.subr.mxu0 0.0
    %3104 = vmatpush1.xpose.msra.mxu0 0.0
    %3105 = vmatprep.subr.mxu0 0.0
    %3106 = vmatpush1.xpose.msra.mxu0 0.0
    %3107 = vmatprep.subr.mxu0 0.0
    %3108 = vmatpush1.xpose.msra.mxu0 0.0
    %3109 = vmatprep.subr.mxu0 0.0
    %3110 = vmatpush1.xpose.msra.mxu0 0.0
    %3111 = vmatprep.subr.mxu0 0.0
    %3112 = vmatpush1.xpose.msra.mxu0 0.0
    %3113 = vmatprep.subr.mxu0 0.0
    %3114 = vmatpush1.xpose.msra.mxu0 0.0
    %3115 = vmatprep.subr.mxu0 0.0
    %3116 = vmatpush1.xpose.msra.mxu0 0.0
    %3117 = vmatprep.subr.mxu0 0.0
    %3118 = vmatpush1.xpose.msra.mxu0 0.0
    %3119 = vmatprep.subr.mxu0 0.0
    %3120 = vmatpush1.xpose.msra.mxu0 0.0
    %3121 = vmatprep.subr.mxu0 0.0
    %3122 = vmatpush1.xpose.msra.mxu0 0.0
    %3123 = vmatprep.subr.mxu0 0.0
    %3124 = vmatpush1.xpose.msra.mxu0 0.0
    %3125 = vmatprep.subr.mxu0 0.0
    %3126 = vmatpush1.xpose.msra.mxu0 0.0
    %3127 = vmatprep.subr.mxu0 0.0
    %3128 = vmatpush1.xpose.msra.mxu0 0.0
    %3129 = vmatprep.subr.mxu0 0.0
    %3130 = vmatpush1.xpose.msra.mxu0 0.0
    %3131 = vmatprep.subr.mxu0 0.0
    %3132 = vmatpush1.xpose.msra.mxu0 0.0
    %3133 = vmatprep.subr.mxu0 0.0
    %3134 = vmatpush1.xpose.msra.mxu0 0.0
    %3135 = vmatprep.subr.mxu0 0.0
    %3136 = vmatpush1.xpose.msra.mxu0 0.0
    %3137 = vmatprep.subr.mxu0 0.0
    %3138 = vmatpush1.xpose.msra.mxu0 0.0
    %3139 = vmatprep.subr.mxu0 0.0
    %3140 = vmatpush1.xpose.msra.mxu0 0.0
    %3141 = vmatprep.subr.mxu0 0.0
    %3142 = vmatpush1.xpose.msra.mxu0 0.0
    %3143 = vmatprep.subr.mxu0 0.0
    %3144 = vmatpush1.xpose.msra.mxu0 0.0
    %3145 = vmatprep.subr.mxu0 0.0
    %3146 = vmatpush1.xpose.msra.mxu0 0.0
    %3147 = vmatprep.subr.mxu0 0.0
    %3148 = vmatpush1.xpose.msra.mxu0 0.0
    %3149 = vmatprep.subr.mxu0 0.0
    %3150 = vmatpush1.xpose.msra.mxu0 0.0
    %3151 = vmatprep.subr.mxu0 0.0
    %3152 = vmatpush1.xpose.msra.mxu0 0.0
    %3153 = vmatprep.subr.mxu0 0.0
    %3154 = vmatpush1.xpose.msra.mxu0 0.0
    %3155 = vmatprep.subr.mxu0 0.0
    %3156 = vmatpush1.xpose.msra.mxu0 0.0
    %3157 = vmatprep.subr.mxu0 0.0
    %3158 = vmatpush1.xpose.msra.mxu0 0.0
    %3159 = vmatprep.subr.mxu0 0.0
    %3160 = vmatpush1.xpose.msra.mxu0 0.0
    %3161 = vmatprep.subr.mxu0 0.0
    %3162 = vmatpush1.xpose.msra.mxu0 0.0
    %3163 = vmatprep.mubr.f32.mxu0 0.0
    %3164 = vmatmul.mubr.f32.gmra.mrb[0].mxu0 %v3095
    %v3165 = vpop.f32.mrb[0].mxu0
    %v3166 = vadd.f32 0.0, %v3165
    %v3167 = vpop.f32.mrb[0].mxu0
    %3168 = vdwg.mxu0
    %v3169 = vmul.f32 %v3088, 0.35355338
    %v3170 = vmul.f32 %v3166, 0.35355338
    %v3171 = vsel %vm341, %v3169, -1e+09
    %v3172 = vsel %vm341, %v3170, -1e+09
    %v3173 = vsel %vm186, %v3171, -inf
    %3174 = vmax.xlane.f32.xlu0 %v3173
    %v3175 = vpop.xlane.xlu0 %3174
    %v3176 = vsel %vm186, %v3172, -inf
    %3177 = vmax.xlane.f32.xlu0 %v3176
    %v3178 = vpop.xlane.xlu0 %3177
    %v3179 = vsub.f32 %v3171, %v3175
    %v3180 = vsub.f32 %v3172, %v3178
    %v3181 = vmul.f32 %v3179, 1.442695
    %v3182 = vpow.pop %v3181
    %v3183 = vmul.f32 %v3180, 1.442695
    %v3184 = vpow.pop %v3183
    %v3185 = vsel %vm186, %v3182, 0.0
    %3186 = vadd.xlane.f32.xlu0 %v3185
    %v3187 = vpop.xlane.xlu0 %3186
    %v3188 = vsel %vm186, %v3184, 0.0
    %3189 = vadd.xlane.f32.xlu0 %v3188
    %v3190 = vpop.xlane.xlu0 %3189
    %v3191 = vrcp.pop %v3187
    %v3192 = vrcp.pop %v3190
    %v3193 = vmul.f32 %v3182, %v3191
    %v3194 = vmul.f32 %v3184, %v3192
    %3195 = vrot.lane.b32.xlu0 %v2005, 40
    %v3196 = vpop.permute.xlu0 %3195
    %v3199 = vsel %vm186, %v3193, 0
    %3201 = vmatprep.subr.mxu0 0.0
    %3202 = vmatpush1.msra.mxu0 %v3196
    %3203 = vmatprep.subr.mxu0 0.0
    %3204 = vmatpush1.msra.mxu0 0.0
    %3205 = vmatprep.subr.mxu0 0.0
    %3206 = vmatpush1.msra.mxu0 0.0
    %3207 = vmatprep.subr.mxu0 0.0
    %3208 = vmatpush1.msra.mxu0 0.0
    %3209 = vmatprep.subr.mxu0 0.0
    %3210 = vmatpush1.msra.mxu0 0.0
    %3211 = vmatprep.subr.mxu0 0.0
    %3212 = vmatpush1.msra.mxu0 0.0
    %3213 = vmatprep.subr.mxu0 0.0
    %3214 = vmatpush1.msra.mxu0 0.0
    %3215 = vmatprep.subr.mxu0 0.0
    %3216 = vmatpush1.msra.mxu0 0.0
    %3217 = vmatprep.subr.mxu0 0.0
    %3218 = vmatpush1.msra.mxu0 0.0
    %3219 = vmatprep.subr.mxu0 0.0
    %3220 = vmatpush1.msra.mxu0 0.0
    %3221 = vmatprep.subr.mxu0 0.0
    %3222 = vmatpush1.msra.mxu0 0.0
    %3223 = vmatprep.subr.mxu0 0.0
    %3224 = vmatpush1.msra.mxu0 0.0
    %3225 = vmatprep.subr.mxu0 0.0
    %3226 = vmatpush1.msra.mxu0 0.0
    %3227 = vmatprep.subr.mxu0 0.0
    %3228 = vmatpush1.msra.mxu0 0.0
    %3229 = vmatprep.subr.mxu0 0.0
    %3230 = vmatpush1.msra.mxu0 0.0
    %3231 = vmatprep.subr.mxu0 0.0
    %3232 = vmatpush1.msra.mxu0 0.0
    %3233 = vmatprep.subr.mxu0 0.0
    %3234 = vmatpush1.msra.mxu0 0.0
    %3235 = vmatprep.subr.mxu0 0.0
    %3236 = vmatpush1.msra.mxu0 0.0
    %3237 = vmatprep.subr.mxu0 0.0
    %3238 = vmatpush1.msra.mxu0 0.0
    %3239 = vmatprep.subr.mxu0 0.0
    %3240 = vmatpush1.msra.mxu0 0.0
    %3241 = vmatprep.subr.mxu0 0.0
    %3242 = vmatpush1.msra.mxu0 0.0
    %3243 = vmatprep.subr.mxu0 0.0
    %3244 = vmatpush1.msra.mxu0 0.0
    %3245 = vmatprep.subr.mxu0 0.0
    %3246 = vmatpush1.msra.mxu0 0.0
    %3247 = vmatprep.subr.mxu0 0.0
    %3248 = vmatpush1.msra.mxu0 0.0
    %3249 = vmatprep.subr.mxu0 0.0
    %3250 = vmatpush1.msra.mxu0 0.0
    %3251 = vmatprep.subr.mxu0 0.0
    %3252 = vmatpush1.msra.mxu0 0.0
    %3253 = vmatprep.subr.mxu0 0.0
    %3254 = vmatpush1.msra.mxu0 0.0
    %3255 = vmatprep.subr.mxu0 0.0
    %3256 = vmatpush1.msra.mxu0 0.0
    %3257 = vmatprep.subr.mxu0 0.0
    %3258 = vmatpush1.msra.mxu0 0.0
    %3259 = vmatprep.subr.mxu0 0.0
    %3260 = vmatpush1.msra.mxu0 0.0
    %3261 = vmatprep.subr.mxu0 0.0
    %3262 = vmatpush1.msra.mxu0 0.0
    %3263 = vmatprep.subr.mxu0 0.0
    %3264 = vmatpush1.msra.mxu0 0.0
    %3265 = vmatprep.mubr.f32.mxu0 0.0
    %3266 = vmatmul.mubr.f32.gmra.mrb[0].mxu0 %v3199
    %v3267 = vpop.f32.mrb[0].mxu0
    %v3268 = vadd.f32 0.0, %v3267
    %v3269 = vpop.f32.mrb[0].mxu0
    %3270 = vdwg.mxu0
    %3271 = vrot.lane.b32.xlu0 %v2010, 40
    %v3272 = vpop.permute.xlu0 %3271
    %v3275 = vsel %vm186, %v3194, 0
    %3277 = vmatprep.subr.mxu0 0.0
    %3278 = vmatpush1.msra.mxu0 %v3272
    %3279 = vmatprep.subr.mxu0 0.0
    %3280 = vmatpush1.msra.mxu0 0.0
    %3281 = vmatprep.subr.mxu0 0.0
    %3282 = vmatpush1.msra.mxu0 0.0
    %3283 = vmatprep.subr.mxu0 0.0
    %3284 = vmatpush1.msra.mxu0 0.0
    %3285 = vmatprep.subr.mxu0 0.0
    %3286 = vmatpush1.msra.mxu0 0.0
    %3287 = vmatprep.subr.mxu0 0.0
    %3288 = vmatpush1.msra.mxu0 0.0
    %3289 = vmatprep.subr.mxu0 0.0
    %3290 = vmatpush1.msra.mxu0 0.0
    %3291 = vmatprep.subr.mxu0 0.0
    %3292 = vmatpush1.msra.mxu0 0.0
    %3293 = vmatprep.subr.mxu0 0.0
    %3294 = vmatpush1.msra.mxu0 0.0
    %3295 = vmatprep.subr.mxu0 0.0
    %3296 = vmatpush1.msra.mxu0 0.0
    %3297 = vmatprep.subr.mxu0 0.0
    %3298 = vmatpush1.msra.mxu0 0.0
    %3299 = vmatprep.subr.mxu0 0.0
    %3300 = vmatpush1.msra.mxu0 0.0
    %3301 = vmatprep.subr.mxu0 0.0
    %3302 = vmatpush1.msra.mxu0 0.0
    %3303 = vmatprep.subr.mxu0 0.0
    %3304 = vmatpush1.msra.mxu0 0.0
    %3305 = vmatprep.subr.mxu0 0.0
    %3306 = vmatpush1.msra.mxu0 0.0
    %3307 = vmatprep.subr.mxu0 0.0
    %3308 = vmatpush1.msra.mxu0 0.0
    %3309 = vmatprep.subr.mxu0 0.0
    %3310 = vmatpush1.msra.mxu0 0.0
    %3311 = vmatprep.subr.mxu0 0.0
    %3312 = vmatpush1.msra.mxu0 0.0
    %3313 = vmatprep.subr.mxu0 0.0
    %3314 = vmatpush1.msra.mxu0 0.0
    %3315 = vmatprep.subr.mxu0 0.0
    %3316 = vmatpush1.msra.mxu0 0.0
    %3317 = vmatprep.subr.mxu0 0.0
    %3318 = vmatpush1.msra.mxu0 0.0
    %3319 = vmatprep.subr.mxu0 0.0
    %3320 = vmatpush1.msra.mxu0 0.0
    %3321 = vmatprep.subr.mxu0 0.0
    %3322 = vmatpush1.msra.mxu0 0.0
    %3323 = vmatprep.subr.mxu0 0.0
    %3324 = vmatpush1.msra.mxu0 0.0
    %3325 = vmatprep.subr.mxu0 0.0
    %3326 = vmatpush1.msra.mxu0 0.0
    %3327 = vmatprep.subr.mxu0 0.0
    %3328 = vmatpush1.msra.mxu0 0.0
    %3329 = vmatprep.subr.mxu0 0.0
    %3330 = vmatpush1.msra.mxu0 0.0
    %3331 = vmatprep.subr.mxu0 0.0
    %3332 = vmatpush1.msra.mxu0 0.0
    %3333 = vmatprep.subr.mxu0 0.0
    %3334 = vmatpush1.msra.mxu0 0.0
    %3335 = vmatprep.subr.mxu0 0.0
    %3336 = vmatpush1.msra.mxu0 0.0
    %3337 = vmatprep.subr.mxu0 0.0
    %3338 = vmatpush1.msra.mxu0 0.0
    %3339 = vmatprep.subr.mxu0 0.0
    %3340 = vmatpush1.msra.mxu0 0.0
    %3341 = vmatprep.mubr.f32.mxu0 0.0
    %3342 = vmatmul.mubr.f32.gmra.mrb[0].mxu0 %v3275
    %v3343 = vpop.f32.mrb[0].mxu0
    %v3344 = vadd.f32 0.0, %v3343
    %v3345 = vpop.f32.mrb[0].mxu0
    %3346 = vdwg.mxu0
    %3349 = vrot.lane.b32.xlu0 %v2600, 8
    %v3350 = vpop.permute.xlu0 %3349
    %3351 = vrot.lane.b32.xlu0 %v2676, 8
    %v3352 = vpop.permute.xlu0 %3351
    %3357 = vrot.lane.b32.xlu0 %v2934, 16
    %v3358 = vpop.permute.xlu0 %3357
    %3359 = vrot.lane.b32.xlu0 %v3010, 16
    %v3360 = vpop.permute.xlu0 %3359
    %3365 = vrot.lane.b32.xlu0 %v3268, 24
    %v3366 = vpop.permute.xlu0 %3365
    %3367 = vrot.lane.b32.xlu0 %v3344, 24
    %v3368 = vpop.permute.xlu0 %3367
    %v3371 = vsel %vm186, %v2266, %v3350
    %v3372 = vsel %vm186, %v2342, %v3352
    %v3373 = vsel %vm1546, %v3371, %v3358
    %v3374 = vsel %vm1546, %v3372, %v3360
    %v3375 = vsel %vm1549, %v3373, %v3366
    %v3376 = vsel %vm1549, %v3374, %v3368
    %s3377 = scalar_lea.vmem %s3, 32
    %v3378 = vld [vmem:[%s3377] sm:$0xff]
    %v3379 = vld [vmem:[%s3377 + $0x8] sm:$0xff]
    %v3380 = vld [vmem:[%s3377 + $0x10] sm:$0xff]
    %v3381 = vld [vmem:[%s3377 + $0x18] sm:$0xff]
    %v3382 = vlaneseq
    %v3383 = vshrl.u32 %v3382, 7
    %v3384 = vsub.s32 3, %v3383
    %v3385 = vrot.slane %v1884, %v3384
    %v3387 = vsel %vm54, %v3375, 0
    %v3390 = vsel %vm54, %v3376, 0
    %3392 = vmatprep.subr.mxu0 0.0
    %3393 = vmatpush1.msra.mxu0 %v3378
    %3394 = vmatprep.subr.mxu0 0.0
    %3395 = vmatpush1.msra.mxu0 %v3379
    %3396 = vmatprep.subr.mxu0 0.0
    %3397 = vmatpush1.msra.mxu0 %v3380
    %3398 = vmatprep.subr.mxu0 0.0
    %3399 = vmatpush1.msra.mxu0 %v3381
    %3400 = vmatprep.subr.mxu0 0.0
    %3401 = vmatpush1.msra.mxu0 0.0
    %3402 = vmatprep.subr.mxu0 0.0
    %3403 = vmatpush1.msra.mxu0 0.0
    %3404 = vmatprep.subr.mxu0 0.0
    %3405 = vmatpush1.msra.mxu0 0.0
    %3406 = vmatprep.subr.mxu0 0.0
    %3407 = vmatpush1.msra.mxu0 0.0
    %3408 = vmatprep.subr.mxu0 0.0
    %3409 = vmatpush1.msra.mxu0 0.0
    %3410 = vmatprep.subr.mxu0 0.0
    %3411 = vmatpush1.msra.mxu0 0.0
    %3412 = vmatprep.subr.mxu0 0.0
    %3413 = vmatpush1.msra.mxu0 0.0
    %3414 = vmatprep.subr.mxu0 0.0
    %3415 = vmatpush1.msra.mxu0 0.0
    %3416 = vmatprep.subr.mxu0 0.0
    %3417 = vmatpush1.msra.mxu0 0.0
    %3418 = vmatprep.subr.mxu0 0.0
    %3419 = vmatpush1.msra.mxu0 0.0
    %3420 = vmatprep.subr.mxu0 0.0
    %3421 = vmatpush1.msra.mxu0 0.0
    %3422 = vmatprep.subr.mxu0 0.0
    %3423 = vmatpush1.msra.mxu0 0.0
    %3424 = vmatprep.subr.mxu0 0.0
    %3425 = vmatpush1.msra.mxu0 0.0
    %3426 = vmatprep.subr.mxu0 0.0
    %3427 = vmatpush1.msra.mxu0 0.0
    %3428 = vmatprep.subr.mxu0 0.0
    %3429 = vmatpush1.msra.mxu0 0.0
    %3430 = vmatprep.subr.mxu0 0.0
    %3431 = vmatpush1.msra.mxu0 0.0
    %3432 = vmatprep.subr.mxu0 0.0
    %3433 = vmatpush1.msra.mxu0 0.0
    %3434 = vmatprep.subr.mxu0 0.0
    %3435 = vmatpush1.msra.mxu0 0.0
    %3436 = vmatprep.subr.mxu0 0.0
    %3437 = vmatpush1.msra.mxu0 0.0
    %3438 = vmatprep.subr.mxu0 0.0
    %3439 = vmatpush1.msra.mxu0 0.0
    %3440 = vmatprep.subr.mxu0 0.0
    %3441 = vmatpush1.msra.mxu0 0.0
    %3442 = vmatprep.subr.mxu0 0.0
    %3443 = vmatpush1.msra.mxu0 0.0
    %3444 = vmatprep.subr.mxu0 0.0
    %3445 = vmatpush1.msra.mxu0 0.0
    %3446 = vmatprep.subr.mxu0 0.0
    %3447 = vmatpush1.msra.mxu0 0.0
    %3448 = vmatprep.subr.mxu0 0.0
    %3449 = vmatpush1.msra.mxu0 0.0
    %3450 = vmatprep.subr.mxu0 0.0
    %3451 = vmatpush1.msra.mxu0 0.0
    %3452 = vmatprep.subr.mxu0 0.0
    %3453 = vmatpush1.msra.mxu0 0.0
    %3454 = vmatprep.subr.mxu0 0.0
    %3455 = vmatpush1.msra.mxu0 0.0
    %3456 = vmatprep.mubr.f32.mxu0 0.0
    %3457 = vmatmul.mubr.f32.gmra.mrb[0].mxu0 %v3387
    %v3458 = vpop.f32.mrb[0].mxu0
    %v3459 = vadd.f32 %v3385, %v3458
    %v3460 = vpop.f32.mrb[0].mxu0
    %3461 = vmatprep.mubr.f32.mxu0 0.0
    %3462 = vmatmul.mubr.f32.gmra.mrb[0].mxu0 %v3390
    %v3463 = vpop.f32.mrb[0].mxu0
    %v3464 = vadd.f32 %v3385, %v3463
    %v3465 = vpop.f32.mrb[0].mxu0
    %3466 = vdwg.mxu0
    %v3467 = vadd.f32 %v1881, %v3459
    %v3468 = vadd.f32 %v1882, %v3464
    %v3469 = vsel %vm54, %v3467, 0.0
    %3470 = vadd.xlane.f32.xlu0 %v3469
    %v3471 = vpop.xlane.xlu0 %3470
    %v3472 = vsel %vm54, %v3468, 0.0
    %3473 = vadd.xlane.f32.xlu0 %v3472
    %v3474 = vpop.xlane.xlu0 %3473
    %v3475 = vmul.f32 %v3471, %v61
    %v3476 = vmul.f32 %v3474, %v61
    %v3477 = vsub.f32 %v3467, %v3475
    %v3478 = vsub.f32 %v3468, %v3476
    %v3479 = vmul.f32 %v3477, %v3477
    %v3480 = vmul.f32 %v3478, %v3478
    %v3481 = vsel %vm54, %v3479, 0.0
    %3482 = vadd.xlane.f32.xlu0 %v3481
    %v3483 = vpop.xlane.xlu0 %3482
    %v3484 = vsel %vm54, %v3480, 0.0
    %3485 = vadd.xlane.f32.xlu0 %v3484
    %v3486 = vpop.xlane.xlu0 %3485
    %v3487 = vmul.f32 %v3483, %v61
    %v3488 = vmul.f32 %v3486, %v61
    %v3489 = vadd.f32 %v3487, 1e-05
    %v3490 = vadd.f32 %v3488, 1e-05
    %v3491 = vrsqrt.pop %v3489
    %v3492 = vrsqrt.pop %v3490
    %v3493 = vmul.f32 %v3477, %v3491
    %v3494 = vmul.f32 %v3478, %v3492
    %v3495 = vlaneseq
    %v3496 = vshrl.u32 %v3495, 7
    %v3497 = vsub.s32 4, %v3496
    %v3498 = vrot.slane %v1884, %v3497
    %v3499 = vmul.f32 %v3493, %v3498
    %v3500 = vmul.f32 %v3494, %v3498
    %v3501 = vlaneseq
    %v3502 = vshrl.u32 %v3501, 7
    %v3503 = vsub.s32 5, %v3502
    %v3504 = vrot.slane %v1884, %v3503
    %v3505 = vadd.f32 %v3499, %v3504
    %v3506 = vadd.f32 %v3500, %v3504
    %s3507 = scalar_lea.vmem %s4, 32
    %v3508 = vld [vmem:[%s3507] sm:$0xff]
    %v3509 = vld [vmem:[%s3507 + $0x8] sm:$0xff]
    %v3510 = vld [vmem:[%s3507 + $0x10] sm:$0xff]
    %v3511 = vld [vmem:[%s3507 + $0x18] sm:$0xff]
    %v3512 = vlaneseq
    %v3513 = vshrl.u32 %v3512, 7
    %v3514 = vsub.s32 6, %v3513
    %v3515 = vrot.slane %v1884, %v3514
    %v3517 = vsel %vm54, %v3505, 0
    %v3520 = vsel %vm54, %v3506, 0
    %3522 = vmatprep.subr.mxu0 0.0
    %3523 = vmatpush1.msra.mxu0 %v3508
    %3524 = vmatprep.subr.mxu0 0.0
    %3525 = vmatpush1.msra.mxu0 %v3509
    %3526 = vmatprep.subr.mxu0 0.0
    %3527 = vmatpush1.msra.mxu0 %v3510
    %3528 = vmatprep.subr.mxu0 0.0
    %3529 = vmatpush1.msra.mxu0 %v3511
    %3530 = vmatprep.subr.mxu0 0.0
    %3531 = vmatpush1.msra.mxu0 0.0
    %3532 = vmatprep.subr.mxu0 0.0
    %3533 = vmatpush1.msra.mxu0 0.0
    %3534 = vmatprep.subr.mxu0 0.0
    %3535 = vmatpush1.msra.mxu0 0.0
    %3536 = vmatprep.subr.mxu0 0.0
    %3537 = vmatpush1.msra.mxu0 0.0
    %3538 = vmatprep.subr.mxu0 0.0
    %3539 = vmatpush1.msra.mxu0 0.0
    %3540 = vmatprep.subr.mxu0 0.0
    %3541 = vmatpush1.msra.mxu0 0.0
    %3542 = vmatprep.subr.mxu0 0.0
    %3543 = vmatpush1.msra.mxu0 0.0
    %3544 = vmatprep.subr.mxu0 0.0
    %3545 = vmatpush1.msra.mxu0 0.0
    %3546 = vmatprep.subr.mxu0 0.0
    %3547 = vmatpush1.msra.mxu0 0.0
    %3548 = vmatprep.subr.mxu0 0.0
    %3549 = vmatpush1.msra.mxu0 0.0
    %3550 = vmatprep.subr.mxu0 0.0
    %3551 = vmatpush1.msra.mxu0 0.0
    %3552 = vmatprep.subr.mxu0 0.0
    %3553 = vmatpush1.msra.mxu0 0.0
    %3554 = vmatprep.subr.mxu0 0.0
    %3555 = vmatpush1.msra.mxu0 0.0
    %3556 = vmatprep.subr.mxu0 0.0
    %3557 = vmatpush1.msra.mxu0 0.0
    %3558 = vmatprep.subr.mxu0 0.0
    %3559 = vmatpush1.msra.mxu0 0.0
    %3560 = vmatprep.subr.mxu0 0.0
    %3561 = vmatpush1.msra.mxu0 0.0
    %3562 = vmatprep.subr.mxu0 0.0
    %3563 = vmatpush1.msra.mxu0 0.0
    %3564 = vmatprep.subr.mxu0 0.0
    %3565 = vmatpush1.msra.mxu0 0.0
    %3566 = vmatprep.subr.mxu0 0.0
    %3567 = vmatpush1.msra.mxu0 0.0
    %3568 = vmatprep.subr.mxu0 0.0
    %3569 = vmatpush1.msra.mxu0 0.0
    %3570 = vmatprep.subr.mxu0 0.0
    %3571 = vmatpush1.msra.mxu0 0.0
    %3572 = vmatprep.subr.mxu0 0.0
    %3573 = vmatpush1.msra.mxu0 0.0
    %3574 = vmatprep.subr.mxu0 0.0
    %3575 = vmatpush1.msra.mxu0 0.0
    %3576 = vmatprep.subr.mxu0 0.0
    %3577 = vmatpush1.msra.mxu0 0.0
    %3578 = vmatprep.subr.mxu0 0.0
    %3579 = vmatpush1.msra.mxu0 0.0
    %3580 = vmatprep.subr.mxu0 0.0
    %3581 = vmatpush1.msra.mxu0 0.0
    %3582 = vmatprep.subr.mxu0 0.0
    %3583 = vmatpush1.msra.mxu0 0.0
    %3584 = vmatprep.subr.mxu0 0.0
    %3585 = vmatpush1.msra.mxu0 0.0
    %3586 = vmatprep.mubr.f32.mxu0 0.0
    %3587 = vmatmul.mubr.f32.gmra.mrb[0].mxu0 %v3517
    %v3588 = vpop.f32.mrb[0].mxu0
    %v3589 = vadd.f32 %v3515, %v3588
    %v3590 = vpop.f32.mrb[0].mxu0
    %3591 = vmatprep.mubr.f32.mxu0 0.0
    %3592 = vmatmul.mubr.f32.gmra.mrb[0].mxu0 %v3520
    %v3593 = vpop.f32.mrb[0].mxu0
    %v3594 = vadd.f32 %v3515, %v3593
    %v3595 = vpop.f32.mrb[0].mxu0
    %3596 = vdwg.mxu0
    %v3597 = vmul.f32 %v3589, 1.702
    %v3598 = vmul.f32 %v3594, 1.702
    %v3599 = vxor.u32 %v3597, 2147483648
    %v3600 = vxor.u32 %v3598, 2147483648
    %v3601 = vmul.f32 %v3599, 1.442695
    %v3602 = vpow.pop %v3601
    %v3603 = vmul.f32 %v3600, 1.442695
    %v3604 = vpow.pop %v3603
    %v3605 = vadd.f32 %v3602, 1.0
    %v3606 = vadd.f32 %v3604, 1.0
    %v3607 = vrcp.pop %v3605
    %v3608 = vmul.f32 1.0, %v3607
    %v3609 = vrcp.pop %v3606
    %v3610 = vmul.f32 1.0, %v3609
    %v3611 = vmul.f32 %v3589, %v3608
    %v3612 = vmul.f32 %v3594, %v3610
    %s3613 = scalar_lea.vmem %s5, 128
    %v3614 = vld [vmem:[%s3613] sm:$0xff]
    %v3615 = vld [vmem:[%s3613 + $0x8] sm:$0xff]
    %v3616 = vld [vmem:[%s3613 + $0x10] sm:$0xff]
    %v3617 = vld [vmem:[%s3613 + $0x18] sm:$0xff]
    %v3618 = vld [vmem:[%s3613 + $0x20] sm:$0xff]
    %v3619 = vld [vmem:[%s3613 + $0x28] sm:$0xff]
    %v3620 = vld [vmem:[%s3613 + $0x30] sm:$0xff]
    %v3621 = vld [vmem:[%s3613 + $0x38] sm:$0xff]
    %v3622 = vld [vmem:[%s3613 + $0x40] sm:$0xff]
    %v3623 = vld [vmem:[%s3613 + $0x48] sm:$0xff]
    %v3624 = vld [vmem:[%s3613 + $0x50] sm:$0xff]
    %v3625 = vld [vmem:[%s3613 + $0x58] sm:$0xff]
    %v3626 = vld [vmem:[%s3613 + $0x60] sm:$0xff]
    %v3627 = vld [vmem:[%s3613 + $0x68] sm:$0xff]
    %v3628 = vld [vmem:[%s3613 + $0x70] sm:$0xff]
    %v3629 = vld [vmem:[%s3613 + $0x78] sm:$0xff]
    %v3630 = vlaneseq
    %v3631 = vshrl.u32 %v3630, 7
    %v3632 = vsub.s32 7, %v3631
    %v3633 = vrot.slane %v1884, %v3632
    %3634 = vmatprep.subr.mxu0 0.0
    %3635 = vmatpush1.msra.mxu0 %v3614
    %3636 = vmatprep.subr.mxu0 0.0
    %3637 = vmatpush1.msra.mxu0 %v3615
    %3638 = vmatprep.subr.mxu0 0.0
    %3639 = vmatpush1.msra.mxu0 %v3616
    %3640 = vmatprep.subr.mxu0 0.0
    %3641 = vmatpush1.msra.mxu0 %v3617
    %3642 = vmatprep.subr.mxu0 0.0
    %3643 = vmatpush1.msra.mxu0 %v3618
    %3644 = vmatprep.subr.mxu0 0.0
    %3645 = vmatpush1.msra.mxu0 %v3619
    %3646 = vmatprep.subr.mxu0 0.0
    %3647 = vmatpush1.msra.mxu0 %v3620
    %3648 = vmatprep.subr.mxu0 0.0
    %3649 = vmatpush1.msra.mxu0 %v3621
    %3650 = vmatprep.subr.mxu0 0.0
    %3651 = vmatpush1.msra.mxu0 %v3622
    %3652 = vmatprep.subr.mxu0 0.0
    %3653 = vmatpush1.msra.mxu0 %v3623
    %3654 = vmatprep.subr.mxu0 0.0
    %3655 = vmatpush1.msra.mxu0 %v3624
    %3656 = vmatprep.subr.mxu0 0.0
    %3657 = vmatpush1.msra.mxu0 %v3625
    %3658 = vmatprep.subr.mxu0 0.0
    %3659 = vmatpush1.msra.mxu0 %v3626
    %3660 = vmatprep.subr.mxu0 0.0
    %3661 = vmatpush1.msra.mxu0 %v3627
    %3662 = vmatprep.subr.mxu0 0.0
    %3663 = vmatpush1.msra.mxu0 %v3628
    %3664 = vmatprep.subr.mxu0 0.0
    %3665 = vmatpush1.msra.mxu0 %v3629
    %3666 = vmatprep.subr.mxu0 0.0
    %3667 = vmatpush1.msra.mxu0 0.0
    %3668 = vmatprep.subr.mxu0 0.0
    %3669 = vmatpush1.msra.mxu0 0.0
    %3670 = vmatprep.subr.mxu0 0.0
    %3671 = vmatpush1.msra.mxu0 0.0
    %3672 = vmatprep.subr.mxu0 0.0
    %3673 = vmatpush1.msra.mxu0 0.0
    %3674 = vmatprep.subr.mxu0 0.0
    %3675 = vmatpush1.msra.mxu0 0.0
    %3676 = vmatprep.subr.mxu0 0.0
    %3677 = vmatpush1.msra.mxu0 0.0
    %3678 = vmatprep.subr.mxu0 0.0
    %3679 = vmatpush1.msra.mxu0 0.0
    %3680 = vmatprep.subr.mxu0 0.0
    %3681 = vmatpush1.msra.mxu0 0.0
    %3682 = vmatprep.subr.mxu0 0.0
    %3683 = vmatpush1.msra.mxu0 0.0
    %3684 = vmatprep.subr.mxu0 0.0
    %3685 = vmatpush1.msra.mxu0 0.0
    %3686 = vmatprep.subr.mxu0 0.0
    %3687 = vmatpush1.msra.mxu0 0.0
    %3688 = vmatprep.subr.mxu0 0.0
    %3689 = vmatpush1.msra.mxu0 0.0
    %3690 = vmatprep.subr.mxu0 0.0
    %3691 = vmatpush1.msra.mxu0 0.0
    %3692 = vmatprep.subr.mxu0 0.0
    %3693 = vmatpush1.msra.mxu0 0.0
    %3694 = vmatprep.subr.mxu0 0.0
    %3695 = vmatpush1.msra.mxu0 0.0
    %3696 = vmatprep.subr.mxu0 0.0
    %3697 = vmatpush1.msra.mxu0 0.0
    %3698 = vmatprep.mubr.f32.mxu0 0.0
    %3699 = vmatmul.mubr.f32.gmra.mrb[0].mxu0 %v3611
    %v3700 = vpop.f32.mrb[0].mxu0
    %v3701 = vadd.f32 %v3633, %v3700
    %v3702 = vpop.f32.mrb[0].mxu0
    %3703 = vmatprep.mubr.f32.mxu0 0.0
    %3704 = vmatmul.mubr.f32.gmra.mrb[0].mxu0 %v3612
    %v3705 = vpop.f32.mrb[0].mxu0
    %v3706 = vadd.f32 %v3633, %v3705
    %v3707 = vpop.f32.mrb[0].mxu0
    %3708 = vdwg.mxu0
    %v3709 = vadd.f32 %v3467, %v3701
    %v3710 = vadd.f32 %v3468, %v3706
    %s3711 = sld [smem:[#allocation2]]
    %v3712 = vstv %s3711
    %vm3713 = vcmp.eq.s32.totalorder %v47, %v3712
    %v3714 = vsel %vm3713, 1, 0
    %vm3715 = vcmp.eq.s32.totalorder %v3714, 1
    %v3716 = vsel %vm3715, %v3709, 0.0
    %v3717 = vsel %vm54, %v3716, 0.0
    %v3718 = vrot.slane %v3717, 4
    %v3719 = vadd.f32 %v3717, %v3718
    %v3720 = vrot.slane %v3719, 2
    %v3721 = vadd.f32 %v3719, %v3720
    %v3722 = vrot.slane %v3721, 1
    %v3723 = vadd.f32 %v3721, %v3722
    %s3724 = sld [smem:[#allocation2 + $0x1]]
    %v3725 = vstv %s3724
    %vm3726 = vcmp.eq.s32.totalorder %v47, %v3725
    %v3727 = vsel %vm3726, 1, 0
    %vm3728 = vcmp.eq.s32.totalorder %v3727, 1
    %v3729 = vsel %vm3728, %v3710, 0.0
    %v3730 = vsel %vm54, %v3729, 0.0
    %v3731 = vrot.slane %v3730, 4
    %v3732 = vadd.f32 %v3730, %v3731
    %v3733 = vrot.slane %v3732, 2
    %v3734 = vadd.f32 %v3732, %v3733
    %v3735 = vrot.slane %v3734, 1
    %v3736 = vadd.f32 %v3734, %v3735
    %vm3737 = vcmask 1040384
    %v3738 = vsel %vm3737, %v3723, %v3736
    %v3739 = vld [vmem:[%s7] sm:$0x1]
    %v3740 = vld [vmem:[%s7 + $0x1] sm:$0x1]
    %vm3741 = vcmask 254976
    %v3742 = vsel %vm3741, %v3738, 0.0
    %3743 = vadd.xlane.f32.xlu0 %v3742
    %v3744 = vpop.xlane.xlu0 %3743
    %v3745 = vmul.f32 %v3744, %v61
    %v3746 = vsub.f32 %v3738, %v3745
    %v3747 = vmul.f32 %v3746, %v3746
    %v3748 = vsel %vm3741, %v3747, 0.0
    %3749 = vadd.xlane.f32.xlu0 %v3748
    %v3750 = vpop.xlane.xlu0 %3749
    %v3751 = vmul.f32 %v3750, %v61
    %v3752 = vadd.f32 %v3751, 1e-05
    %v3753 = vrsqrt.pop %v3752
    %v3754 = vmul.f32 %v3746, %v3753
    %v3755 = vlaneseq
    %v3756 = vshrl.u32 %v3755, 7
    %v3757 = vsub.s32 0, %v3756
    %v3758 = vrot.slane %v3739, %v3757
    %v3759 = vmul.f32 %v3754, %v3758
    %v3760 = vlaneseq
    %v3761 = vshrl.u32 %v3760, 7
    %v3762 = vsub.s32 0, %v3761
    %v3763 = vrot.slane %v3740, %v3762
    %v3764 = vadd.f32 %v3759, %v3763
    %v3765 = vld [vmem:[%s8] sm:$0xff]
    %v3766 = vld [vmem:[%s8 + $0x8] sm:$0xff]
    %v3767 = vld [vmem:[%s8 + $0x10] sm:$0xff]
    %v3768 = vld [vmem:[%s8 + $0x18] sm:$0xff]
    %v3770 = vsel %vm54, %v3764, 0
    %3772 = vmatprep.subr.mxu0 0.0
    %3773 = vmatpush1.msra.mxu0 %v3765
    %3774 = vmatprep.subr.mxu0 0.0
    %3775 = vmatpush1.msra.mxu0 %v3766
    %3776 = vmatprep.subr.mxu0 0.0
    %3777 = vmatpush1.msra.mxu0 %v3767
    %3778 = vmatprep.subr.mxu0 0.0
    %3779 = vmatpush1.msra.mxu0 %v3768
    %3780 = vmatprep.subr.mxu0 0.0
    %3781 = vmatpush1.msra.mxu0 0.0
    %3782 = vmatprep.subr.mxu0 0.0
    %3783 = vmatpush1.msra.mxu0 0.0
    %3784 = vmatprep.subr.mxu0 0.0
    %3785 = vmatpush1.msra.mxu0 0.0
    %3786 = vmatprep.subr.mxu0 0.0
    %3787 = vmatpush1.msra.mxu0 0.0
    %3788 = vmatprep.subr.mxu0 0.0
    %3789 = vmatpush1.msra.mxu0 0.0
    %3790 = vmatprep.subr.mxu0 0.0
    %3791 = vmatpush1.msra.mxu0 0.0
    %3792 = vmatprep.subr.mxu0 0.0
    %3793 = vmatpush1.msra.mxu0 0.0
    %3794 = vmatprep.subr.mxu0 0.0
    %3795 = vmatpush1.msra.mxu0 0.0
    %3796 = vmatprep.subr.mxu0 0.0
    %3797 = vmatpush1.msra.mxu0 0.0
    %3798 = vmatprep.subr.mxu0 0.0
    %3799 = vmatpush1.msra.mxu0 0.0
    %3800 = vmatprep.subr.mxu0 0.0
    %3801 = vmatpush1.msra.mxu0 0.0
    %3802 = vmatprep.subr.mxu0 0.0
    %3803 = vmatpush1.msra.mxu0 0.0
    %3804 = vmatprep.subr.mxu0 0.0
    %3805 = vmatpush1.msra.mxu0 0.0
    %3806 = vmatprep.subr.mxu0 0.0
    %3807 = vmatpush1.msra.mxu0 0.0
    %3808 = vmatprep.subr.mxu0 0.0
    %3809 = vmatpush1.msra.mxu0 0.0
    %3810 = vmatprep.subr.mxu0 0.0
    %3811 = vmatpush1.msra.mxu0 0.0
    %3812 = vmatprep.subr.mxu0 0.0
    %3813 = vmatpush1.msra.mxu0 0.0
    %3814 = vmatprep.subr.mxu0 0.0
    %3815 = vmatpush1.msra.mxu0 0.0
    %3816 = vmatprep.subr.mxu0 0.0
    %3817 = vmatpush1.msra.mxu0 0.0
    %3818 = vmatprep.subr.mxu0 0.0
    %3819 = vmatpush1.msra.mxu0 0.0
    %3820 = vmatprep.subr.mxu0 0.0
    %3821 = vmatpush1.msra.mxu0 0.0
    %3822 = vmatprep.subr.mxu0 0.0
    %3823 = vmatpush1.msra.mxu0 0.0
    %3824 = vmatprep.subr.mxu0 0.0
    %3825 = vmatpush1.msra.mxu0 0.0
    %3826 = vmatprep.subr.mxu0 0.0
    %3827 = vmatpush1.msra.mxu0 0.0
    %3828 = vmatprep.subr.mxu0 0.0
    %3829 = vmatpush1.msra.mxu0 0.0
    %3830 = vmatprep.subr.mxu0 0.0
    %3831 = vmatpush1.msra.mxu0 0.0
    %3832 = vmatprep.subr.mxu0 0.0
    %3833 = vmatpush1.msra.mxu0 0.0
    %3834 = vmatprep.subr.mxu0 0.0
    %3835 = vmatpush1.msra.mxu0 0.0
    %3836 = vmatprep.mubr.f32.mxu0 0.0
    %3837 = vmatmul.mubr.f32.gmra.mrb[0].mxu0 %v3770
    %v3838 = vpop.f32.mrb[0].mxu0
    %v3839 = vadd.f32 0.0, %v3838
    %v3840 = vpop.f32.mrb[0].mxu0
    %3841 = vdwg.mxu0
    %3842 = vst.msk [vmem:[#allocation5] sm:$0x3] %vm3741, %v3839
    // Predicated region
    $region42: #{encoder_text_clip_forward.1} parent=1 // pred_check
      _
    $region43: #{encoder_text_clip_forward.1} parent=1 // pred_check_branch
      %3844 = sbr.rel (0) target = $region45
    $region44: #{encoder_text_clip_forward.1} parent=1 // pred_region
      %s3846 = ssub.s32 32, 32
      %3847 = vsyncadd [#allocation3], %s3846
      %s3849 = sshll.u32 [#allocation5], 4
      %s3850 = int_to_ptr.vmem [resolvable:$true] %s3849
      %3852 = dma.vmem_to_hbm [thread:$0]  %s3850, 32, %s9, [#allocation3]
    $region45: #{encoder_text_clip_forward.1} parent=1 // pred_fallthru
      _
    // Predicated region
    $region46: #{encoder_text_clip_forward.1} parent=1 // pred_check
      _
    $region47: #{encoder_text_clip_forward.1} parent=1 // pred_check_branch
      %3854 = sbr.rel (0) target = $region49
    $region48: #{encoder_text_clip_forward.1} parent=1 // pred_region
      %3855 = dma.done [#allocation3], 32
    $region49: #{encoder_text_clip_forward.1} parent=1 // pred_fallthru
      _
    %3856 = vsyncpa [#allocation3], 1
    %3857 = vsyncpa [#allocation4], 1

</llo_original>
